<compile_context>
chip_gen: v7x
topology: tpu7x:2x2x1
jax: 0.10.0
libtpu: 0.0.40
codegen_flags: <defaults>
</compile_context>

<pallas_src>
import jax
import jax.numpy as jnp
from jax.experimental import pallas as pl
from jax.experimental.pallas import tpu as pltpu


def actor_kernel(x_ref, wih_ref, whh_ref, b_ref, w1_ref, b1_ref, w2_ref, b2_ref,
                 out_ref, xw_ref):
    """Refs (all VMEM, single grid point). Gate columns are pre-permuted to [i, f, o, g].

      x_ref   : (S*B, D)  bf16   time-major rows: row t*B + b is x[b, t, :]
      wih_ref : (D, 4H)   bf16   (PyTorch weight_ih_l0, transposed, gate-reordered)
      whh_ref : (H, 4H)   bf16   (PyTorch weight_hh_l0, transposed, gate-reordered)
      b_ref   : (1, 4H)   f32    (bias_ih_l0 + bias_hh_l0, gate-reordered)
      w1_ref  : (H, 128)  bf16 ; b1_ref : (1, 128) f32
      w2_ref  : (128, A)  f32  ; b2_ref : (1, A)   f32
      out_ref : (B, A)    f32
      xw_ref  : (S*B, 4H) f32    scratch: hoisted input projection
    """
    SB = x_ref.shape[0]
    B = out_ref.shape[0]
    S = SB // B
    H = whh_ref.shape[0]
    G3 = 3 * H  # width of the contiguous sigmoid slab [i, f, o]

    # Hoisted input projection: one big bf16 MXU matmul + bias into VMEM scratch,
    # so the serial recurrence never touches x or wih again.
    xw_ref[...] = (jnp.dot(x_ref[...], wih_ref[...],
                           preferred_element_type=jnp.float32)
                   + b_ref[...])

    h0 = jnp.zeros((B, H), jnp.float32)
    c0 = jnp.zeros((B, H), jnp.float32)

    # TODO(synk): the remaining per-step cost is re-streaming whh (~512 KB bf16) into
    # the MXU every step. Holding it stationary needs explicit MXU driving
    # (pltpu.matmul_push_rhs per gate slab before the loop + matmul_acc_lhs/matmul_pop
    # per step), which is chip-specific (staging capacity, 128^2 vs 256^2 MXU tiles,
    # MRF vs MRB); kept on jnp.dot so the kernel lowers cleanly on v5e/v6e/v7x.
    def step(t, carry):
        h, c = carry
        start = pl.multiple_of(t * B, 8)   # B is a multiple of 16 (wrapper-enforced)
        h_b = h.astype(jnp.bfloat16)
        xw = xw_ref[pl.ds(start, B), :]
        # Recurrent matmuls read whh per-slab from its VMEM ref inside the step
        # (no whole 4H-wide weight value kept live across the unrolled loop).
        sig_pre = xw[:, :G3] + jnp.dot(h_b, whh_ref[:, :G3],
                                       preferred_element_type=jnp.float32)
        g_pre = xw[:, G3:] + jnp.dot(h_b, whh_ref[:, G3:],
                                     preferred_element_type=jnp.float32)
        # Gate math stays f32: v5e VPU/EUP have no bf16 path (bf16 transcendentals
        # would only help on v6e/v7x and may not lower on v5e).
        gate = jax.nn.sigmoid(sig_pre)     # one EUP pass over (B, 3H): [i | f | o]
        g_g = jnp.tanh(g_pre)
        i_g = gate[:, :H]
        f_g = gate[:, H:2 * H]
        o_g = gate[:, 2 * H:]
        c_new = f_g * c + i_g * g_g
        h_new = o_g * jnp.tanh(c_new)
        return (h_new, c_new)

    # S is small and static -> fully unroll the serial recurrence so the scheduler can
    # overlap step t's EUP/VPU gate math with step t+1's MXU pushes.
    h_last, _ = jax.lax.fori_loop(0, S, step, (h0, c0), unroll=True)

    # fc1 + ReLU (bf16 matmul, f32 accumulate / activation).
    hid = jnp.dot(h_last.astype(jnp.bfloat16), w1_ref[...],
                  preferred_element_type=jnp.float32) + b1_ref[...]
    hid = jnp.maximum(hid, 0.0)
    # TODO(synk): nn.Dropout(0.3) is identity in eval mode; training-mode dropout
    # (pltpu.prng_seed + pltpu.stateful_bernoulli mask) not implemented.

    # fc2 (tiny, stays f32).
    out = jnp.dot(hid, w2_ref[...], preferred_element_type=jnp.float32) + b2_ref[...]
    out_ref[...] = out.astype(out_ref.dtype)


def _reorder_gates(w):
    """Permute the trailing 4H gate axis from PyTorch order [i, f, g, o] -> [i, f, o, g]."""
    H = w.shape[1] // 4
    return jnp.concatenate([w[:, :2 * H], w[:, 3 * H:], w[:, 2 * H:3 * H]], axis=1)


def custom_actor_forward(x, params):
    """x: (batch, seq, features_dim) float32 — same convention as the torch module."""
    B, S, D = x.shape
    H = params["whh"].shape[0]
    A = params["w2"].shape[1]

    # Pad batch to a multiple of 16: bf16 vregs pack (16,128), so the bf16 h operand
    # and x rows are cleanly sublane-packed and all recurrent tiles are unmasked.
    B_pad = max(16, ((B + 15) // 16) * 16)
    if B_pad != B:
        x = jnp.concatenate([x, jnp.zeros((B_pad - B, S, D), x.dtype)], axis=0)

    # Time-major 2-D bf16 input: one clean (S*B_pad, D) @ (D, 4H) input projection.
    # (Wrapper-side transpose/reshape is layout plumbing; trivial at these sizes.)
    x2d = jnp.transpose(x, (1, 0, 2)).reshape(S * B_pad, D).astype(jnp.bfloat16)

    # Reorder gate columns [i, f, g, o] -> [i, f, o, g] consistently for wih, whh, b
    # so the kernel runs one sigmoid over a contiguous 3H slab and one tanh over H.
    wih = _reorder_gates(params["wih"])
    whh = _reorder_gates(params["whh"])
    b = _reorder_gates(params["b"])

    vmem = pl.BlockSpec(memory_space=pltpu.MemorySpace.VMEM)
    fn = pl.pallas_call(
        actor_kernel,
        out_shape=jax.ShapeDtypeStruct((B_pad, A), jnp.float32),
        in_specs=[vmem] * 8,
        out_specs=vmem,
        scratch_shapes=[pltpu.VMEM((S * B_pad, 4 * H), jnp.float32)],
        # Total VMEM footprint ~1.2 MB (whh 512 KB + xw scratch 512 KB + rest): far
        # under every generation's limit (incl. v7x's 64 MiB), so no grid/tiling or
        # vmem_limit_bytes needed. If the deployment batch grows, add a batch-tile
        # grid with dimension_semantics=("parallel",) to engage both v7x TCs.
    )
    out = fn(x2d, wih, whh, b,
             params["w1"], params["b1"],
             params["w2"], params["b2"])
    return out[:B]


def init_params(key, features_dim, hidden_dim, action_dim):
    """Deterministic synthetic parameters matching the PyTorch module's shapes.

    Weights are kept in PyTorch gate order [i, f, g, o]; the wrapper applies the
    kernel-facing gate permutation. Matmul weights (wih, whh, w1) are bf16 for the
    MXU; biases and the tiny fc2 stay f32.
    """
    ks = jax.random.split(key, 8)
    s_lstm = 1.0 / jnp.sqrt(hidden_dim)
    s_fc1 = 1.0 / jnp.sqrt(hidden_dim)
    s_fc2 = 1.0 / jnp.sqrt(128.0)

    # PyTorch LSTM weights: weight_ih (4H, D), weight_hh (4H, H); stored transposed.
    wih = jax.random.uniform(ks[0], (features_dim, 4 * hidden_dim), jnp.float32,
                             -s_lstm, s_lstm).astype(jnp.bfloat16)
    whh = jax.random.uniform(ks[1], (hidden_dim, 4 * hidden_dim), jnp.float32,
                             -s_lstm, s_lstm).astype(jnp.bfloat16)
    b_ih = jax.random.uniform(ks[2], (1, 4 * hidden_dim), jnp.float32, -s_lstm, s_lstm)
    b_hh = jax.random.uniform(ks[3], (1, 4 * hidden_dim), jnp.float32, -s_lstm, s_lstm)

    w1 = jax.random.uniform(ks[4], (hidden_dim, 128), jnp.float32,
                            -s_fc1, s_fc1).astype(jnp.bfloat16)
    b1 = jax.random.uniform(ks[5], (1, 128), jnp.float32, -s_fc1, s_fc1)
    w2 = jax.random.uniform(ks[6], (128, action_dim), jnp.float32, -s_fc2, s_fc2)
    b2 = jax.random.uniform(ks[7], (1, action_dim), jnp.float32, -s_fc2, s_fc2)

    return {"wih": wih, "whh": whh, "b": b_ih + b_hh,
            "w1": w1, "b1": b1, "w2": w2, "b2": b2}


def reference_forward(x, params):
    """Pure-JAX reference in the ORIGINAL PyTorch gate order (i, f, g, o), mirroring
    the kernel's mixed precision (bf16 matmuls, f32 accumulation and gate math).
    Also validates the wrapper's gate-column permutation."""
    B, S, D = x.shape
    H = params["whh"].shape[0]
    xb = x.astype(jnp.bfloat16)
    h = jnp.zeros((B, H), jnp.float32)
    c = jnp.zeros((B, H), jnp.float32)
    for t in range(S):
        gates = (jnp.dot(xb[:, t, :], params["wih"],
                         preferred_element_type=jnp.float32)
                 + jnp.dot(h.astype(jnp.bfloat16), params["whh"],
                           preferred_element_type=jnp.float32)
                 + params["b"])
        i_g = jax.nn.sigmoid(gates[:, 0 * H:1 * H])
        f_g = jax.nn.sigmoid(gates[:, 1 * H:2 * H])
        g_g = jnp.tanh(gates[:, 2 * H:3 * H])
        o_g = jax.nn.sigmoid(gates[:, 3 * H:4 * H])
        c = f_g * c + i_g * g_g
        h = o_g * jnp.tanh(c)
    hid = jnp.maximum(jnp.dot(h.astype(jnp.bfloat16), params["w1"],
                              preferred_element_type=jnp.float32) + params["b1"], 0.0)
    return jnp.dot(hid, params["w2"], preferred_element_type=jnp.float32) + params["b2"]


if __name__ == "__main__":
    # Small shapes consistent with the module: batch=2, seq=8, features_dim=32,
    # hidden=256 (TemporalModule default), action_dim=4.
    # NOTE: at these sizes wall time is launch-overhead dominated; in deployment,
    # batch many actor/env invocations into a single call to this wrapper.
    B, S, D, H, A = 2, 8, 32, 256, 4

    key = jax.random.PRNGKey(0)
    k_x, k_p = jax.random.split(key)
    x = jax.random.normal(k_x, (B, S, D), jnp.float32)
    params = init_params(k_p, D, H, A)

    out = jax.block_until_ready(custom_actor_forward(x, params))

    ref = reference_forward(x, params)
    assert out.shape == (B, A)
    assert jnp.allclose(out, ref, atol=1e-2, rtol=1e-2)

    print("KERNEL_OK")
</pallas_src>

<mosaic_0001>
module attributes {stable_mosaic.version = 11 : i64} {
  func.func @actor_kernel(%arg0: memref<128x32xbf16, #tpu.memory_space<vmem>>, %arg1: memref<32x1024xbf16, #tpu.memory_space<vmem>>, %arg2: memref<256x1024xbf16, #tpu.memory_space<vmem>>, %arg3: memref<1x1024xf32, #tpu.memory_space<vmem>>, %arg4: memref<256x128xbf16, #tpu.memory_space<vmem>>, %arg5: memref<1x128xf32, #tpu.memory_space<vmem>>, %arg6: memref<128x4xf32, #tpu.memory_space<vmem>>, %arg7: memref<1x4xf32, #tpu.memory_space<vmem>>, %arg8: memref<16x4xf32, #tpu.memory_space<vmem>>, %arg9: memref<128x1024xf32, #tpu.memory_space<vmem>>) attributes {dimension_semantics = [], scalar_prefetch = 0 : i64, scratch_operands = 1 : i64, tpu.core_type = #tpu.core_type<tc>} {
    %c0 = arith.constant 0 : index
    %c0_0 = arith.constant 0 : index
    %0 = vector.load %arg0[%c0, %c0_0] : memref<128x32xbf16, #tpu.memory_space<vmem>>, vector<128x32xbf16>
    %c0_1 = arith.constant 0 : index
    %c0_2 = arith.constant 0 : index
    %1 = vector.load %arg1[%c0_1, %c0_2] : memref<32x1024xbf16, #tpu.memory_space<vmem>>, vector<32x1024xbf16>
    %cst = arith.constant dense<0.000000e+00> : vector<128x1024xf32>
    %2 = tpu.matmul %0, %1, %cst {dimension_numbers = #tpu.dot_dimension_numbers<[1], [0], [0], [1], [0, 0, 1, 1], [], []>} : vector<128x32xbf16>, vector<32x1024xbf16>, vector<128x1024xf32> -> vector<128x1024xf32>
    %c0_3 = arith.constant 0 : index
    %c0_4 = arith.constant 0 : index
    %3 = vector.load %arg3[%c0_3, %c0_4] : memref<1x1024xf32, #tpu.memory_space<vmem>>, vector<1x1024xf32>
    %4 = vector.broadcast %3 : vector<1x1024xf32> to vector<128x1024xf32>
    %5 = arith.addf %2, %4 : vector<128x1024xf32>
    %c0_5 = arith.constant 0 : index
    %c0_6 = arith.constant 0 : index
    %6 = vector.load %arg9[%c0_5, %c0_6] : memref<128x1024xf32, #tpu.memory_space<vmem>>, vector<128x1024xf32>
    tpu.vector_store %arg9[%c0_5, %c0_6], %5 {strides = array<i32>} : memref<128x1024xf32, #tpu.memory_space<vmem>>, vector<128x1024xf32>,
    %cst_7 = arith.constant 0.000000e+00 : f32
    %7 = vector.broadcast %cst_7 : f32 to vector<16x256xf32>
    %cst_8 = arith.constant 0.000000e+00 : f32
    %8 = vector.broadcast %cst_8 : f32 to vector<16x256xf32>
    %c0_i32 = arith.constant 0 : i32
    %c16_i32 = arith.constant 16 : i32
    %9 = arith.muli %c0_i32, %c16_i32 : i32
    %10 = tpu.assume_multiple %9, 8 : i32
    %11 = arith.truncf %7 : vector<16x256xf32> to vector<16x256xbf16>
    %12 = arith.index_cast %10 : i32 to index
    %c0_9 = arith.constant 0 : index
    %13 = vector.load %arg9[%12, %c0_9] : memref<128x1024xf32, #tpu.memory_space<vmem>>, vector<16x1024xf32>
    %14 = vector.extract_strided_slice %13 {offsets = [0, 0], sizes = [16, 768], strides = [1, 1]} : vector<16x1024xf32> to vector<16x768xf32>
    %c0_10 = arith.constant 0 : index
    %c0_11 = arith.constant 0 : index
    %15 = vector.load %arg2[%c0_10, %c0_11] : memref<256x1024xbf16, #tpu.memory_space<vmem>>, vector<256x768xbf16>
    %cst_12 = arith.constant dense<0.000000e+00> : vector<16x768xf32>
    %16 = tpu.matmul %11, %15, %cst_12 {dimension_numbers = #tpu.dot_dimension_numbers<[1], [0], [0], [1], [0, 0, 1, 1], [], []>} : vector<16x256xbf16>, vector<256x768xbf16>, vector<16x768xf32> -> vector<16x768xf32>
    %17 = arith.addf %14, %16 : vector<16x768xf32>
    %18 = vector.extract_strided_slice %13 {offsets = [0, 768], sizes = [16, 256], strides = [1, 1]} : vector<16x1024xf32> to vector<16x256xf32>
    %c0_13 = arith.constant 0 : index
    %c768 = arith.constant 768 : index
    %19 = vector.load %arg2[%c0_13, %c768] : memref<256x1024xbf16, #tpu.memory_space<vmem>>, vector<256x256xbf16>
    %cst_14 = arith.constant dense<0.000000e+00> : vector<16x256xf32>
    %20 = tpu.matmul %11, %19, %cst_14 {dimension_numbers = #tpu.dot_dimension_numbers<[1], [0], [0], [1], [0, 0, 1, 1], [], []>} : vector<16x256xbf16>, vector<256x256xbf16>, vector<16x256xf32> -> vector<16x256xf32>
    %21 = arith.addf %18, %20 : vector<16x256xf32>
    %22 = arith.negf %17 : vector<16x768xf32>
    %23 = math.exp %22 : vector<16x768xf32>
    %cst_15 = arith.constant 1.000000e+00 : f32
    %24 = vector.broadcast %cst_15 : f32 to vector<16x768xf32>
    %25 = arith.addf %24, %23 : vector<16x768xf32>
    %26 = arith.divf %24, %25 : vector<16x768xf32>
    %27 = math.tanh %21 : vector<16x256xf32>
    %28 = vector.extract_strided_slice %26 {offsets = [0, 0], sizes = [16, 256], strides = [1, 1]} : vector<16x768xf32> to vector<16x256xf32>
    %29 = vector.extract_strided_slice %26 {offsets = [0, 256], sizes = [16, 256], strides = [1, 1]} : vector<16x768xf32> to vector<16x256xf32>
    %30 = vector.extract_strided_slice %26 {offsets = [0, 512], sizes = [16, 256], strides = [1, 1]} : vector<16x768xf32> to vector<16x256xf32>
    %31 = arith.mulf %29, %8 : vector<16x256xf32>
    %32 = arith.mulf %28, %27 : vector<16x256xf32>
    %33 = arith.addf %31, %32 : vector<16x256xf32>
    %34 = math.tanh %33 : vector<16x256xf32>
    %35 = arith.mulf %30, %34 : vector<16x256xf32>
    %c1_i32 = arith.constant 1 : i32
    %c16_i32_16 = arith.constant 16 : i32
    %36 = arith.muli %c1_i32, %c16_i32_16 : i32
    %37 = tpu.assume_multiple %36, 8 : i32
    %38 = arith.truncf %35 : vector<16x256xf32> to vector<16x256xbf16>
    %39 = arith.index_cast %37 : i32 to index
    %c0_17 = arith.constant 0 : index
    %40 = vector.load %arg9[%39, %c0_17] : memref<128x1024xf32, #tpu.memory_space<vmem>>, vector<16x1024xf32>
    %41 = vector.extract_strided_slice %40 {offsets = [0, 0], sizes = [16, 768], strides = [1, 1]} : vector<16x1024xf32> to vector<16x768xf32>
    %c0_18 = arith.constant 0 : index
    %c0_19 = arith.constant 0 : index
    %42 = vector.load %arg2[%c0_18, %c0_19] : memref<256x1024xbf16, #tpu.memory_space<vmem>>, vector<256x768xbf16>
    %cst_20 = arith.constant dense<0.000000e+00> : vector<16x768xf32>
    %43 = tpu.matmul %38, %42, %cst_20 {dimension_numbers = #tpu.dot_dimension_numbers<[1], [0], [0], [1], [0, 0, 1, 1], [], []>} : vector<16x256xbf16>, vector<256x768xbf16>, vector<16x768xf32> -> vector<16x768xf32>
    %44 = arith.addf %41, %43 : vector<16x768xf32>
    %45 = vector.extract_strided_slice %40 {offsets = [0, 768], sizes = [16, 256], strides = [1, 1]} : vector<16x1024xf32> to vector<16x256xf32>
    %c0_21 = arith.constant 0 : index
    %c768_22 = arith.constant 768 : index
    %46 = vector.load %arg2[%c0_21, %c768_22] : memref<256x1024xbf16, #tpu.memory_space<vmem>>, vector<256x256xbf16>
    %cst_23 = arith.constant dense<0.000000e+00> : vector<16x256xf32>
    %47 = tpu.matmul %38, %46, %cst_23 {dimension_numbers = #tpu.dot_dimension_numbers<[1], [0], [0], [1], [0, 0, 1, 1], [], []>} : vector<16x256xbf16>, vector<256x256xbf16>, vector<16x256xf32> -> vector<16x256xf32>
    %48 = arith.addf %45, %47 : vector<16x256xf32>
    %49 = arith.negf %44 : vector<16x768xf32>
    %50 = math.exp %49 : vector<16x768xf32>
    %cst_24 = arith.constant 1.000000e+00 : f32
    %51 = vector.broadcast %cst_24 : f32 to vector<16x768xf32>
    %52 = arith.addf %51, %50 : vector<16x768xf32>
    %53 = arith.divf %51, %52 : vector<16x768xf32>
    %54 = math.tanh %48 : vector<16x256xf32>
    %55 = vector.extract_strided_slice %53 {offsets = [0, 0], sizes = [16, 256], strides = [1, 1]} : vector<16x768xf32> to vector<16x256xf32>
    %56 = vector.extract_strided_slice %53 {offsets = [0, 256], sizes = [16, 256], strides = [1, 1]} : vector<16x768xf32> to vector<16x256xf32>
    %57 = vector.extract_strided_slice %53 {offsets = [0, 512], sizes = [16, 256], strides = [1, 1]} : vector<16x768xf32> to vector<16x256xf32>
    %58 = arith.mulf %56, %33 : vector<16x256xf32>
    %59 = arith.mulf %55, %54 : vector<16x256xf32>
    %60 = arith.addf %58, %59 : vector<16x256xf32>
    %61 = math.tanh %60 : vector<16x256xf32>
    %62 = arith.mulf %57, %61 : vector<16x256xf32>
    %c2_i32 = arith.constant 2 : i32
    %c16_i32_25 = arith.constant 16 : i32
    %63 = arith.muli %c2_i32, %c16_i32_25 : i32
    %64 = tpu.assume_multiple %63, 8 : i32
    %65 = arith.truncf %62 : vector<16x256xf32> to vector<16x256xbf16>
    %66 = arith.index_cast %64 : i32 to index
    %c0_26 = arith.constant 0 : index
    %67 = vector.load %arg9[%66, %c0_26] : memref<128x1024xf32, #tpu.memory_space<vmem>>, vector<16x1024xf32>
    %68 = vector.extract_strided_slice %67 {offsets = [0, 0], sizes = [16, 768], strides = [1, 1]} : vector<16x1024xf32> to vector<16x768xf32>
    %c0_27 = arith.constant 0 : index
    %c0_28 = arith.constant 0 : index
    %69 = vector.load %arg2[%c0_27, %c0_28] : memref<256x1024xbf16, #tpu.memory_space<vmem>>, vector<256x768xbf16>
    %cst_29 = arith.constant dense<0.000000e+00> : vector<16x768xf32>
    %70 = tpu.matmul %65, %69, %cst_29 {dimension_numbers = #tpu.dot_dimension_numbers<[1], [0], [0], [1], [0, 0, 1, 1], [], []>} : vector<16x256xbf16>, vector<256x768xbf16>, vector<16x768xf32> -> vector<16x768xf32>
    %71 = arith.addf %68, %70 : vector<16x768xf32>
    %72 = vector.extract_strided_slice %67 {offsets = [0, 768], sizes = [16, 256], strides = [1, 1]} : vector<16x1024xf32> to vector<16x256xf32>
    %c0_30 = arith.constant 0 : index
    %c768_31 = arith.constant 768 : index
    %73 = vector.load %arg2[%c0_30, %c768_31] : memref<256x1024xbf16, #tpu.memory_space<vmem>>, vector<256x256xbf16>
    %cst_32 = arith.constant dense<0.000000e+00> : vector<16x256xf32>
    %74 = tpu.matmul %65, %73, %cst_32 {dimension_numbers = #tpu.dot_dimension_numbers<[1], [0], [0], [1], [0, 0, 1, 1], [], []>} : vector<16x256xbf16>, vector<256x256xbf16>, vector<16x256xf32> -> vector<16x256xf32>
    %75 = arith.addf %72, %74 : vector<16x256xf32>
    %76 = arith.negf %71 : vector<16x768xf32>
    %77 = math.exp %76 : vector<16x768xf32>
    %cst_33 = arith.constant 1.000000e+00 : f32
    %78 = vector.broadcast %cst_33 : f32 to vector<16x768xf32>
    %79 = arith.addf %78, %77 : vector<16x768xf32>
    %80 = arith.divf %78, %79 : vector<16x768xf32>
    %81 = math.tanh %75 : vector<16x256xf32>
    %82 = vector.extract_strided_slice %80 {offsets = [0, 0], sizes = [16, 256], strides = [1, 1]} : vector<16x768xf32> to vector<16x256xf32>
    %83 = vector.extract_strided_slice %80 {offsets = [0, 256], sizes = [16, 256], strides = [1, 1]} : vector<16x768xf32> to vector<16x256xf32>
    %84 = vector.extract_strided_slice %80 {offsets = [0, 512], sizes = [16, 256], strides = [1, 1]} : vector<16x768xf32> to vector<16x256xf32>
    %85 = arith.mulf %83, %60 : vector<16x256xf32>
    %86 = arith.mulf %82, %81 : vector<16x256xf32>
    %87 = arith.addf %85, %86 : vector<16x256xf32>
    %88 = math.tanh %87 : vector<16x256xf32>
    %89 = arith.mulf %84, %88 : vector<16x256xf32>
    %c3_i32 = arith.constant 3 : i32
    %c16_i32_34 = arith.constant 16 : i32
    %90 = arith.muli %c3_i32, %c16_i32_34 : i32
    %91 = tpu.assume_multiple %90, 8 : i32
    %92 = arith.truncf %89 : vector<16x256xf32> to vector<16x256xbf16>
    %93 = arith.index_cast %91 : i32 to index
    %c0_35 = arith.constant 0 : index
    %94 = vector.load %arg9[%93, %c0_35] : memref<128x1024xf32, #tpu.memory_space<vmem>>, vector<16x1024xf32>
    %95 = vector.extract_strided_slice %94 {offsets = [0, 0], sizes = [16, 768], strides = [1, 1]} : vector<16x1024xf32> to vector<16x768xf32>
    %c0_36 = arith.constant 0 : index
    %c0_37 = arith.constant 0 : index
    %96 = vector.load %arg2[%c0_36, %c0_37] : memref<256x1024xbf16, #tpu.memory_space<vmem>>, vector<256x768xbf16>
    %cst_38 = arith.constant dense<0.000000e+00> : vector<16x768xf32>
    %97 = tpu.matmul %92, %96, %cst_38 {dimension_numbers = #tpu.dot_dimension_numbers<[1], [0], [0], [1], [0, 0, 1, 1], [], []>} : vector<16x256xbf16>, vector<256x768xbf16>, vector<16x768xf32> -> vector<16x768xf32>
    %98 = arith.addf %95, %97 : vector<16x768xf32>
    %99 = vector.extract_strided_slice %94 {offsets = [0, 768], sizes = [16, 256], strides = [1, 1]} : vector<16x1024xf32> to vector<16x256xf32>
    %c0_39 = arith.constant 0 : index
    %c768_40 = arith.constant 768 : index
    %100 = vector.load %arg2[%c0_39, %c768_40] : memref<256x1024xbf16, #tpu.memory_space<vmem>>, vector<256x256xbf16>
    %cst_41 = arith.constant dense<0.000000e+00> : vector<16x256xf32>
    %101 = tpu.matmul %92, %100, %cst_41 {dimension_numbers = #tpu.dot_dimension_numbers<[1], [0], [0], [1], [0, 0, 1, 1], [], []>} : vector<16x256xbf16>, vector<256x256xbf16>, vector<16x256xf32> -> vector<16x256xf32>
    %102 = arith.addf %99, %101 : vector<16x256xf32>
    %103 = arith.negf %98 : vector<16x768xf32>
    %104 = math.exp %103 : vector<16x768xf32>
    %cst_42 = arith.constant 1.000000e+00 : f32
    %105 = vector.broadcast %cst_42 : f32 to vector<16x768xf32>
    %106 = arith.addf %105, %104 : vector<16x768xf32>
    %107 = arith.divf %105, %106 : vector<16x768xf32>
    %108 = math.tanh %102 : vector<16x256xf32>
    %109 = vector.extract_strided_slice %107 {offsets = [0, 0], sizes = [16, 256], strides = [1, 1]} : vector<16x768xf32> to vector<16x256xf32>
    %110 = vector.extract_strided_slice %107 {offsets = [0, 256], sizes = [16, 256], strides = [1, 1]} : vector<16x768xf32> to vector<16x256xf32>
    %111 = vector.extract_strided_slice %107 {offsets = [0, 512], sizes = [16, 256], strides = [1, 1]} : vector<16x768xf32> to vector<16x256xf32>
    %112 = arith.mulf %110, %87 : vector<16x256xf32>
    %113 = arith.mulf %109, %108 : vector<16x256xf32>
    %114 = arith.addf %112, %113 : vector<16x256xf32>
    %115 = math.tanh %114 : vector<16x256xf32>
    %116 = arith.mulf %111, %115 : vector<16x256xf32>
    %c4_i32 = arith.constant 4 : i32
    %c16_i32_43 = arith.constant 16 : i32
    %117 = arith.muli %c4_i32, %c16_i32_43 : i32
    %118 = tpu.assume_multiple %117, 8 : i32
    %119 = arith.truncf %116 : vector<16x256xf32> to vector<16x256xbf16>
    %120 = arith.index_cast %118 : i32 to index
    %c0_44 = arith.constant 0 : index
    %121 = vector.load %arg9[%120, %c0_44] : memref<128x1024xf32, #tpu.memory_space<vmem>>, vector<16x1024xf32>
    %122 = vector.extract_strided_slice %121 {offsets = [0, 0], sizes = [16, 768], strides = [1, 1]} : vector<16x1024xf32> to vector<16x768xf32>
    %c0_45 = arith.constant 0 : index
    %c0_46 = arith.constant 0 : index
    %123 = vector.load %arg2[%c0_45, %c0_46] : memref<256x1024xbf16, #tpu.memory_space<vmem>>, vector<256x768xbf16>
    %cst_47 = arith.constant dense<0.000000e+00> : vector<16x768xf32>
    %124 = tpu.matmul %119, %123, %cst_47 {dimension_numbers = #tpu.dot_dimension_numbers<[1], [0], [0], [1], [0, 0, 1, 1], [], []>} : vector<16x256xbf16>, vector<256x768xbf16>, vector<16x768xf32> -> vector<16x768xf32>
    %125 = arith.addf %122, %124 : vector<16x768xf32>
    %126 = vector.extract_strided_slice %121 {offsets = [0, 768], sizes = [16, 256], strides = [1, 1]} : vector<16x1024xf32> to vector<16x256xf32>
    %c0_48 = arith.constant 0 : index
    %c768_49 = arith.constant 768 : index
    %127 = vector.load %arg2[%c0_48, %c768_49] : memref<256x1024xbf16, #tpu.memory_space<vmem>>, vector<256x256xbf16>
    %cst_50 = arith.constant dense<0.000000e+00> : vector<16x256xf32>
    %128 = tpu.matmul %119, %127, %cst_50 {dimension_numbers = #tpu.dot_dimension_numbers<[1], [0], [0], [1], [0, 0, 1, 1], [], []>} : vector<16x256xbf16>, vector<256x256xbf16>, vector<16x256xf32> -> vector<16x256xf32>
    %129 = arith.addf %126, %128 : vector<16x256xf32>
    %130 = arith.negf %125 : vector<16x768xf32>
    %131 = math.exp %130 : vector<16x768xf32>
    %cst_51 = arith.constant 1.000000e+00 : f32
    %132 = vector.broadcast %cst_51 : f32 to vector<16x768xf32>
    %133 = arith.addf %132, %131 : vector<16x768xf32>
    %134 = arith.divf %132, %133 : vector<16x768xf32>
    %135 = math.tanh %129 : vector<16x256xf32>
    %136 = vector.extract_strided_slice %134 {offsets = [0, 0], sizes = [16, 256], strides = [1, 1]} : vector<16x768xf32> to vector<16x256xf32>
    %137 = vector.extract_strided_slice %134 {offsets = [0, 256], sizes = [16, 256], strides = [1, 1]} : vector<16x768xf32> to vector<16x256xf32>
    %138 = vector.extract_strided_slice %134 {offsets = [0, 512], sizes = [16, 256], strides = [1, 1]} : vector<16x768xf32> to vector<16x256xf32>
    %139 = arith.mulf %137, %114 : vector<16x256xf32>
    %140 = arith.mulf %136, %135 : vector<16x256xf32>
    %141 = arith.addf %139, %140 : vector<16x256xf32>
    %142 = math.tanh %141 : vector<16x256xf32>
    %143 = arith.mulf %138, %142 : vector<16x256xf32>
    %c5_i32 = arith.constant 5 : i32
    %c16_i32_52 = arith.constant 16 : i32
    %144 = arith.muli %c5_i32, %c16_i32_52 : i32
    %145 = tpu.assume_multiple %144, 8 : i32
    %146 = arith.truncf %143 : vector<16x256xf32> to vector<16x256xbf16>
    %147 = arith.index_cast %145 : i32 to index
    %c0_53 = arith.constant 0 : index
    %148 = vector.load %arg9[%147, %c0_53] : memref<128x1024xf32, #tpu.memory_space<vmem>>, vector<16x1024xf32>
    %149 = vector.extract_strided_slice %148 {offsets = [0, 0], sizes = [16, 768], strides = [1, 1]} : vector<16x1024xf32> to vector<16x768xf32>
    %c0_54 = arith.constant 0 : index
    %c0_55 = arith.constant 0 : index
    %150 = vector.load %arg2[%c0_54, %c0_55] : memref<256x1024xbf16, #tpu.memory_space<vmem>>, vector<256x768xbf16>
    %cst_56 = arith.constant dense<0.000000e+00> : vector<16x768xf32>
    %151 = tpu.matmul %146, %150, %cst_56 {dimension_numbers = #tpu.dot_dimension_numbers<[1], [0], [0], [1], [0, 0, 1, 1], [], []>} : vector<16x256xbf16>, vector<256x768xbf16>, vector<16x768xf32> -> vector<16x768xf32>
    %152 = arith.addf %149, %151 : vector<16x768xf32>
    %153 = vector.extract_strided_slice %148 {offsets = [0, 768], sizes = [16, 256], strides = [1, 1]} : vector<16x1024xf32> to vector<16x256xf32>
    %c0_57 = arith.constant 0 : index
    %c768_58 = arith.constant 768 : index
    %154 = vector.load %arg2[%c0_57, %c768_58] : memref<256x1024xbf16, #tpu.memory_space<vmem>>, vector<256x256xbf16>
    %cst_59 = arith.constant dense<0.000000e+00> : vector<16x256xf32>
    %155 = tpu.matmul %146, %154, %cst_59 {dimension_numbers = #tpu.dot_dimension_numbers<[1], [0], [0], [1], [0, 0, 1, 1], [], []>} : vector<16x256xbf16>, vector<256x256xbf16>, vector<16x256xf32> -> vector<16x256xf32>
    %156 = arith.addf %153, %155 : vector<16x256xf32>
    %157 = arith.negf %152 : vector<16x768xf32>
    %158 = math.exp %157 : vector<16x768xf32>
    %cst_60 = arith.constant 1.000000e+00 : f32
    %159 = vector.broadcast %cst_60 : f32 to vector<16x768xf32>
    %160 = arith.addf %159, %158 : vector<16x768xf32>
    %161 = arith.divf %159, %160 : vector<16x768xf32>
    %162 = math.tanh %156 : vector<16x256xf32>
    %163 = vector.extract_strided_slice %161 {offsets = [0, 0], sizes = [16, 256], strides = [1, 1]} : vector<16x768xf32> to vector<16x256xf32>
    %164 = vector.extract_strided_slice %161 {offsets = [0, 256], sizes = [16, 256], strides = [1, 1]} : vector<16x768xf32> to vector<16x256xf32>
    %165 = vector.extract_strided_slice %161 {offsets = [0, 512], sizes = [16, 256], strides = [1, 1]} : vector<16x768xf32> to vector<16x256xf32>
    %166 = arith.mulf %164, %141 : vector<16x256xf32>
    %167 = arith.mulf %163, %162 : vector<16x256xf32>
    %168 = arith.addf %166, %167 : vector<16x256xf32>
    %169 = math.tanh %168 : vector<16x256xf32>
    %170 = arith.mulf %165, %169 : vector<16x256xf32>
    %c6_i32 = arith.constant 6 : i32
    %c16_i32_61 = arith.constant 16 : i32
    %171 = arith.muli %c6_i32, %c16_i32_61 : i32
    %172 = tpu.assume_multiple %171, 8 : i32
    %173 = arith.truncf %170 : vector<16x256xf32> to vector<16x256xbf16>
    %174 = arith.index_cast %172 : i32 to index
    %c0_62 = arith.constant 0 : index
    %175 = vector.load %arg9[%174, %c0_62] : memref<128x1024xf32, #tpu.memory_space<vmem>>, vector<16x1024xf32>
    %176 = vector.extract_strided_slice %175 {offsets = [0, 0], sizes = [16, 768], strides = [1, 1]} : vector<16x1024xf32> to vector<16x768xf32>
    %c0_63 = arith.constant 0 : index
    %c0_64 = arith.constant 0 : index
    %177 = vector.load %arg2[%c0_63, %c0_64] : memref<256x1024xbf16, #tpu.memory_space<vmem>>, vector<256x768xbf16>
    %cst_65 = arith.constant dense<0.000000e+00> : vector<16x768xf32>
    %178 = tpu.matmul %173, %177, %cst_65 {dimension_numbers = #tpu.dot_dimension_numbers<[1], [0], [0], [1], [0, 0, 1, 1], [], []>} : vector<16x256xbf16>, vector<256x768xbf16>, vector<16x768xf32> -> vector<16x768xf32>
    %179 = arith.addf %176, %178 : vector<16x768xf32>
    %180 = vector.extract_strided_slice %175 {offsets = [0, 768], sizes = [16, 256], strides = [1, 1]} : vector<16x1024xf32> to vector<16x256xf32>
    %c0_66 = arith.constant 0 : index
    %c768_67 = arith.constant 768 : index
    %181 = vector.load %arg2[%c0_66, %c768_67] : memref<256x1024xbf16, #tpu.memory_space<vmem>>, vector<256x256xbf16>
    %cst_68 = arith.constant dense<0.000000e+00> : vector<16x256xf32>
    %182 = tpu.matmul %173, %181, %cst_68 {dimension_numbers = #tpu.dot_dimension_numbers<[1], [0], [0], [1], [0, 0, 1, 1], [], []>} : vector<16x256xbf16>, vector<256x256xbf16>, vector<16x256xf32> -> vector<16x256xf32>
    %183 = arith.addf %180, %182 : vector<16x256xf32>
    %184 = arith.negf %179 : vector<16x768xf32>
    %185 = math.exp %184 : vector<16x768xf32>
    %cst_69 = arith.constant 1.000000e+00 : f32
    %186 = vector.broadcast %cst_69 : f32 to vector<16x768xf32>
    %187 = arith.addf %186, %185 : vector<16x768xf32>
    %188 = arith.divf %186, %187 : vector<16x768xf32>
    %189 = math.tanh %183 : vector<16x256xf32>
    %190 = vector.extract_strided_slice %188 {offsets = [0, 0], sizes = [16, 256], strides = [1, 1]} : vector<16x768xf32> to vector<16x256xf32>
    %191 = vector.extract_strided_slice %188 {offsets = [0, 256], sizes = [16, 256], strides = [1, 1]} : vector<16x768xf32> to vector<16x256xf32>
    %192 = vector.extract_strided_slice %188 {offsets = [0, 512], sizes = [16, 256], strides = [1, 1]} : vector<16x768xf32> to vector<16x256xf32>
    %193 = arith.mulf %191, %168 : vector<16x256xf32>
    %194 = arith.mulf %190, %189 : vector<16x256xf32>
    %195 = arith.addf %193, %194 : vector<16x256xf32>
    %196 = math.tanh %195 : vector<16x256xf32>
    %197 = arith.mulf %192, %196 : vector<16x256xf32>
    %c7_i32 = arith.constant 7 : i32
    %c16_i32_70 = arith.constant 16 : i32
    %198 = arith.muli %c7_i32, %c16_i32_70 : i32
    %199 = tpu.assume_multiple %198, 8 : i32
    %200 = arith.truncf %197 : vector<16x256xf32> to vector<16x256xbf16>
    %201 = arith.index_cast %199 : i32 to index
    %c0_71 = arith.constant 0 : index
    %202 = vector.load %arg9[%201, %c0_71] : memref<128x1024xf32, #tpu.memory_space<vmem>>, vector<16x1024xf32>
    %203 = vector.extract_strided_slice %202 {offsets = [0, 0], sizes = [16, 768], strides = [1, 1]} : vector<16x1024xf32> to vector<16x768xf32>
    %c0_72 = arith.constant 0 : index
    %c0_73 = arith.constant 0 : index
    %204 = vector.load %arg2[%c0_72, %c0_73] : memref<256x1024xbf16, #tpu.memory_space<vmem>>, vector<256x768xbf16>
    %cst_74 = arith.constant dense<0.000000e+00> : vector<16x768xf32>
    %205 = tpu.matmul %200, %204, %cst_74 {dimension_numbers = #tpu.dot_dimension_numbers<[1], [0], [0], [1], [0, 0, 1, 1], [], []>} : vector<16x256xbf16>, vector<256x768xbf16>, vector<16x768xf32> -> vector<16x768xf32>
    %206 = arith.addf %203, %205 : vector<16x768xf32>
    %207 = vector.extract_strided_slice %202 {offsets = [0, 768], sizes = [16, 256], strides = [1, 1]} : vector<16x1024xf32> to vector<16x256xf32>
    %c0_75 = arith.constant 0 : index
    %c768_76 = arith.constant 768 : index
    %208 = vector.load %arg2[%c0_75, %c768_76] : memref<256x1024xbf16, #tpu.memory_space<vmem>>, vector<256x256xbf16>
    %cst_77 = arith.constant dense<0.000000e+00> : vector<16x256xf32>
    %209 = tpu.matmul %200, %208, %cst_77 {dimension_numbers = #tpu.dot_dimension_numbers<[1], [0], [0], [1], [0, 0, 1, 1], [], []>} : vector<16x256xbf16>, vector<256x256xbf16>, vector<16x256xf32> -> vector<16x256xf32>
    %210 = arith.addf %207, %209 : vector<16x256xf32>
    %211 = arith.negf %206 : vector<16x768xf32>
    %212 = math.exp %211 : vector<16x768xf32>
    %cst_78 = arith.constant 1.000000e+00 : f32
    %213 = vector.broadcast %cst_78 : f32 to vector<16x768xf32>
    %214 = arith.addf %213, %212 : vector<16x768xf32>
    %215 = arith.divf %213, %214 : vector<16x768xf32>
    %216 = math.tanh %210 : vector<16x256xf32>
    %217 = vector.extract_strided_slice %215 {offsets = [0, 0], sizes = [16, 256], strides = [1, 1]} : vector<16x768xf32> to vector<16x256xf32>
    %218 = vector.extract_strided_slice %215 {offsets = [0, 256], sizes = [16, 256], strides = [1, 1]} : vector<16x768xf32> to vector<16x256xf32>
    %219 = vector.extract_strided_slice %215 {offsets = [0, 512], sizes = [16, 256], strides = [1, 1]} : vector<16x768xf32> to vector<16x256xf32>
    %220 = arith.mulf %218, %195 : vector<16x256xf32>
    %221 = arith.mulf %217, %216 : vector<16x256xf32>
    %222 = arith.addf %220, %221 : vector<16x256xf32>
    %223 = math.tanh %222 : vector<16x256xf32>
    %224 = arith.mulf %219, %223 : vector<16x256xf32>
    %c8_i32 = arith.constant 8 : i32
    %225 = arith.truncf %224 : vector<16x256xf32> to vector<16x256xbf16>
    %c0_79 = arith.constant 0 : index
    %c0_80 = arith.constant 0 : index
    %226 = vector.load %arg4[%c0_79, %c0_80] : memref<256x128xbf16, #tpu.memory_space<vmem>>, vector<256x128xbf16>
    %cst_81 = arith.constant dense<0.000000e+00> : vector<16x128xf32>
    %227 = tpu.matmul %225, %226, %cst_81 {dimension_numbers = #tpu.dot_dimension_numbers<[1], [0], [0], [1], [0, 0, 1, 1], [], []>} : vector<16x256xbf16>, vector<256x128xbf16>, vector<16x128xf32> -> vector<16x128xf32>
    %c0_82 = arith.constant 0 : index
    %c0_83 = arith.constant 0 : index
    %228 = vector.load %arg5[%c0_82, %c0_83] : memref<1x128xf32, #tpu.memory_space<vmem>>, vector<1x128xf32>
    %229 = vector.broadcast %228 : vector<1x128xf32> to vector<16x128xf32>
    %230 = arith.addf %227, %229 : vector<16x128xf32>
    %cst_84 = arith.constant 0.000000e+00 : f32
    %231 = vector.broadcast %cst_84 : f32 to vector<16x128xf32>
    %232 = arith.maximumf %230, %231 : vector<16x128xf32>
    %c0_85 = arith.constant 0 : index
    %c0_86 = arith.constant 0 : index
    %233 = vector.load %arg6[%c0_85, %c0_86] : memref<128x4xf32, #tpu.memory_space<vmem>>, vector<128x4xf32>
    %cst_87 = arith.constant dense<0.000000e+00> : vector<16x4xf32>
    %234 = tpu.matmul %232, %233, %cst_87 {dimension_numbers = #tpu.dot_dimension_numbers<[1], [0], [0], [1], [0, 0, 1, 1], [], []>} : vector<16x128xf32>, vector<128x4xf32>, vector<16x4xf32> -> vector<16x4xf32>
    %c0_88 = arith.constant 0 : index
    %c0_89 = arith.constant 0 : index
    %235 = vector.load %arg7[%c0_88, %c0_89] : memref<1x4xf32, #tpu.memory_space<vmem>>, vector<1x4xf32>
    %236 = vector.broadcast %235 : vector<1x4xf32> to vector<16x4xf32>
    %237 = arith.addf %234, %236 : vector<16x4xf32>
    %c0_90 = arith.constant 0 : index
    %c0_91 = arith.constant 0 : index
    %238 = vector.load %arg8[%c0_90, %c0_91] : memref<16x4xf32, #tpu.memory_space<vmem>>, vector<16x4xf32>
    tpu.vector_store %arg8[%c0_90, %c0_91], %237 {strides = array<i32>} : memref<16x4xf32, #tpu.memory_space<vmem>>, vector<16x4xf32>,
    return
  }
}

</mosaic_0001>

<llo_original>
// kernel: tpu_custom_call.1
$region0: #{tpu_custom_call.1}
  #allocation0 [shape = 'u32[]', space=smem, size = 0x4, offset = 0x4, fixed_abs, tag = 'smem constant byte address 0x4 - core index']
  #allocation1 [shape = 'u32[144,128]{1,0:T(1,128)}', space=vmem, size = 0x12000, scoped, tag = 'internal scratch']
  #allocation2 [shape = 'f32[128,1024]{1,0:T(8,128)}', space=vmem, size = 0x80000, scoped, tag = 'scratch operand']
  %s0 = inlined_call_operand.vmem [shape: bf16[128,32], index: 0, kind: input, shape index: {}]
  %s1 = inlined_call_operand.vmem [shape: bf16[32,1024], index: 1, kind: input, shape index: {}]
  %s2 = inlined_call_operand.hbm [shape: bf16[256,1024], index: 2, kind: input, shape index: {}]
  %s3 = inlined_call_operand.vmem [shape: f32[1,1024], index: 3, kind: input, shape index: {}]
  %s4 = inlined_call_operand.hbm [shape: bf16[256,128], index: 4, kind: input, shape index: {}]
  %s5 = inlined_call_operand.vmem [shape: f32[1,128], index: 5, kind: input, shape index: {}]
  %s6 = inlined_call_operand.vmem [shape: f32[128,4], index: 6, kind: input, shape index: {}]
  %s7 = inlined_call_operand.vmem [shape: f32[1,4], index: 7, kind: input, shape index: {}]
  %s8 = inlined_call_operand.vmem [shape: f32[16,4], index: 8, kind: output, shape index: {}]
  %s9 = sld [smem:[#allocation0]]
  $region50: #{tpu_custom_call.1} parent=0
    _
  %s11 = ssub.s32 1, %s9
  %s12 = scalar_select 0, %s11, %s9
  $region1: #{tpu_custom_call.1} parent=0
    #allocation3 [shape = 'u8[524288]{0}', space=vmem, size = 0x80000, scoped, tag = 'input window, operand 2, single buffered']
    #allocation4 [shape = 's32[1]{0}', space=sflag, size = 0x4, scoped, tag = 'scoped memory for tpu_custom_call.1']
    #allocation5 [shape = 'u8[65536]{0}', space=vmem, size = 0x10000, scoped, tag = 'input window, operand 4, single buffered']
    #allocation6 [shape = 's32[1]{0}', space=sflag, size = 0x4, scoped, tag = 'scoped memory for tpu_custom_call.1']
    %13 = vsyncpa [#allocation4], 0
    %14 = vsyncpa [#allocation6], 0
    // Predicated region
    $region2: #{tpu_custom_call.1} parent=1 // pred_check
      _
    $region3: #{tpu_custom_call.1} parent=1 // pred_check_branch
      %16 = sbr.rel (0) target = $region5
    $region4: #{tpu_custom_call.1} parent=1 // pred_region
      _
    $region5: #{tpu_custom_call.1} parent=1 // pred_fallthru
      _
    // Predicated region
    $region6: #{tpu_custom_call.1} parent=1 // pred_check
      _
    $region7: #{tpu_custom_call.1} parent=1 // pred_check_branch
      %18 = sbr.rel (0) target = $region9
    $region8: #{tpu_custom_call.1} parent=1 // pred_region
      _
    $region9: #{tpu_custom_call.1} parent=1 // pred_fallthru
      _
    // Predicated region
    $region10: #{tpu_custom_call.1} parent=1 // pred_check
      _
    $region11: #{tpu_custom_call.1} parent=1 // pred_check_branch
      %20 = sbr.rel (0) target = $region13
    $region12: #{tpu_custom_call.1} parent=1 // pred_region
      %s22 = ssub.s32 16384, 16384
      %23 = vsyncadd [#allocation4], %s22
      %s24 = sshll.u32 [#allocation3], 4
      %s25 = int_to_ptr.vmem [resolvable:$true] %s24
      %30 = dma.hbm_to_vmem [thread:$0]  %s2, 16384, %s25, [#allocation4], 512, 512, 32
    $region13: #{tpu_custom_call.1} parent=1 // pred_fallthru
      _
    // Predicated region
    $region14: #{tpu_custom_call.1} parent=1 // pred_check
      _
    $region15: #{tpu_custom_call.1} parent=1 // pred_check_branch
      %32 = sbr.rel (0) target = $region17
    $region16: #{tpu_custom_call.1} parent=1 // pred_region
      _
    $region17: #{tpu_custom_call.1} parent=1 // pred_fallthru
      _
    // Predicated region
    $region18: #{tpu_custom_call.1} parent=1 // pred_check
      _
    $region19: #{tpu_custom_call.1} parent=1 // pred_check_branch
      %34 = sbr.rel (0) target = $region21
    $region20: #{tpu_custom_call.1} parent=1 // pred_region
      %s36 = ssub.s32 2048, 2048
      %37 = vsyncadd [#allocation6], %s36
      %s38 = sshll.u32 [#allocation5], 4
      %s39 = int_to_ptr.vmem [resolvable:$true] %s38
      %44 = dma.hbm_to_vmem [thread:$0]  %s4, 2048, %s39, [#allocation6], 64, 64, 4
    $region21: #{tpu_custom_call.1} parent=1 // pred_fallthru
      _
    // Predicated region
    $region22: #{tpu_custom_call.1} parent=1 // pred_check
      _
    $region23: #{tpu_custom_call.1} parent=1 // pred_check_branch
      %46 = sbr.rel (0) target = $region25
    $region24: #{tpu_custom_call.1} parent=1 // pred_region
      _
    $region25: #{tpu_custom_call.1} parent=1 // pred_fallthru
      _
    // Predicated region
    $region26: #{tpu_custom_call.1} parent=1 // pred_check
      _
    $region27: #{tpu_custom_call.1} parent=1 // pred_check_branch
      %48 = sbr.rel (0) target = $region29
    $region28: #{tpu_custom_call.1} parent=1 // pred_region
      _
    $region29: #{tpu_custom_call.1} parent=1 // pred_fallthru
      _
    // Predicated region
    $region30: #{tpu_custom_call.1} parent=1 // pred_check
      _
    $region31: #{tpu_custom_call.1} parent=1 // pred_check_branch
      %50 = sbr.rel (0) target = $region33
    $region32: #{tpu_custom_call.1} parent=1 // pred_region
      _
    $region33: #{tpu_custom_call.1} parent=1 // pred_fallthru
      _
    // Predicated region
    $region34: #{tpu_custom_call.1} parent=1 // pred_check
      _
    $region35: #{tpu_custom_call.1} parent=1 // pred_check_branch
      %52 = sbr.rel (0) target = $region37
    $region36: #{tpu_custom_call.1} parent=1 // pred_region
      %53 = dma.done [#allocation4], 16384
    $region37: #{tpu_custom_call.1} parent=1 // pred_fallthru
      _
    // Predicated region
    $region38: #{tpu_custom_call.1} parent=1 // pred_check
      _
    $region39: #{tpu_custom_call.1} parent=1 // pred_check_branch
      %55 = sbr.rel (0) target = $region41
    $region40: #{tpu_custom_call.1} parent=1 // pred_region
      %56 = dma.done [#allocation6], 2048
    $region41: #{tpu_custom_call.1} parent=1 // pred_fallthru
      _
    %v58 = vld [vmem:[%s0] sm:$0xf]
    %v59 = vld [vmem:[%s0 + $0x4] sm:$0xf]
    %v60 = vld [vmem:[%s0 + $0x8] sm:$0xf]
    %v61 = vld [vmem:[%s0 + $0xc] sm:$0xf]
    %v62 = vld [vmem:[%s0 + $0x10] sm:$0xf]
    %v63 = vld [vmem:[%s0 + $0x14] sm:$0xf]
    %v64 = vld [vmem:[%s0 + $0x18] sm:$0xf]
    %v65 = vld [vmem:[%s0 + $0x1c] sm:$0xf]
    %v66 = vld [vmem:[%s0 + $0x20] sm:$0xf]
    %v67 = vld [vmem:[%s0 + $0x24] sm:$0xf]
    %v68 = vld [vmem:[%s0 + $0x28] sm:$0xf]
    %v69 = vld [vmem:[%s0 + $0x2c] sm:$0xf]
    %v70 = vld [vmem:[%s0 + $0x30] sm:$0xf]
    %v71 = vld [vmem:[%s0 + $0x34] sm:$0xf]
    %v72 = vld [vmem:[%s0 + $0x38] sm:$0xf]
    %v73 = vld [vmem:[%s0 + $0x3c] sm:$0xf]
    %v74 = vld [vmem:[%s1] sm:$0xff]
    %v75 = vld [vmem:[%s1 + $0x8] sm:$0xff]
    %v76 = vld [vmem:[%s1 + $0x10] sm:$0xff]
    %v77 = vld [vmem:[%s1 + $0x18] sm:$0xff]
    %v78 = vld [vmem:[%s1 + $0x20] sm:$0xff]
    %v79 = vld [vmem:[%s1 + $0x28] sm:$0xff]
    %v80 = vld [vmem:[%s1 + $0x30] sm:$0xff]
    %v81 = vld [vmem:[%s1 + $0x38] sm:$0xff]
    %v82 = vld [vmem:[%s1 + $0x40] sm:$0xff]
    %v83 = vld [vmem:[%s1 + $0x48] sm:$0xff]
    %v84 = vld [vmem:[%s1 + $0x50] sm:$0xff]
    %v85 = vld [vmem:[%s1 + $0x58] sm:$0xff]
    %v86 = vld [vmem:[%s1 + $0x60] sm:$0xff]
    %v87 = vld [vmem:[%s1 + $0x68] sm:$0xff]
    %v88 = vld [vmem:[%s1 + $0x70] sm:$0xff]
    %v89 = vld [vmem:[%s1 + $0x78] sm:$0xff]
    %v90 = vld [vmem:[%s3] sm:$0xff]
    %v92 = vlaneseq
    %v93 = vshrl.u32 %v92, 7
    %v94 = vsub.s32 0, %v93
    %v95 = vrot.slane %v90, %v94
    %v96 = vlaneseq
    %v97 = vshrl.u32 %v96, 7
    %v98 = vsub.s32 1, %v97
    %v99 = vrot.slane %v90, %v98
    %v100 = vlaneseq
    %v101 = vshrl.u32 %v100, 7
    %v102 = vsub.s32 2, %v101
    %v103 = vrot.slane %v90, %v102
    %v104 = vlaneseq
    %v105 = vshrl.u32 %v104, 7
    %v106 = vsub.s32 3, %v105
    %v107 = vrot.slane %v90, %v106
    %v108 = vlaneseq
    %v109 = vshrl.u32 %v108, 7
    %v110 = vsub.s32 4, %v109
    %v111 = vrot.slane %v90, %v110
    %v112 = vlaneseq
    %v113 = vshrl.u32 %v112, 7
    %v114 = vsub.s32 5, %v113
    %v115 = vrot.slane %v90, %v114
    %v116 = vlaneseq
    %v117 = vshrl.u32 %v116, 7
    %v118 = vsub.s32 6, %v117
    %v119 = vrot.slane %v90, %v118
    %v120 = vlaneseq
    %v121 = vshrl.u32 %v120, 7
    %v122 = vsub.s32 7, %v121
    %v123 = vrot.slane %v90, %v122
    %v148 = vunpack.c.l.b16 %v58
    %v149 = vunpack.c.l.b16 %v59
    %v150 = vunpack.c.l.b16 %v60
    %v151 = vunpack.c.l.b16 %v61
    %v152 = vunpack.c.l.b16 %v62
    %v153 = vunpack.c.l.b16 %v63
    %v154 = vunpack.c.l.b16 %v64
    %v155 = vunpack.c.l.b16 %v65
    %v156 = vunpack.c.l.b16 %v66
    %v157 = vunpack.c.l.b16 %v67
    %v158 = vunpack.c.l.b16 %v68
    %v159 = vunpack.c.l.b16 %v69
    %v160 = vunpack.c.l.b16 %v70
    %v161 = vunpack.c.l.b16 %v71
    %v162 = vunpack.c.l.b16 %v72
    %v163 = vunpack.c.l.b16 %v73
    %v164 = vpack.c.b16 %v149, %v148
    %v165 = vpack.c.b16 %v151, %v150
    %v166 = vpack.c.b16 %v153, %v152
    %v167 = vpack.c.b16 %v155, %v154
    %v168 = vpack.c.b16 %v157, %v156
    %v169 = vpack.c.b16 %v159, %v158
    %v170 = vpack.c.b16 %v161, %v160
    %v171 = vpack.c.b16 %v163, %v162
    %v188 = vunpack.c.l.b16 %v74
    %v189 = vunpack.c.h.b16 %v74
    %v190 = vunpack.c.l.b16 %v75
    %v191 = vunpack.c.h.b16 %v75
    %v192 = vunpack.c.l.b16 %v76
    %v193 = vunpack.c.h.b16 %v76
    %v194 = vunpack.c.l.b16 %v77
    %v195 = vunpack.c.h.b16 %v77
    %v196 = vunpack.c.l.b16 %v78
    %v197 = vunpack.c.h.b16 %v78
    %v198 = vunpack.c.l.b16 %v79
    %v199 = vunpack.c.h.b16 %v79
    %v200 = vunpack.c.l.b16 %v80
    %v201 = vunpack.c.h.b16 %v80
    %v202 = vunpack.c.l.b16 %v81
    %v203 = vunpack.c.h.b16 %v81
    %v204 = vunpack.c.l.b16 %v82
    %v205 = vunpack.c.h.b16 %v82
    %v206 = vunpack.c.l.b16 %v83
    %v207 = vunpack.c.h.b16 %v83
    %v208 = vunpack.c.l.b16 %v84
    %v209 = vunpack.c.h.b16 %v84
    %v210 = vunpack.c.l.b16 %v85
    %v211 = vunpack.c.h.b16 %v85
    %v212 = vunpack.c.l.b16 %v86
    %v213 = vunpack.c.h.b16 %v86
    %v214 = vunpack.c.l.b16 %v87
    %v215 = vunpack.c.h.b16 %v87
    %v216 = vunpack.c.l.b16 %v88
    %v217 = vunpack.c.h.b16 %v88
    %v218 = vunpack.c.l.b16 %v89
    %v219 = vunpack.c.h.b16 %v89
    %v220 = vpack.c.b16 %v196, %v188
    %v221 = vpack.c.b16 %v197, %v189
    %v222 = vpack.c.b16 %v198, %v190
    %v223 = vpack.c.b16 %v199, %v191
    %v224 = vpack.c.b16 %v200, %v192
    %v225 = vpack.c.b16 %v201, %v193
    %v226 = vpack.c.b16 %v202, %v194
    %v227 = vpack.c.b16 %v203, %v195
    %v228 = vpack.c.b16 %v212, %v204
    %v229 = vpack.c.b16 %v213, %v205
    %v230 = vpack.c.b16 %v214, %v206
    %v231 = vpack.c.b16 %v215, %v207
    %v232 = vpack.c.b16 %v216, %v208
    %v233 = vpack.c.b16 %v217, %v209
    %v234 = vpack.c.b16 %v218, %v210
    %v235 = vpack.c.b16 %v219, %v211
    %vm252 = vcmask 261120
    %v254 = vsel %vm252, %v164, 0
    %v257 = vsel %vm252, %v165, 0
    %v260 = vsel %vm252, %v166, 0
    %v263 = vsel %vm252, %v167, 0
    %v266 = vsel %vm252, %v168, 0
    %v269 = vsel %vm252, %v169, 0
    %v272 = vsel %vm252, %v170, 0
    %v275 = vsel %vm252, %v171, 0
    %277 = vmatprep.subr.bf16.mxu0 %v221
    %278 = vmatpush1.bf16.msra.mxu0 %v220
    %279 = vmatprep.subr.bf16.mxu0 %v229
    %280 = vmatpush1.bf16.msra.mxu0 %v228
    %281 = vmatprep.subr.bf16.mxu0 0
    %282 = vmatpush1.bf16.msra.mxu0 0
    %283 = vmatprep.subr.bf16.mxu0 0
    %284 = vmatpush1.bf16.msra.mxu0 0
    %285 = vmatprep.subr.bf16.mxu0 0
    %286 = vmatpush1.bf16.msra.mxu0 0
    %287 = vmatprep.subr.bf16.mxu0 0
    %288 = vmatpush1.bf16.msra.mxu0 0
    %289 = vmatprep.subr.bf16.mxu0 0
    %290 = vmatpush1.bf16.msra.mxu0 0
    %291 = vmatprep.subr.bf16.mxu0 0
    %292 = vmatpush1.bf16.msra.mxu0 0
    %293 = vmatprep.subr.bf16.mxu0 0
    %294 = vmatpush1.bf16.msra.mxu0 0
    %295 = vmatprep.subr.bf16.mxu0 0
    %296 = vmatpush1.bf16.msra.mxu0 0
    %297 = vmatprep.subr.bf16.mxu0 0
    %298 = vmatpush1.bf16.msra.mxu0 0
    %299 = vmatprep.subr.bf16.mxu0 0
    %300 = vmatpush1.bf16.msra.mxu0 0
    %301 = vmatprep.subr.bf16.mxu0 0
    %302 = vmatpush1.bf16.msra.mxu0 0
    %303 = vmatprep.subr.bf16.mxu0 0
    %304 = vmatpush1.bf16.msra.mxu0 0
    %305 = vmatprep.subr.bf16.mxu0 0
    %306 = vmatpush1.bf16.msra.mxu0 0
    %307 = vmatprep.subr.bf16.mxu0 0
    %308 = vmatpush1.bf16.msra.mxu0 0
    %309 = vmatprep.mubr.bf16.mxu0 0
    %310 = vmatmul.mubr.bf16.gmra.mrb[0].mxu0 %v254
    %v311 = vpop.f32.mrb[0].mxu0
    %v312 = vadd.f32 %v95, %v311
    %v313 = vpop.f32.mrb[0].mxu0
    %v314 = vadd.f32 %v99, %v313
    %v315 = vpop.f32.mrb[0].mxu0
    %v316 = vadd.f32 %v95, %v315
    %v317 = vpop.f32.mrb[0].mxu0
    %v318 = vadd.f32 %v99, %v317
    %319 = vmatprep.mubr.bf16.mxu0 0
    %320 = vmatmul.mubr.bf16.gmra.mrb[0].mxu0 %v257
    %v321 = vpop.f32.mrb[0].mxu0
    %v322 = vadd.f32 %v95, %v321
    %v323 = vpop.f32.mrb[0].mxu0
    %v324 = vadd.f32 %v99, %v323
    %v325 = vpop.f32.mrb[0].mxu0
    %v326 = vadd.f32 %v95, %v325
    %v327 = vpop.f32.mrb[0].mxu0
    %v328 = vadd.f32 %v99, %v327
    %329 = vmatprep.mubr.bf16.mxu0 0
    %330 = vmatmul.mubr.bf16.gmra.mrb[0].mxu0 %v260
    %v331 = vpop.f32.mrb[0].mxu0
    %v332 = vadd.f32 %v95, %v331
    %v333 = vpop.f32.mrb[0].mxu0
    %v334 = vadd.f32 %v99, %v333
    %v335 = vpop.f32.mrb[0].mxu0
    %v336 = vadd.f32 %v95, %v335
    %v337 = vpop.f32.mrb[0].mxu0
    %v338 = vadd.f32 %v99, %v337
    %339 = vmatprep.mubr.bf16.mxu0 0
    %340 = vmatmul.mubr.bf16.gmra.mrb[0].mxu0 %v263
    %v341 = vpop.f32.mrb[0].mxu0
    %v342 = vadd.f32 %v95, %v341
    %v343 = vpop.f32.mrb[0].mxu0
    %v344 = vadd.f32 %v99, %v343
    %v345 = vpop.f32.mrb[0].mxu0
    %v346 = vadd.f32 %v95, %v345
    %v347 = vpop.f32.mrb[0].mxu0
    %v348 = vadd.f32 %v99, %v347
    %349 = vmatprep.mubr.bf16.mxu0 0
    %350 = vmatmul.mubr.bf16.gmra.mrb[0].mxu0 %v266
    %v351 = vpop.f32.mrb[0].mxu0
    %v352 = vadd.f32 %v95, %v351
    %v353 = vpop.f32.mrb[0].mxu0
    %v354 = vadd.f32 %v99, %v353
    %v355 = vpop.f32.mrb[0].mxu0
    %v356 = vadd.f32 %v95, %v355
    %v357 = vpop.f32.mrb[0].mxu0
    %v358 = vadd.f32 %v99, %v357
    %359 = vmatprep.mubr.bf16.mxu0 0
    %360 = vmatmul.mubr.bf16.gmra.mrb[0].mxu0 %v269
    %v361 = vpop.f32.mrb[0].mxu0
    %v362 = vadd.f32 %v95, %v361
    %v363 = vpop.f32.mrb[0].mxu0
    %v364 = vadd.f32 %v99, %v363
    %v365 = vpop.f32.mrb[0].mxu0
    %v366 = vadd.f32 %v95, %v365
    %v367 = vpop.f32.mrb[0].mxu0
    %v368 = vadd.f32 %v99, %v367
    %369 = vmatprep.mubr.bf16.mxu0 0
    %370 = vmatmul.mubr.bf16.gmra.mrb[0].mxu0 %v272
    %v371 = vpop.f32.mrb[0].mxu0
    %v372 = vadd.f32 %v95, %v371
    %v373 = vpop.f32.mrb[0].mxu0
    %v374 = vadd.f32 %v99, %v373
    %v375 = vpop.f32.mrb[0].mxu0
    %v376 = vadd.f32 %v95, %v375
    %v377 = vpop.f32.mrb[0].mxu0
    %v378 = vadd.f32 %v99, %v377
    %379 = vmatprep.mubr.bf16.mxu0 0
    %380 = vmatmul.mubr.bf16.gmra.mrb[0].mxu0 %v275
    %v381 = vpop.f32.mrb[0].mxu0
    %v382 = vadd.f32 %v95, %v381
    %v383 = vpop.f32.mrb[0].mxu0
    %v384 = vadd.f32 %v99, %v383
    %v385 = vpop.f32.mrb[0].mxu0
    %v386 = vadd.f32 %v95, %v385
    %v387 = vpop.f32.mrb[0].mxu0
    %v388 = vadd.f32 %v99, %v387
    %389 = vdwg.mxu0
    %390 = vmatprep.subr.bf16.mxu0 %v223
    %391 = vmatpush1.bf16.msra.mxu0 %v222
    %392 = vmatprep.subr.bf16.mxu0 %v231
    %393 = vmatpush1.bf16.msra.mxu0 %v230
    %394 = vmatprep.subr.bf16.mxu0 0
    %395 = vmatpush1.bf16.msra.mxu0 0
    %396 = vmatprep.subr.bf16.mxu0 0
    %397 = vmatpush1.bf16.msra.mxu0 0
    %398 = vmatprep.subr.bf16.mxu0 0
    %399 = vmatpush1.bf16.msra.mxu0 0
    %400 = vmatprep.subr.bf16.mxu0 0
    %401 = vmatpush1.bf16.msra.mxu0 0
    %402 = vmatprep.subr.bf16.mxu0 0
    %403 = vmatpush1.bf16.msra.mxu0 0
    %404 = vmatprep.subr.bf16.mxu0 0
    %405 = vmatpush1.bf16.msra.mxu0 0
    %406 = vmatprep.subr.bf16.mxu0 0
    %407 = vmatpush1.bf16.msra.mxu0 0
    %408 = vmatprep.subr.bf16.mxu0 0
    %409 = vmatpush1.bf16.msra.mxu0 0
    %410 = vmatprep.subr.bf16.mxu0 0
    %411 = vmatpush1.bf16.msra.mxu0 0
    %412 = vmatprep.subr.bf16.mxu0 0
    %413 = vmatpush1.bf16.msra.mxu0 0
    %414 = vmatprep.subr.bf16.mxu0 0
    %415 = vmatpush1.bf16.msra.mxu0 0
    %416 = vmatprep.subr.bf16.mxu0 0
    %417 = vmatpush1.bf16.msra.mxu0 0
    %418 = vmatprep.subr.bf16.mxu0 0
    %419 = vmatpush1.bf16.msra.mxu0 0
    %420 = vmatprep.subr.bf16.mxu0 0
    %421 = vmatpush1.bf16.msra.mxu0 0
    %422 = vmatprep.mubr.bf16.mxu0 0
    %423 = vmatmul.mubr.bf16.gmra.mrb[0].mxu0 %v254
    %v424 = vpop.f32.mrb[0].mxu0
    %v425 = vadd.f32 %v103, %v424
    %v426 = vpop.f32.mrb[0].mxu0
    %v427 = vadd.f32 %v107, %v426
    %v428 = vpop.f32.mrb[0].mxu0
    %v429 = vadd.f32 %v103, %v428
    %v430 = vpop.f32.mrb[0].mxu0
    %v431 = vadd.f32 %v107, %v430
    %432 = vmatprep.mubr.bf16.mxu0 0
    %433 = vmatmul.mubr.bf16.gmra.mrb[0].mxu0 %v257
    %v434 = vpop.f32.mrb[0].mxu0
    %v435 = vadd.f32 %v103, %v434
    %v436 = vpop.f32.mrb[0].mxu0
    %v437 = vadd.f32 %v107, %v436
    %v438 = vpop.f32.mrb[0].mxu0
    %v439 = vadd.f32 %v103, %v438
    %v440 = vpop.f32.mrb[0].mxu0
    %v441 = vadd.f32 %v107, %v440
    %442 = vmatprep.mubr.bf16.mxu0 0
    %443 = vmatmul.mubr.bf16.gmra.mrb[0].mxu0 %v260
    %v444 = vpop.f32.mrb[0].mxu0
    %v445 = vadd.f32 %v103, %v444
    %v446 = vpop.f32.mrb[0].mxu0
    %v447 = vadd.f32 %v107, %v446
    %v448 = vpop.f32.mrb[0].mxu0
    %v449 = vadd.f32 %v103, %v448
    %v450 = vpop.f32.mrb[0].mxu0
    %v451 = vadd.f32 %v107, %v450
    %452 = vmatprep.mubr.bf16.mxu0 0
    %453 = vmatmul.mubr.bf16.gmra.mrb[0].mxu0 %v263
    %v454 = vpop.f32.mrb[0].mxu0
    %v455 = vadd.f32 %v103, %v454
    %v456 = vpop.f32.mrb[0].mxu0
    %v457 = vadd.f32 %v107, %v456
    %v458 = vpop.f32.mrb[0].mxu0
    %v459 = vadd.f32 %v103, %v458
    %v460 = vpop.f32.mrb[0].mxu0
    %v461 = vadd.f32 %v107, %v460
    %462 = vmatprep.mubr.bf16.mxu0 0
    %463 = vmatmul.mubr.bf16.gmra.mrb[0].mxu0 %v266
    %v464 = vpop.f32.mrb[0].mxu0
    %v465 = vadd.f32 %v103, %v464
    %v466 = vpop.f32.mrb[0].mxu0
    %v467 = vadd.f32 %v107, %v466
    %v468 = vpop.f32.mrb[0].mxu0
    %v469 = vadd.f32 %v103, %v468
    %v470 = vpop.f32.mrb[0].mxu0
    %v471 = vadd.f32 %v107, %v470
    %472 = vmatprep.mubr.bf16.mxu0 0
    %473 = vmatmul.mubr.bf16.gmra.mrb[0].mxu0 %v269
    %v474 = vpop.f32.mrb[0].mxu0
    %v475 = vadd.f32 %v103, %v474
    %v476 = vpop.f32.mrb[0].mxu0
    %v477 = vadd.f32 %v107, %v476
    %v478 = vpop.f32.mrb[0].mxu0
    %v479 = vadd.f32 %v103, %v478
    %v480 = vpop.f32.mrb[0].mxu0
    %v481 = vadd.f32 %v107, %v480
    %482 = vmatprep.mubr.bf16.mxu0 0
    %483 = vmatmul.mubr.bf16.gmra.mrb[0].mxu0 %v272
    %v484 = vpop.f32.mrb[0].mxu0
    %v485 = vadd.f32 %v103, %v484
    %v486 = vpop.f32.mrb[0].mxu0
    %v487 = vadd.f32 %v107, %v486
    %v488 = vpop.f32.mrb[0].mxu0
    %v489 = vadd.f32 %v103, %v488
    %v490 = vpop.f32.mrb[0].mxu0
    %v491 = vadd.f32 %v107, %v490
    %492 = vmatprep.mubr.bf16.mxu0 0
    %493 = vmatmul.mubr.bf16.gmra.mrb[0].mxu0 %v275
    %v494 = vpop.f32.mrb[0].mxu0
    %v495 = vadd.f32 %v103, %v494
    %v496 = vpop.f32.mrb[0].mxu0
    %v497 = vadd.f32 %v107, %v496
    %v498 = vpop.f32.mrb[0].mxu0
    %v499 = vadd.f32 %v103, %v498
    %v500 = vpop.f32.mrb[0].mxu0
    %v501 = vadd.f32 %v107, %v500
    %502 = vdwg.mxu0
    %503 = vmatprep.subr.bf16.mxu0 %v225
    %504 = vmatpush1.bf16.msra.mxu0 %v224
    %505 = vmatprep.subr.bf16.mxu0 %v233
    %506 = vmatpush1.bf16.msra.mxu0 %v232
    %507 = vmatprep.subr.bf16.mxu0 0
    %508 = vmatpush1.bf16.msra.mxu0 0
    %509 = vmatprep.subr.bf16.mxu0 0
    %510 = vmatpush1.bf16.msra.mxu0 0
    %511 = vmatprep.subr.bf16.mxu0 0
    %512 = vmatpush1.bf16.msra.mxu0 0
    %513 = vmatprep.subr.bf16.mxu0 0
    %514 = vmatpush1.bf16.msra.mxu0 0
    %515 = vmatprep.subr.bf16.mxu0 0
    %516 = vmatpush1.bf16.msra.mxu0 0
    %517 = vmatprep.subr.bf16.mxu0 0
    %518 = vmatpush1.bf16.msra.mxu0 0
    %519 = vmatprep.subr.bf16.mxu0 0
    %520 = vmatpush1.bf16.msra.mxu0 0
    %521 = vmatprep.subr.bf16.mxu0 0
    %522 = vmatpush1.bf16.msra.mxu0 0
    %523 = vmatprep.subr.bf16.mxu0 0
    %524 = vmatpush1.bf16.msra.mxu0 0
    %525 = vmatprep.subr.bf16.mxu0 0
    %526 = vmatpush1.bf16.msra.mxu0 0
    %527 = vmatprep.subr.bf16.mxu0 0
    %528 = vmatpush1.bf16.msra.mxu0 0
    %529 = vmatprep.subr.bf16.mxu0 0
    %530 = vmatpush1.bf16.msra.mxu0 0
    %531 = vmatprep.subr.bf16.mxu0 0
    %532 = vmatpush1.bf16.msra.mxu0 0
    %533 = vmatprep.subr.bf16.mxu0 0
    %534 = vmatpush1.bf16.msra.mxu0 0
    %535 = vmatprep.mubr.bf16.mxu0 0
    %536 = vmatmul.mubr.bf16.gmra.mrb[0].mxu0 %v254
    %v537 = vpop.f32.mrb[0].mxu0
    %v538 = vadd.f32 %v111, %v537
    %v539 = vpop.f32.mrb[0].mxu0
    %v540 = vadd.f32 %v115, %v539
    %v541 = vpop.f32.mrb[0].mxu0
    %v542 = vadd.f32 %v111, %v541
    %v543 = vpop.f32.mrb[0].mxu0
    %v544 = vadd.f32 %v115, %v543
    %545 = vmatprep.mubr.bf16.mxu0 0
    %546 = vmatmul.mubr.bf16.gmra.mrb[0].mxu0 %v257
    %v547 = vpop.f32.mrb[0].mxu0
    %v548 = vadd.f32 %v111, %v547
    %v549 = vpop.f32.mrb[0].mxu0
    %v550 = vadd.f32 %v115, %v549
    %v551 = vpop.f32.mrb[0].mxu0
    %v552 = vadd.f32 %v111, %v551
    %v553 = vpop.f32.mrb[0].mxu0
    %v554 = vadd.f32 %v115, %v553
    %555 = vmatprep.mubr.bf16.mxu0 0
    %556 = vmatmul.mubr.bf16.gmra.mrb[0].mxu0 %v260
    %v557 = vpop.f32.mrb[0].mxu0
    %v558 = vadd.f32 %v111, %v557
    %v559 = vpop.f32.mrb[0].mxu0
    %v560 = vadd.f32 %v115, %v559
    %v561 = vpop.f32.mrb[0].mxu0
    %v562 = vadd.f32 %v111, %v561
    %v563 = vpop.f32.mrb[0].mxu0
    %v564 = vadd.f32 %v115, %v563
    %565 = vmatprep.mubr.bf16.mxu0 0
    %566 = vmatmul.mubr.bf16.gmra.mrb[0].mxu0 %v263
    %v567 = vpop.f32.mrb[0].mxu0
    %v568 = vadd.f32 %v111, %v567
    %v569 = vpop.f32.mrb[0].mxu0
    %v570 = vadd.f32 %v115, %v569
    %v571 = vpop.f32.mrb[0].mxu0
    %v572 = vadd.f32 %v111, %v571
    %v573 = vpop.f32.mrb[0].mxu0
    %v574 = vadd.f32 %v115, %v573
    %575 = vmatprep.mubr.bf16.mxu0 0
    %576 = vmatmul.mubr.bf16.gmra.mrb[0].mxu0 %v266
    %v577 = vpop.f32.mrb[0].mxu0
    %v578 = vadd.f32 %v111, %v577
    %v579 = vpop.f32.mrb[0].mxu0
    %v580 = vadd.f32 %v115, %v579
    %v581 = vpop.f32.mrb[0].mxu0
    %v582 = vadd.f32 %v111, %v581
    %v583 = vpop.f32.mrb[0].mxu0
    %v584 = vadd.f32 %v115, %v583
    %585 = vmatprep.mubr.bf16.mxu0 0
    %586 = vmatmul.mubr.bf16.gmra.mrb[0].mxu0 %v269
    %v587 = vpop.f32.mrb[0].mxu0
    %v588 = vadd.f32 %v111, %v587
    %v589 = vpop.f32.mrb[0].mxu0
    %v590 = vadd.f32 %v115, %v589
    %v591 = vpop.f32.mrb[0].mxu0
    %v592 = vadd.f32 %v111, %v591
    %v593 = vpop.f32.mrb[0].mxu0
    %v594 = vadd.f32 %v115, %v593
    %595 = vmatprep.mubr.bf16.mxu0 0
    %596 = vmatmul.mubr.bf16.gmra.mrb[0].mxu0 %v272
    %v597 = vpop.f32.mrb[0].mxu0
    %v598 = vadd.f32 %v111, %v597
    %v599 = vpop.f32.mrb[0].mxu0
    %v600 = vadd.f32 %v115, %v599
    %v601 = vpop.f32.mrb[0].mxu0
    %v602 = vadd.f32 %v111, %v601
    %v603 = vpop.f32.mrb[0].mxu0
    %v604 = vadd.f32 %v115, %v603
    %605 = vmatprep.mubr.bf16.mxu0 0
    %606 = vmatmul.mubr.bf16.gmra.mrb[0].mxu0 %v275
    %v607 = vpop.f32.mrb[0].mxu0
    %v608 = vadd.f32 %v111, %v607
    %v609 = vpop.f32.mrb[0].mxu0
    %v610 = vadd.f32 %v115, %v609
    %v611 = vpop.f32.mrb[0].mxu0
    %v612 = vadd.f32 %v111, %v611
    %v613 = vpop.f32.mrb[0].mxu0
    %v614 = vadd.f32 %v115, %v613
    %615 = vdwg.mxu0
    %616 = vmatprep.subr.bf16.mxu0 %v227
    %617 = vmatpush1.bf16.msra.mxu0 %v226
    %618 = vmatprep.subr.bf16.mxu0 %v235
    %619 = vmatpush1.bf16.msra.mxu0 %v234
    %620 = vmatprep.subr.bf16.mxu0 0
    %621 = vmatpush1.bf16.msra.mxu0 0
    %622 = vmatprep.subr.bf16.mxu0 0
    %623 = vmatpush1.bf16.msra.mxu0 0
    %624 = vmatprep.subr.bf16.mxu0 0
    %625 = vmatpush1.bf16.msra.mxu0 0
    %626 = vmatprep.subr.bf16.mxu0 0
    %627 = vmatpush1.bf16.msra.mxu0 0
    %628 = vmatprep.subr.bf16.mxu0 0
    %629 = vmatpush1.bf16.msra.mxu0 0
    %630 = vmatprep.subr.bf16.mxu0 0
    %631 = vmatpush1.bf16.msra.mxu0 0
    %632 = vmatprep.subr.bf16.mxu0 0
    %633 = vmatpush1.bf16.msra.mxu0 0
    %634 = vmatprep.subr.bf16.mxu0 0
    %635 = vmatpush1.bf16.msra.mxu0 0
    %636 = vmatprep.subr.bf16.mxu0 0
    %637 = vmatpush1.bf16.msra.mxu0 0
    %638 = vmatprep.subr.bf16.mxu0 0
    %639 = vmatpush1.bf16.msra.mxu0 0
    %640 = vmatprep.subr.bf16.mxu0 0
    %641 = vmatpush1.bf16.msra.mxu0 0
    %642 = vmatprep.subr.bf16.mxu0 0
    %643 = vmatpush1.bf16.msra.mxu0 0
    %644 = vmatprep.subr.bf16.mxu0 0
    %645 = vmatpush1.bf16.msra.mxu0 0
    %646 = vmatprep.subr.bf16.mxu0 0
    %647 = vmatpush1.bf16.msra.mxu0 0
    %648 = vmatprep.mubr.bf16.mxu0 0
    %649 = vmatmul.mubr.bf16.gmra.mrb[0].mxu0 %v254
    %v650 = vpop.f32.mrb[0].mxu0
    %v651 = vadd.f32 %v119, %v650
    %v652 = vpop.f32.mrb[0].mxu0
    %v653 = vadd.f32 %v123, %v652
    %v654 = vpop.f32.mrb[0].mxu0
    %v655 = vadd.f32 %v119, %v654
    %v656 = vpop.f32.mrb[0].mxu0
    %v657 = vadd.f32 %v123, %v656
    %658 = vmatprep.mubr.bf16.mxu0 0
    %659 = vmatmul.mubr.bf16.gmra.mrb[0].mxu0 %v257
    %v660 = vpop.f32.mrb[0].mxu0
    %v661 = vadd.f32 %v119, %v660
    %v662 = vpop.f32.mrb[0].mxu0
    %v663 = vadd.f32 %v123, %v662
    %v664 = vpop.f32.mrb[0].mxu0
    %v665 = vadd.f32 %v119, %v664
    %v666 = vpop.f32.mrb[0].mxu0
    %v667 = vadd.f32 %v123, %v666
    %668 = vmatprep.mubr.bf16.mxu0 0
    %669 = vmatmul.mubr.bf16.gmra.mrb[0].mxu0 %v260
    %v670 = vpop.f32.mrb[0].mxu0
    %v671 = vadd.f32 %v119, %v670
    %v672 = vpop.f32.mrb[0].mxu0
    %v673 = vadd.f32 %v123, %v672
    %v674 = vpop.f32.mrb[0].mxu0
    %v675 = vadd.f32 %v119, %v674
    %v676 = vpop.f32.mrb[0].mxu0
    %v677 = vadd.f32 %v123, %v676
    %678 = vmatprep.mubr.bf16.mxu0 0
    %679 = vmatmul.mubr.bf16.gmra.mrb[0].mxu0 %v263
    %v680 = vpop.f32.mrb[0].mxu0
    %v681 = vadd.f32 %v119, %v680
    %v682 = vpop.f32.mrb[0].mxu0
    %v683 = vadd.f32 %v123, %v682
    %v684 = vpop.f32.mrb[0].mxu0
    %v685 = vadd.f32 %v119, %v684
    %v686 = vpop.f32.mrb[0].mxu0
    %v687 = vadd.f32 %v123, %v686
    %688 = vmatprep.mubr.bf16.mxu0 0
    %689 = vmatmul.mubr.bf16.gmra.mrb[0].mxu0 %v266
    %v690 = vpop.f32.mrb[0].mxu0
    %v691 = vadd.f32 %v119, %v690
    %v692 = vpop.f32.mrb[0].mxu0
    %v693 = vadd.f32 %v123, %v692
    %v694 = vpop.f32.mrb[0].mxu0
    %v695 = vadd.f32 %v119, %v694
    %v696 = vpop.f32.mrb[0].mxu0
    %v697 = vadd.f32 %v123, %v696
    %698 = vmatprep.mubr.bf16.mxu0 0
    %699 = vmatmul.mubr.bf16.gmra.mrb[0].mxu0 %v269
    %v700 = vpop.f32.mrb[0].mxu0
    %v701 = vadd.f32 %v119, %v700
    %v702 = vpop.f32.mrb[0].mxu0
    %v703 = vadd.f32 %v123, %v702
    %v704 = vpop.f32.mrb[0].mxu0
    %v705 = vadd.f32 %v119, %v704
    %v706 = vpop.f32.mrb[0].mxu0
    %v707 = vadd.f32 %v123, %v706
    %708 = vmatprep.mubr.bf16.mxu0 0
    %709 = vmatmul.mubr.bf16.gmra.mrb[0].mxu0 %v272
    %v710 = vpop.f32.mrb[0].mxu0
    %v711 = vadd.f32 %v119, %v710
    %v712 = vpop.f32.mrb[0].mxu0
    %v713 = vadd.f32 %v123, %v712
    %v714 = vpop.f32.mrb[0].mxu0
    %v715 = vadd.f32 %v119, %v714
    %v716 = vpop.f32.mrb[0].mxu0
    %v717 = vadd.f32 %v123, %v716
    %718 = vmatprep.mubr.bf16.mxu0 0
    %719 = vmatmul.mubr.bf16.gmra.mrb[0].mxu0 %v275
    %v720 = vpop.f32.mrb[0].mxu0
    %v721 = vadd.f32 %v119, %v720
    %v722 = vpop.f32.mrb[0].mxu0
    %v723 = vadd.f32 %v123, %v722
    %v724 = vpop.f32.mrb[0].mxu0
    %v725 = vadd.f32 %v119, %v724
    %v726 = vpop.f32.mrb[0].mxu0
    %v727 = vadd.f32 %v123, %v726
    %728 = vdwg.mxu0
    %729 = vst [vmem:[#allocation2] sm:$0xff] %v312
    %730 = vst [vmem:[#allocation2 + $0x8] sm:$0xff] %v314
    %731 = vst [vmem:[#allocation2 + $0x10] sm:$0xff] %v425
    %732 = vst [vmem:[#allocation2 + $0x18] sm:$0xff] %v427
    %733 = vst [vmem:[#allocation2 + $0x20] sm:$0xff] %v538
    %734 = vst [vmem:[#allocation2 + $0x28] sm:$0xff] %v540
    %735 = vst [vmem:[#allocation2 + $0x30] sm:$0xff] %v651
    %736 = vst [vmem:[#allocation2 + $0x38] sm:$0xff] %v653
    %737 = vst [vmem:[#allocation2 + $0x40] sm:$0xff] %v316
    %738 = vst [vmem:[#allocation2 + $0x48] sm:$0xff] %v318
    %739 = vst [vmem:[#allocation2 + $0x50] sm:$0xff] %v429
    %740 = vst [vmem:[#allocation2 + $0x58] sm:$0xff] %v431
    %741 = vst [vmem:[#allocation2 + $0x60] sm:$0xff] %v542
    %742 = vst [vmem:[#allocation2 + $0x68] sm:$0xff] %v544
    %743 = vst [vmem:[#allocation2 + $0x70] sm:$0xff] %v655
    %744 = vst [vmem:[#allocation2 + $0x78] sm:$0xff] %v657
    %745 = vst [vmem:[#allocation2 + $0x80] sm:$0xff] %v322
    %746 = vst [vmem:[#allocation2 + $0x88] sm:$0xff] %v324
    %747 = vst [vmem:[#allocation2 + $0x90] sm:$0xff] %v435
    %748 = vst [vmem:[#allocation2 + $0x98] sm:$0xff] %v437
    %749 = vst [vmem:[#allocation2 + $0xa0] sm:$0xff] %v548
    %750 = vst [vmem:[#allocation2 + $0xa8] sm:$0xff] %v550
    %751 = vst [vmem:[#allocation2 + $0xb0] sm:$0xff] %v661
    %752 = vst [vmem:[#allocation2 + $0xb8] sm:$0xff] %v663
    %753 = vst [vmem:[#allocation2 + $0xc0] sm:$0xff] %v326
    %754 = vst [vmem:[#allocation2 + $0xc8] sm:$0xff] %v328
    %755 = vst [vmem:[#allocation2 + $0xd0] sm:$0xff] %v439
    %756 = vst [vmem:[#allocation2 + $0xd8] sm:$0xff] %v441
    %757 = vst [vmem:[#allocation2 + $0xe0] sm:$0xff] %v552
    %758 = vst [vmem:[#allocation2 + $0xe8] sm:$0xff] %v554
    %759 = vst [vmem:[#allocation2 + $0xf0] sm:$0xff] %v665
    %760 = vst [vmem:[#allocation2 + $0xf8] sm:$0xff] %v667
    %761 = vst [vmem:[#allocation2 + $0x100] sm:$0xff] %v332
    %762 = vst [vmem:[#allocation2 + $0x108] sm:$0xff] %v334
    %763 = vst [vmem:[#allocation2 + $0x110] sm:$0xff] %v445
    %764 = vst [vmem:[#allocation2 + $0x118] sm:$0xff] %v447
    %765 = vst [vmem:[#allocation2 + $0x120] sm:$0xff] %v558
    %766 = vst [vmem:[#allocation2 + $0x128] sm:$0xff] %v560
    %767 = vst [vmem:[#allocation2 + $0x130] sm:$0xff] %v671
    %768 = vst [vmem:[#allocation2 + $0x138] sm:$0xff] %v673
    %769 = vst [vmem:[#allocation2 + $0x140] sm:$0xff] %v336
    %770 = vst [vmem:[#allocation2 + $0x148] sm:$0xff] %v338
    %771 = vst [vmem:[#allocation2 + $0x150] sm:$0xff] %v449
    %772 = vst [vmem:[#allocation2 + $0x158] sm:$0xff] %v451
    %773 = vst [vmem:[#allocation2 + $0x160] sm:$0xff] %v562
    %774 = vst [vmem:[#allocation2 + $0x168] sm:$0xff] %v564
    %775 = vst [vmem:[#allocation2 + $0x170] sm:$0xff] %v675
    %776 = vst [vmem:[#allocation2 + $0x178] sm:$0xff] %v677
    %777 = vst [vmem:[#allocation2 + $0x180] sm:$0xff] %v342
    %778 = vst [vmem:[#allocation2 + $0x188] sm:$0xff] %v344
    %779 = vst [vmem:[#allocation2 + $0x190] sm:$0xff] %v455
    %780 = vst [vmem:[#allocation2 + $0x198] sm:$0xff] %v457
    %781 = vst [vmem:[#allocation2 + $0x1a0] sm:$0xff] %v568
    %782 = vst [vmem:[#allocation2 + $0x1a8] sm:$0xff] %v570
    %783 = vst [vmem:[#allocation2 + $0x1b0] sm:$0xff] %v681
    %784 = vst [vmem:[#allocation2 + $0x1b8] sm:$0xff] %v683
    %785 = vst [vmem:[#allocation2 + $0x1c0] sm:$0xff] %v346
    %786 = vst [vmem:[#allocation2 + $0x1c8] sm:$0xff] %v348
    %787 = vst [vmem:[#allocation2 + $0x1d0] sm:$0xff] %v459
    %788 = vst [vmem:[#allocation2 + $0x1d8] sm:$0xff] %v461
    %789 = vst [vmem:[#allocation2 + $0x1e0] sm:$0xff] %v572
    %790 = vst [vmem:[#allocation2 + $0x1e8] sm:$0xff] %v574
    %791 = vst [vmem:[#allocation2 + $0x1f0] sm:$0xff] %v685
    %792 = vst [vmem:[#allocation2 + $0x1f8] sm:$0xff] %v687
    %793 = vst [vmem:[#allocation2 + $0x200] sm:$0xff] %v352
    %794 = vst [vmem:[#allocation2 + $0x208] sm:$0xff] %v354
    %795 = vst [vmem:[#allocation2 + $0x210] sm:$0xff] %v465
    %796 = vst [vmem:[#allocation2 + $0x218] sm:$0xff] %v467
    %797 = vst [vmem:[#allocation2 + $0x220] sm:$0xff] %v578
    %798 = vst [vmem:[#allocation2 + $0x228] sm:$0xff] %v580
    %799 = vst [vmem:[#allocation2 + $0x230] sm:$0xff] %v691
    %800 = vst [vmem:[#allocation2 + $0x238] sm:$0xff] %v693
    %801 = vst [vmem:[#allocation2 + $0x240] sm:$0xff] %v356
    %802 = vst [vmem:[#allocation2 + $0x248] sm:$0xff] %v358
    %803 = vst [vmem:[#allocation2 + $0x250] sm:$0xff] %v469
    %804 = vst [vmem:[#allocation2 + $0x258] sm:$0xff] %v471
    %805 = vst [vmem:[#allocation2 + $0x260] sm:$0xff] %v582
    %806 = vst [vmem:[#allocation2 + $0x268] sm:$0xff] %v584
    %807 = vst [vmem:[#allocation2 + $0x270] sm:$0xff] %v695
    %808 = vst [vmem:[#allocation2 + $0x278] sm:$0xff] %v697
    %809 = vst [vmem:[#allocation2 + $0x280] sm:$0xff] %v362
    %810 = vst [vmem:[#allocation2 + $0x288] sm:$0xff] %v364
    %811 = vst [vmem:[#allocation2 + $0x290] sm:$0xff] %v475
    %812 = vst [vmem:[#allocation2 + $0x298] sm:$0xff] %v477
    %813 = vst [vmem:[#allocation2 + $0x2a0] sm:$0xff] %v588
    %814 = vst [vmem:[#allocation2 + $0x2a8] sm:$0xff] %v590
    %815 = vst [vmem:[#allocation2 + $0x2b0] sm:$0xff] %v701
    %816 = vst [vmem:[#allocation2 + $0x2b8] sm:$0xff] %v703
    %817 = vst [vmem:[#allocation2 + $0x2c0] sm:$0xff] %v366
    %818 = vst [vmem:[#allocation2 + $0x2c8] sm:$0xff] %v368
    %819 = vst [vmem:[#allocation2 + $0x2d0] sm:$0xff] %v479
    %820 = vst [vmem:[#allocation2 + $0x2d8] sm:$0xff] %v481
    %821 = vst [vmem:[#allocation2 + $0x2e0] sm:$0xff] %v592
    %822 = vst [vmem:[#allocation2 + $0x2e8] sm:$0xff] %v594
    %823 = vst [vmem:[#allocation2 + $0x2f0] sm:$0xff] %v705
    %824 = vst [vmem:[#allocation2 + $0x2f8] sm:$0xff] %v707
    %825 = vst [vmem:[#allocation2 + $0x300] sm:$0xff] %v372
    %826 = vst [vmem:[#allocation2 + $0x308] sm:$0xff] %v374
    %827 = vst [vmem:[#allocation2 + $0x310] sm:$0xff] %v485
    %828 = vst [vmem:[#allocation2 + $0x318] sm:$0xff] %v487
    %829 = vst [vmem:[#allocation2 + $0x320] sm:$0xff] %v598
    %830 = vst [vmem:[#allocation2 + $0x328] sm:$0xff] %v600
    %831 = vst [vmem:[#allocation2 + $0x330] sm:$0xff] %v711
    %832 = vst [vmem:[#allocation2 + $0x338] sm:$0xff] %v713
    %833 = vst [vmem:[#allocation2 + $0x340] sm:$0xff] %v376
    %834 = vst [vmem:[#allocation2 + $0x348] sm:$0xff] %v378
    %835 = vst [vmem:[#allocation2 + $0x350] sm:$0xff] %v489
    %836 = vst [vmem:[#allocation2 + $0x358] sm:$0xff] %v491
    %837 = vst [vmem:[#allocation2 + $0x360] sm:$0xff] %v602
    %838 = vst [vmem:[#allocation2 + $0x368] sm:$0xff] %v604
    %839 = vst [vmem:[#allocation2 + $0x370] sm:$0xff] %v715
    %840 = vst [vmem:[#allocation2 + $0x378] sm:$0xff] %v717
    %841 = vst [vmem:[#allocation2 + $0x380] sm:$0xff] %v382
    %842 = vst [vmem:[#allocation2 + $0x388] sm:$0xff] %v384
    %843 = vst [vmem:[#allocation2 + $0x390] sm:$0xff] %v495
    %844 = vst [vmem:[#allocation2 + $0x398] sm:$0xff] %v497
    %845 = vst [vmem:[#allocation2 + $0x3a0] sm:$0xff] %v608
    %846 = vst [vmem:[#allocation2 + $0x3a8] sm:$0xff] %v610
    %847 = vst [vmem:[#allocation2 + $0x3b0] sm:$0xff] %v721
    %848 = vst [vmem:[#allocation2 + $0x3b8] sm:$0xff] %v723
    %849 = vst [vmem:[#allocation2 + $0x3c0] sm:$0xff] %v386
    %850 = vst [vmem:[#allocation2 + $0x3c8] sm:$0xff] %v388
    %851 = vst [vmem:[#allocation2 + $0x3d0] sm:$0xff] %v499
    %852 = vst [vmem:[#allocation2 + $0x3d8] sm:$0xff] %v501
    %853 = vst [vmem:[#allocation2 + $0x3e0] sm:$0xff] %v612
    %854 = vst [vmem:[#allocation2 + $0x3e8] sm:$0xff] %v614
    %855 = vst [vmem:[#allocation2 + $0x3f0] sm:$0xff] %v725
    %856 = vst [vmem:[#allocation2 + $0x3f8] sm:$0xff] %v727
    %s857 = smul.u32 0, 8
    %s858 = smul.addr %s857, 8
    %s859 = scalar_lea.vmem [#allocation2], %s858
    %v860 = vld [vmem:[%s859] sm:$0xff]
    %v861 = vld [vmem:[%s859 + $0x8] sm:$0xff]
    %v862 = vld [vmem:[%s859 + $0x10] sm:$0xff]
    %v863 = vld [vmem:[%s859 + $0x18] sm:$0xff]
    %v864 = vld [vmem:[%s859 + $0x20] sm:$0xff]
    %v865 = vld [vmem:[%s859 + $0x28] sm:$0xff]
    %v866 = vld [vmem:[%s859 + $0x30] sm:$0xff]
    %v867 = vld [vmem:[%s859 + $0x38] sm:$0xff]
    %v868 = vld [vmem:[%s859 + $0x40] sm:$0xff]
    %v869 = vld [vmem:[%s859 + $0x48] sm:$0xff]
    %v870 = vld [vmem:[%s859 + $0x50] sm:$0xff]
    %v871 = vld [vmem:[%s859 + $0x58] sm:$0xff]
    %v872 = vld [vmem:[%s859 + $0x60] sm:$0xff]
    %v873 = vld [vmem:[%s859 + $0x68] sm:$0xff]
    %v874 = vld [vmem:[%s859 + $0x70] sm:$0xff]
    %v875 = vld [vmem:[%s859 + $0x78] sm:$0xff]
    %v876 = vld [vmem:[#allocation3] sm:$0xff]
    %v877 = vld [vmem:[#allocation3 + $0x8] sm:$0xff]
    %v878 = vld [vmem:[#allocation3 + $0x10] sm:$0xff]
    %v879 = vld [vmem:[#allocation3 + $0x20] sm:$0xff]
    %v880 = vld [vmem:[#allocation3 + $0x28] sm:$0xff]
    %v881 = vld [vmem:[#allocation3 + $0x30] sm:$0xff]
    %v882 = vld [vmem:[#allocation3 + $0x40] sm:$0xff]
    %v883 = vld [vmem:[#allocation3 + $0x48] sm:$0xff]
    %v884 = vld [vmem:[#allocation3 + $0x50] sm:$0xff]
    %v885 = vld [vmem:[#allocation3 + $0x60] sm:$0xff]
    %v886 = vld [vmem:[#allocation3 + $0x68] sm:$0xff]
    %v887 = vld [vmem:[#allocation3 + $0x70] sm:$0xff]
    %v888 = vld [vmem:[#allocation3 + $0x80] sm:$0xff]
    %v889 = vld [vmem:[#allocation3 + $0x88] sm:$0xff]
    %v890 = vld [vmem:[#allocation3 + $0x90] sm:$0xff]
    %v891 = vld [vmem:[#allocation3 + $0xa0] sm:$0xff]
    %v892 = vld [vmem:[#allocation3 + $0xa8] sm:$0xff]
    %v893 = vld [vmem:[#allocation3 + $0xb0] sm:$0xff]
    %v894 = vld [vmem:[#allocation3 + $0xc0] sm:$0xff]
    %v895 = vld [vmem:[#allocation3 + $0xc8] sm:$0xff]
    %v896 = vld [vmem:[#allocation3 + $0xd0] sm:$0xff]
    %v897 = vld [vmem:[#allocation3 + $0xe0] sm:$0xff]
    %v898 = vld [vmem:[#allocation3 + $0xe8] sm:$0xff]
    %v899 = vld [vmem:[#allocation3 + $0xf0] sm:$0xff]
    %v900 = vld [vmem:[#allocation3 + $0x100] sm:$0xff]
    %v901 = vld [vmem:[#allocation3 + $0x108] sm:$0xff]
    %v902 = vld [vmem:[#allocation3 + $0x110] sm:$0xff]
    %v903 = vld [vmem:[#allocation3 + $0x120] sm:$0xff]
    %v904 = vld [vmem:[#allocation3 + $0x128] sm:$0xff]
    %v905 = vld [vmem:[#allocation3 + $0x130] sm:$0xff]
    %v906 = vld [vmem:[#allocation3 + $0x140] sm:$0xff]
    %v907 = vld [vmem:[#allocation3 + $0x148] sm:$0xff]
    %v908 = vld [vmem:[#allocation3 + $0x150] sm:$0xff]
    %v909 = vld [vmem:[#allocation3 + $0x160] sm:$0xff]
    %v910 = vld [vmem:[#allocation3 + $0x168] sm:$0xff]
    %v911 = vld [vmem:[#allocation3 + $0x170] sm:$0xff]
    %v912 = vld [vmem:[#allocation3 + $0x180] sm:$0xff]
    %v913 = vld [vmem:[#allocation3 + $0x188] sm:$0xff]
    %v914 = vld [vmem:[#allocation3 + $0x190] sm:$0xff]
    %v915 = vld [vmem:[#allocation3 + $0x1a0] sm:$0xff]
    %v916 = vld [vmem:[#allocation3 + $0x1a8] sm:$0xff]
    %v917 = vld [vmem:[#allocation3 + $0x1b0] sm:$0xff]
    %v918 = vld [vmem:[#allocation3 + $0x1c0] sm:$0xff]
    %v919 = vld [vmem:[#allocation3 + $0x1c8] sm:$0xff]
    %v920 = vld [vmem:[#allocation3 + $0x1d0] sm:$0xff]
    %v921 = vld [vmem:[#allocation3 + $0x1e0] sm:$0xff]
    %v922 = vld [vmem:[#allocation3 + $0x1e8] sm:$0xff]
    %v923 = vld [vmem:[#allocation3 + $0x1f0] sm:$0xff]
    %v924 = vld [vmem:[#allocation3 + $0x200] sm:$0xff]
    %v925 = vld [vmem:[#allocation3 + $0x208] sm:$0xff]
    %v926 = vld [vmem:[#allocation3 + $0x210] sm:$0xff]
    %v927 = vld [vmem:[#allocation3 + $0x220] sm:$0xff]
    %v928 = vld [vmem:[#allocation3 + $0x228] sm:$0xff]
    %v929 = vld [vmem:[#allocation3 + $0x230] sm:$0xff]
    %v930 = vld [vmem:[#allocation3 + $0x240] sm:$0xff]
    %v931 = vld [vmem:[#allocation3 + $0x248] sm:$0xff]
    %v932 = vld [vmem:[#allocation3 + $0x250] sm:$0xff]
    %v933 = vld [vmem:[#allocation3 + $0x260] sm:$0xff]
    %v934 = vld [vmem:[#allocation3 + $0x268] sm:$0xff]
    %v935 = vld [vmem:[#allocation3 + $0x270] sm:$0xff]
    %v936 = vld [vmem:[#allocation3 + $0x280] sm:$0xff]
    %v937 = vld [vmem:[#allocation3 + $0x288] sm:$0xff]
    %v938 = vld [vmem:[#allocation3 + $0x290] sm:$0xff]
    %v939 = vld [vmem:[#allocation3 + $0x2a0] sm:$0xff]
    %v940 = vld [vmem:[#allocation3 + $0x2a8] sm:$0xff]
    %v941 = vld [vmem:[#allocation3 + $0x2b0] sm:$0xff]
    %v942 = vld [vmem:[#allocation3 + $0x2c0] sm:$0xff]
    %v943 = vld [vmem:[#allocation3 + $0x2c8] sm:$0xff]
    %v944 = vld [vmem:[#allocation3 + $0x2d0] sm:$0xff]
    %v945 = vld [vmem:[#allocation3 + $0x2e0] sm:$0xff]
    %v946 = vld [vmem:[#allocation3 + $0x2e8] sm:$0xff]
    %v947 = vld [vmem:[#allocation3 + $0x2f0] sm:$0xff]
    %v948 = vld [vmem:[#allocation3 + $0x300] sm:$0xff]
    %v949 = vld [vmem:[#allocation3 + $0x308] sm:$0xff]
    %v950 = vld [vmem:[#allocation3 + $0x310] sm:$0xff]
    %v951 = vld [vmem:[#allocation3 + $0x320] sm:$0xff]
    %v952 = vld [vmem:[#allocation3 + $0x328] sm:$0xff]
    %v953 = vld [vmem:[#allocation3 + $0x330] sm:$0xff]
    %v954 = vld [vmem:[#allocation3 + $0x340] sm:$0xff]
    %v955 = vld [vmem:[#allocation3 + $0x348] sm:$0xff]
    %v956 = vld [vmem:[#allocation3 + $0x350] sm:$0xff]
    %v957 = vld [vmem:[#allocation3 + $0x360] sm:$0xff]
    %v958 = vld [vmem:[#allocation3 + $0x368] sm:$0xff]
    %v959 = vld [vmem:[#allocation3 + $0x370] sm:$0xff]
    %v960 = vld [vmem:[#allocation3 + $0x380] sm:$0xff]
    %v961 = vld [vmem:[#allocation3 + $0x388] sm:$0xff]
    %v962 = vld [vmem:[#allocation3 + $0x390] sm:$0xff]
    %v963 = vld [vmem:[#allocation3 + $0x3a0] sm:$0xff]
    %v964 = vld [vmem:[#allocation3 + $0x3a8] sm:$0xff]
    %v965 = vld [vmem:[#allocation3 + $0x3b0] sm:$0xff]
    %v966 = vld [vmem:[#allocation3 + $0x3c0] sm:$0xff]
    %v967 = vld [vmem:[#allocation3 + $0x3c8] sm:$0xff]
    %v968 = vld [vmem:[#allocation3 + $0x3d0] sm:$0xff]
    %v969 = vld [vmem:[#allocation3 + $0x3e0] sm:$0xff]
    %v970 = vld [vmem:[#allocation3 + $0x3e8] sm:$0xff]
    %v971 = vld [vmem:[#allocation3 + $0x3f0] sm:$0xff]
    %v1068 = vunpack.c.l.b16 %v876
    %v1069 = vunpack.c.h.b16 %v876
    %v1070 = vunpack.c.l.b16 %v877
    %v1071 = vunpack.c.h.b16 %v877
    %v1072 = vunpack.c.l.b16 %v878
    %v1073 = vunpack.c.h.b16 %v878
    %v1074 = vunpack.c.l.b16 %v879
    %v1075 = vunpack.c.h.b16 %v879
    %v1076 = vunpack.c.l.b16 %v880
    %v1077 = vunpack.c.h.b16 %v880
    %v1078 = vunpack.c.l.b16 %v881
    %v1079 = vunpack.c.h.b16 %v881
    %v1080 = vunpack.c.l.b16 %v882
    %v1081 = vunpack.c.h.b16 %v882
    %v1082 = vunpack.c.l.b16 %v883
    %v1083 = vunpack.c.h.b16 %v883
    %v1084 = vunpack.c.l.b16 %v884
    %v1085 = vunpack.c.h.b16 %v884
    %v1086 = vunpack.c.l.b16 %v885
    %v1087 = vunpack.c.h.b16 %v885
    %v1088 = vunpack.c.l.b16 %v886
    %v1089 = vunpack.c.h.b16 %v886
    %v1090 = vunpack.c.l.b16 %v887
    %v1091 = vunpack.c.h.b16 %v887
    %v1092 = vunpack.c.l.b16 %v888
    %v1093 = vunpack.c.h.b16 %v888
    %v1094 = vunpack.c.l.b16 %v889
    %v1095 = vunpack.c.h.b16 %v889
    %v1096 = vunpack.c.l.b16 %v890
    %v1097 = vunpack.c.h.b16 %v890
    %v1098 = vunpack.c.l.b16 %v891
    %v1099 = vunpack.c.h.b16 %v891
    %v1100 = vunpack.c.l.b16 %v892
    %v1101 = vunpack.c.h.b16 %v892
    %v1102 = vunpack.c.l.b16 %v893
    %v1103 = vunpack.c.h.b16 %v893
    %v1104 = vunpack.c.l.b16 %v894
    %v1105 = vunpack.c.h.b16 %v894
    %v1106 = vunpack.c.l.b16 %v895
    %v1107 = vunpack.c.h.b16 %v895
    %v1108 = vunpack.c.l.b16 %v896
    %v1109 = vunpack.c.h.b16 %v896
    %v1110 = vunpack.c.l.b16 %v897
    %v1111 = vunpack.c.h.b16 %v897
    %v1112 = vunpack.c.l.b16 %v898
    %v1113 = vunpack.c.h.b16 %v898
    %v1114 = vunpack.c.l.b16 %v899
    %v1115 = vunpack.c.h.b16 %v899
    %v1116 = vunpack.c.l.b16 %v900
    %v1117 = vunpack.c.h.b16 %v900
    %v1118 = vunpack.c.l.b16 %v901
    %v1119 = vunpack.c.h.b16 %v901
    %v1120 = vunpack.c.l.b16 %v902
    %v1121 = vunpack.c.h.b16 %v902
    %v1122 = vunpack.c.l.b16 %v903
    %v1123 = vunpack.c.h.b16 %v903
    %v1124 = vunpack.c.l.b16 %v904
    %v1125 = vunpack.c.h.b16 %v904
    %v1126 = vunpack.c.l.b16 %v905
    %v1127 = vunpack.c.h.b16 %v905
    %v1128 = vunpack.c.l.b16 %v906
    %v1129 = vunpack.c.h.b16 %v906
    %v1130 = vunpack.c.l.b16 %v907
    %v1131 = vunpack.c.h.b16 %v907
    %v1132 = vunpack.c.l.b16 %v908
    %v1133 = vunpack.c.h.b16 %v908
    %v1134 = vunpack.c.l.b16 %v909
    %v1135 = vunpack.c.h.b16 %v909
    %v1136 = vunpack.c.l.b16 %v910
    %v1137 = vunpack.c.h.b16 %v910
    %v1138 = vunpack.c.l.b16 %v911
    %v1139 = vunpack.c.h.b16 %v911
    %v1140 = vunpack.c.l.b16 %v912
    %v1141 = vunpack.c.h.b16 %v912
    %v1142 = vunpack.c.l.b16 %v913
    %v1143 = vunpack.c.h.b16 %v913
    %v1144 = vunpack.c.l.b16 %v914
    %v1145 = vunpack.c.h.b16 %v914
    %v1146 = vunpack.c.l.b16 %v915
    %v1147 = vunpack.c.h.b16 %v915
    %v1148 = vunpack.c.l.b16 %v916
    %v1149 = vunpack.c.h.b16 %v916
    %v1150 = vunpack.c.l.b16 %v917
    %v1151 = vunpack.c.h.b16 %v917
    %v1152 = vunpack.c.l.b16 %v918
    %v1153 = vunpack.c.h.b16 %v918
    %v1154 = vunpack.c.l.b16 %v919
    %v1155 = vunpack.c.h.b16 %v919
    %v1156 = vunpack.c.l.b16 %v920
    %v1157 = vunpack.c.h.b16 %v920
    %v1158 = vunpack.c.l.b16 %v921
    %v1159 = vunpack.c.h.b16 %v921
    %v1160 = vunpack.c.l.b16 %v922
    %v1161 = vunpack.c.h.b16 %v922
    %v1162 = vunpack.c.l.b16 %v923
    %v1163 = vunpack.c.h.b16 %v923
    %v1164 = vunpack.c.l.b16 %v924
    %v1165 = vunpack.c.h.b16 %v924
    %v1166 = vunpack.c.l.b16 %v925
    %v1167 = vunpack.c.h.b16 %v925
    %v1168 = vunpack.c.l.b16 %v926
    %v1169 = vunpack.c.h.b16 %v926
    %v1170 = vunpack.c.l.b16 %v927
    %v1171 = vunpack.c.h.b16 %v927
    %v1172 = vunpack.c.l.b16 %v928
    %v1173 = vunpack.c.h.b16 %v928
    %v1174 = vunpack.c.l.b16 %v929
    %v1175 = vunpack.c.h.b16 %v929
    %v1176 = vunpack.c.l.b16 %v930
    %v1177 = vunpack.c.h.b16 %v930
    %v1178 = vunpack.c.l.b16 %v931
    %v1179 = vunpack.c.h.b16 %v931
    %v1180 = vunpack.c.l.b16 %v932
    %v1181 = vunpack.c.h.b16 %v932
    %v1182 = vunpack.c.l.b16 %v933
    %v1183 = vunpack.c.h.b16 %v933
    %v1184 = vunpack.c.l.b16 %v934
    %v1185 = vunpack.c.h.b16 %v934
    %v1186 = vunpack.c.l.b16 %v935
    %v1187 = vunpack.c.h.b16 %v935
    %v1188 = vunpack.c.l.b16 %v936
    %v1189 = vunpack.c.h.b16 %v936
    %v1190 = vunpack.c.l.b16 %v937
    %v1191 = vunpack.c.h.b16 %v937
    %v1192 = vunpack.c.l.b16 %v938
    %v1193 = vunpack.c.h.b16 %v938
    %v1194 = vunpack.c.l.b16 %v939
    %v1195 = vunpack.c.h.b16 %v939
    %v1196 = vunpack.c.l.b16 %v940
    %v1197 = vunpack.c.h.b16 %v940
    %v1198 = vunpack.c.l.b16 %v941
    %v1199 = vunpack.c.h.b16 %v941
    %v1200 = vunpack.c.l.b16 %v942
    %v1201 = vunpack.c.h.b16 %v942
    %v1202 = vunpack.c.l.b16 %v943
    %v1203 = vunpack.c.h.b16 %v943
    %v1204 = vunpack.c.l.b16 %v944
    %v1205 = vunpack.c.h.b16 %v944
    %v1206 = vunpack.c.l.b16 %v945
    %v1207 = vunpack.c.h.b16 %v945
    %v1208 = vunpack.c.l.b16 %v946
    %v1209 = vunpack.c.h.b16 %v946
    %v1210 = vunpack.c.l.b16 %v947
    %v1211 = vunpack.c.h.b16 %v947
    %v1212 = vunpack.c.l.b16 %v948
    %v1213 = vunpack.c.h.b16 %v948
    %v1214 = vunpack.c.l.b16 %v949
    %v1215 = vunpack.c.h.b16 %v949
    %v1216 = vunpack.c.l.b16 %v950
    %v1217 = vunpack.c.h.b16 %v950
    %v1218 = vunpack.c.l.b16 %v951
    %v1219 = vunpack.c.h.b16 %v951
    %v1220 = vunpack.c.l.b16 %v952
    %v1221 = vunpack.c.h.b16 %v952
    %v1222 = vunpack.c.l.b16 %v953
    %v1223 = vunpack.c.h.b16 %v953
    %v1224 = vunpack.c.l.b16 %v954
    %v1225 = vunpack.c.h.b16 %v954
    %v1226 = vunpack.c.l.b16 %v955
    %v1227 = vunpack.c.h.b16 %v955
    %v1228 = vunpack.c.l.b16 %v956
    %v1229 = vunpack.c.h.b16 %v956
    %v1230 = vunpack.c.l.b16 %v957
    %v1231 = vunpack.c.h.b16 %v957
    %v1232 = vunpack.c.l.b16 %v958
    %v1233 = vunpack.c.h.b16 %v958
    %v1234 = vunpack.c.l.b16 %v959
    %v1235 = vunpack.c.h.b16 %v959
    %v1236 = vunpack.c.l.b16 %v960
    %v1237 = vunpack.c.h.b16 %v960
    %v1238 = vunpack.c.l.b16 %v961
    %v1239 = vunpack.c.h.b16 %v961
    %v1240 = vunpack.c.l.b16 %v962
    %v1241 = vunpack.c.h.b16 %v962
    %v1242 = vunpack.c.l.b16 %v963
    %v1243 = vunpack.c.h.b16 %v963
    %v1244 = vunpack.c.l.b16 %v964
    %v1245 = vunpack.c.h.b16 %v964
    %v1246 = vunpack.c.l.b16 %v965
    %v1247 = vunpack.c.h.b16 %v965
    %v1248 = vunpack.c.l.b16 %v966
    %v1249 = vunpack.c.h.b16 %v966
    %v1250 = vunpack.c.l.b16 %v967
    %v1251 = vunpack.c.h.b16 %v967
    %v1252 = vunpack.c.l.b16 %v968
    %v1253 = vunpack.c.h.b16 %v968
    %v1254 = vunpack.c.l.b16 %v969
    %v1255 = vunpack.c.h.b16 %v969
    %v1256 = vunpack.c.l.b16 %v970
    %v1257 = vunpack.c.h.b16 %v970
    %v1258 = vunpack.c.l.b16 %v971
    %v1259 = vunpack.c.h.b16 %v971
    %v1260 = vpack.c.b16 %v1074, %v1068
    %v1261 = vpack.c.b16 %v1075, %v1069
    %v1262 = vpack.c.b16 %v1076, %v1070
    %v1263 = vpack.c.b16 %v1077, %v1071
    %v1264 = vpack.c.b16 %v1078, %v1072
    %v1265 = vpack.c.b16 %v1079, %v1073
    %v1266 = vpack.c.b16 %v1086, %v1080
    %v1267 = vpack.c.b16 %v1087, %v1081
    %v1268 = vpack.c.b16 %v1088, %v1082
    %v1269 = vpack.c.b16 %v1089, %v1083
    %v1270 = vpack.c.b16 %v1090, %v1084
    %v1271 = vpack.c.b16 %v1091, %v1085
    %v1272 = vpack.c.b16 %v1098, %v1092
    %v1273 = vpack.c.b16 %v1099, %v1093
    %v1274 = vpack.c.b16 %v1100, %v1094
    %v1275 = vpack.c.b16 %v1101, %v1095
    %v1276 = vpack.c.b16 %v1102, %v1096
    %v1277 = vpack.c.b16 %v1103, %v1097
    %v1278 = vpack.c.b16 %v1110, %v1104
    %v1279 = vpack.c.b16 %v1111, %v1105
    %v1280 = vpack.c.b16 %v1112, %v1106
    %v1281 = vpack.c.b16 %v1113, %v1107
    %v1282 = vpack.c.b16 %v1114, %v1108
    %v1283 = vpack.c.b16 %v1115, %v1109
    %v1284 = vpack.c.b16 %v1122, %v1116
    %v1285 = vpack.c.b16 %v1123, %v1117
    %v1286 = vpack.c.b16 %v1124, %v1118
    %v1287 = vpack.c.b16 %v1125, %v1119
    %v1288 = vpack.c.b16 %v1126, %v1120
    %v1289 = vpack.c.b16 %v1127, %v1121
    %v1290 = vpack.c.b16 %v1134, %v1128
    %v1291 = vpack.c.b16 %v1135, %v1129
    %v1292 = vpack.c.b16 %v1136, %v1130
    %v1293 = vpack.c.b16 %v1137, %v1131
    %v1294 = vpack.c.b16 %v1138, %v1132
    %v1295 = vpack.c.b16 %v1139, %v1133
    %v1296 = vpack.c.b16 %v1146, %v1140
    %v1297 = vpack.c.b16 %v1147, %v1141
    %v1298 = vpack.c.b16 %v1148, %v1142
    %v1299 = vpack.c.b16 %v1149, %v1143
    %v1300 = vpack.c.b16 %v1150, %v1144
    %v1301 = vpack.c.b16 %v1151, %v1145
    %v1302 = vpack.c.b16 %v1158, %v1152
    %v1303 = vpack.c.b16 %v1159, %v1153
    %v1304 = vpack.c.b16 %v1160, %v1154
    %v1305 = vpack.c.b16 %v1161, %v1155
    %v1306 = vpack.c.b16 %v1162, %v1156
    %v1307 = vpack.c.b16 %v1163, %v1157
    %v1308 = vpack.c.b16 %v1170, %v1164
    %v1309 = vpack.c.b16 %v1171, %v1165
    %v1310 = vpack.c.b16 %v1172, %v1166
    %v1311 = vpack.c.b16 %v1173, %v1167
    %v1312 = vpack.c.b16 %v1174, %v1168
    %v1313 = vpack.c.b16 %v1175, %v1169
    %v1314 = vpack.c.b16 %v1182, %v1176
    %v1315 = vpack.c.b16 %v1183, %v1177
    %v1316 = vpack.c.b16 %v1184, %v1178
    %v1317 = vpack.c.b16 %v1185, %v1179
    %v1318 = vpack.c.b16 %v1186, %v1180
    %v1319 = vpack.c.b16 %v1187, %v1181
    %v1320 = vpack.c.b16 %v1194, %v1188
    %v1321 = vpack.c.b16 %v1195, %v1189
    %v1322 = vpack.c.b16 %v1196, %v1190
    %v1323 = vpack.c.b16 %v1197, %v1191
    %v1324 = vpack.c.b16 %v1198, %v1192
    %v1325 = vpack.c.b16 %v1199, %v1193
    %v1326 = vpack.c.b16 %v1206, %v1200
    %v1327 = vpack.c.b16 %v1207, %v1201
    %v1328 = vpack.c.b16 %v1208, %v1202
    %v1329 = vpack.c.b16 %v1209, %v1203
    %v1330 = vpack.c.b16 %v1210, %v1204
    %v1331 = vpack.c.b16 %v1211, %v1205
    %v1332 = vpack.c.b16 %v1218, %v1212
    %v1333 = vpack.c.b16 %v1219, %v1213
    %v1334 = vpack.c.b16 %v1220, %v1214
    %v1335 = vpack.c.b16 %v1221, %v1215
    %v1336 = vpack.c.b16 %v1222, %v1216
    %v1337 = vpack.c.b16 %v1223, %v1217
    %v1338 = vpack.c.b16 %v1230, %v1224
    %v1339 = vpack.c.b16 %v1231, %v1225
    %v1340 = vpack.c.b16 %v1232, %v1226
    %v1341 = vpack.c.b16 %v1233, %v1227
    %v1342 = vpack.c.b16 %v1234, %v1228
    %v1343 = vpack.c.b16 %v1235, %v1229
    %v1344 = vpack.c.b16 %v1242, %v1236
    %v1345 = vpack.c.b16 %v1243, %v1237
    %v1346 = vpack.c.b16 %v1244, %v1238
    %v1347 = vpack.c.b16 %v1245, %v1239
    %v1348 = vpack.c.b16 %v1246, %v1240
    %v1349 = vpack.c.b16 %v1247, %v1241
    %v1350 = vpack.c.b16 %v1254, %v1248
    %v1351 = vpack.c.b16 %v1255, %v1249
    %v1352 = vpack.c.b16 %v1256, %v1250
    %v1353 = vpack.c.b16 %v1257, %v1251
    %v1354 = vpack.c.b16 %v1258, %v1252
    %v1355 = vpack.c.b16 %v1259, %v1253
    %1452 = vmatprep.subr.bf16.mxu0 %v1261
    %1453 = vmatpush1.bf16.msra.mxu0 %v1260
    %1454 = vmatprep.subr.bf16.mxu0 %v1267
    %1455 = vmatpush1.bf16.msra.mxu0 %v1266
    %1456 = vmatprep.subr.bf16.mxu0 %v1273
    %1457 = vmatpush1.bf16.msra.mxu0 %v1272
    %1458 = vmatprep.subr.bf16.mxu0 %v1279
    %1459 = vmatpush1.bf16.msra.mxu0 %v1278
    %1460 = vmatprep.subr.bf16.mxu0 %v1285
    %1461 = vmatpush1.bf16.msra.mxu0 %v1284
    %1462 = vmatprep.subr.bf16.mxu0 %v1291
    %1463 = vmatpush1.bf16.msra.mxu0 %v1290
    %1464 = vmatprep.subr.bf16.mxu0 %v1297
    %1465 = vmatpush1.bf16.msra.mxu0 %v1296
    %1466 = vmatprep.subr.bf16.mxu0 %v1303
    %1467 = vmatpush1.bf16.msra.mxu0 %v1302
    %1468 = vmatprep.subr.bf16.mxu0 %v1309
    %1469 = vmatpush1.bf16.msra.mxu0 %v1308
    %1470 = vmatprep.subr.bf16.mxu0 %v1315
    %1471 = vmatpush1.bf16.msra.mxu0 %v1314
    %1472 = vmatprep.subr.bf16.mxu0 %v1321
    %1473 = vmatpush1.bf16.msra.mxu0 %v1320
    %1474 = vmatprep.subr.bf16.mxu0 %v1327
    %1475 = vmatpush1.bf16.msra.mxu0 %v1326
    %1476 = vmatprep.subr.bf16.mxu0 %v1333
    %1477 = vmatpush1.bf16.msra.mxu0 %v1332
    %1478 = vmatprep.subr.bf16.mxu0 %v1339
    %1479 = vmatpush1.bf16.msra.mxu0 %v1338
    %1480 = vmatprep.subr.bf16.mxu0 %v1345
    %1481 = vmatpush1.bf16.msra.mxu0 %v1344
    %1482 = vmatprep.subr.bf16.mxu0 %v1351
    %1483 = vmatpush1.bf16.msra.mxu0 %v1350
    %1484 = vmatprep.mubr.bf16.mxu0 0
    %1485 = vmatmul.mubr.bf16.gmra.mrb[0].mxu0 0
    %v1486 = vpop.f32.mrb[0].mxu0
    %v1487 = vadd.f32 0.0, %v1486
    %v1488 = vpop.f32.mrb[0].mxu0
    %v1489 = vadd.f32 0.0, %v1488
    %v1490 = vpop.f32.mrb[0].mxu0
    %v1491 = vadd.f32 0.0, %v1490
    %v1492 = vpop.f32.mrb[0].mxu0
    %v1493 = vadd.f32 0.0, %v1492
    %1494 = vdwg.mxu0
    %1495 = vmatprep.subr.bf16.mxu0 %v1263
    %1496 = vmatpush1.bf16.msra.mxu0 %v1262
    %1497 = vmatprep.subr.bf16.mxu0 %v1269
    %1498 = vmatpush1.bf16.msra.mxu0 %v1268
    %1499 = vmatprep.subr.bf16.mxu0 %v1275
    %1500 = vmatpush1.bf16.msra.mxu0 %v1274
    %1501 = vmatprep.subr.bf16.mxu0 %v1281
    %1502 = vmatpush1.bf16.msra.mxu0 %v1280
    %1503 = vmatprep.subr.bf16.mxu0 %v1287
    %1504 = vmatpush1.bf16.msra.mxu0 %v1286
    %1505 = vmatprep.subr.bf16.mxu0 %v1293
    %1506 = vmatpush1.bf16.msra.mxu0 %v1292
    %1507 = vmatprep.subr.bf16.mxu0 %v1299
    %1508 = vmatpush1.bf16.msra.mxu0 %v1298
    %1509 = vmatprep.subr.bf16.mxu0 %v1305
    %1510 = vmatpush1.bf16.msra.mxu0 %v1304
    %1511 = vmatprep.subr.bf16.mxu0 %v1311
    %1512 = vmatpush1.bf16.msra.mxu0 %v1310
    %1513 = vmatprep.subr.bf16.mxu0 %v1317
    %1514 = vmatpush1.bf16.msra.mxu0 %v1316
    %1515 = vmatprep.subr.bf16.mxu0 %v1323
    %1516 = vmatpush1.bf16.msra.mxu0 %v1322
    %1517 = vmatprep.subr.bf16.mxu0 %v1329
    %1518 = vmatpush1.bf16.msra.mxu0 %v1328
    %1519 = vmatprep.subr.bf16.mxu0 %v1335
    %1520 = vmatpush1.bf16.msra.mxu0 %v1334
    %1521 = vmatprep.subr.bf16.mxu0 %v1341
    %1522 = vmatpush1.bf16.msra.mxu0 %v1340
    %1523 = vmatprep.subr.bf16.mxu0 %v1347
    %1524 = vmatpush1.bf16.msra.mxu0 %v1346
    %1525 = vmatprep.subr.bf16.mxu0 %v1353
    %1526 = vmatpush1.bf16.msra.mxu0 %v1352
    %1527 = vmatprep.mubr.bf16.mxu0 0
    %1528 = vmatmul.mubr.bf16.gmra.mrb[0].mxu0 0
    %v1529 = vpop.f32.mrb[0].mxu0
    %v1530 = vadd.f32 0.0, %v1529
    %v1531 = vpop.f32.mrb[0].mxu0
    %v1532 = vadd.f32 0.0, %v1531
    %v1533 = vpop.f32.mrb[0].mxu0
    %v1534 = vadd.f32 0.0, %v1533
    %v1535 = vpop.f32.mrb[0].mxu0
    %v1536 = vadd.f32 0.0, %v1535
    %1537 = vdwg.mxu0
    %1538 = vmatprep.subr.bf16.mxu0 %v1265
    %1539 = vmatpush1.bf16.msra.mxu0 %v1264
    %1540 = vmatprep.subr.bf16.mxu0 %v1271
    %1541 = vmatpush1.bf16.msra.mxu0 %v1270
    %1542 = vmatprep.subr.bf16.mxu0 %v1277
    %1543 = vmatpush1.bf16.msra.mxu0 %v1276
    %1544 = vmatprep.subr.bf16.mxu0 %v1283
    %1545 = vmatpush1.bf16.msra.mxu0 %v1282
    %1546 = vmatprep.subr.bf16.mxu0 %v1289
    %1547 = vmatpush1.bf16.msra.mxu0 %v1288
    %1548 = vmatprep.subr.bf16.mxu0 %v1295
    %1549 = vmatpush1.bf16.msra.mxu0 %v1294
    %1550 = vmatprep.subr.bf16.mxu0 %v1301
    %1551 = vmatpush1.bf16.msra.mxu0 %v1300
    %1552 = vmatprep.subr.bf16.mxu0 %v1307
    %1553 = vmatpush1.bf16.msra.mxu0 %v1306
    %1554 = vmatprep.subr.bf16.mxu0 %v1313
    %1555 = vmatpush1.bf16.msra.mxu0 %v1312
    %1556 = vmatprep.subr.bf16.mxu0 %v1319
    %1557 = vmatpush1.bf16.msra.mxu0 %v1318
    %1558 = vmatprep.subr.bf16.mxu0 %v1325
    %1559 = vmatpush1.bf16.msra.mxu0 %v1324
    %1560 = vmatprep.subr.bf16.mxu0 %v1331
    %1561 = vmatpush1.bf16.msra.mxu0 %v1330
    %1562 = vmatprep.subr.bf16.mxu0 %v1337
    %1563 = vmatpush1.bf16.msra.mxu0 %v1336
    %1564 = vmatprep.subr.bf16.mxu0 %v1343
    %1565 = vmatpush1.bf16.msra.mxu0 %v1342
    %1566 = vmatprep.subr.bf16.mxu0 %v1349
    %1567 = vmatpush1.bf16.msra.mxu0 %v1348
    %1568 = vmatprep.subr.bf16.mxu0 %v1355
    %1569 = vmatpush1.bf16.msra.mxu0 %v1354
    %1570 = vmatprep.mubr.bf16.mxu0 0
    %1571 = vmatmul.mubr.bf16.gmra.mrb[0].mxu0 0
    %v1572 = vpop.f32.mrb[0].mxu0
    %v1573 = vadd.f32 0.0, %v1572
    %v1574 = vpop.f32.mrb[0].mxu0
    %v1575 = vadd.f32 0.0, %v1574
    %v1576 = vpop.f32.mrb[0].mxu0
    %v1577 = vadd.f32 0.0, %v1576
    %v1578 = vpop.f32.mrb[0].mxu0
    %v1579 = vadd.f32 0.0, %v1578
    %1580 = vdwg.mxu0
    %v1581 = vadd.f32 %v860, %v1487
    %v1582 = vadd.f32 %v861, %v1489
    %v1583 = vadd.f32 %v862, %v1530
    %v1584 = vadd.f32 %v863, %v1532
    %v1585 = vadd.f32 %v864, %v1573
    %v1586 = vadd.f32 %v865, %v1575
    %v1587 = vadd.f32 %v868, %v1491
    %v1588 = vadd.f32 %v869, %v1493
    %v1589 = vadd.f32 %v870, %v1534
    %v1590 = vadd.f32 %v871, %v1536
    %v1591 = vadd.f32 %v872, %v1577
    %v1592 = vadd.f32 %v873, %v1579
    %v1593 = vld [vmem:[#allocation3 + $0x18] sm:$0xff]
    %v1594 = vld [vmem:[#allocation3 + $0x38] sm:$0xff]
    %v1595 = vld [vmem:[#allocation3 + $0x58] sm:$0xff]
    %v1596 = vld [vmem:[#allocation3 + $0x78] sm:$0xff]
    %v1597 = vld [vmem:[#allocation3 + $0x98] sm:$0xff]
    %v1598 = vld [vmem:[#allocation3 + $0xb8] sm:$0xff]
    %v1599 = vld [vmem:[#allocation3 + $0xd8] sm:$0xff]
    %v1600 = vld [vmem:[#allocation3 + $0xf8] sm:$0xff]
    %v1601 = vld [vmem:[#allocation3 + $0x118] sm:$0xff]
    %v1602 = vld [vmem:[#allocation3 + $0x138] sm:$0xff]
    %v1603 = vld [vmem:[#allocation3 + $0x158] sm:$0xff]
    %v1604 = vld [vmem:[#allocation3 + $0x178] sm:$0xff]
    %v1605 = vld [vmem:[#allocation3 + $0x198] sm:$0xff]
    %v1606 = vld [vmem:[#allocation3 + $0x1b8] sm:$0xff]
    %v1607 = vld [vmem:[#allocation3 + $0x1d8] sm:$0xff]
    %v1608 = vld [vmem:[#allocation3 + $0x1f8] sm:$0xff]
    %v1609 = vld [vmem:[#allocation3 + $0x218] sm:$0xff]
    %v1610 = vld [vmem:[#allocation3 + $0x238] sm:$0xff]
    %v1611 = vld [vmem:[#allocation3 + $0x258] sm:$0xff]
    %v1612 = vld [vmem:[#allocation3 + $0x278] sm:$0xff]
    %v1613 = vld [vmem:[#allocation3 + $0x298] sm:$0xff]
    %v1614 = vld [vmem:[#allocation3 + $0x2b8] sm:$0xff]
    %v1615 = vld [vmem:[#allocation3 + $0x2d8] sm:$0xff]
    %v1616 = vld [vmem:[#allocation3 + $0x2f8] sm:$0xff]
    %v1617 = vld [vmem:[#allocation3 + $0x318] sm:$0xff]
    %v1618 = vld [vmem:[#allocation3 + $0x338] sm:$0xff]
    %v1619 = vld [vmem:[#allocation3 + $0x358] sm:$0xff]
    %v1620 = vld [vmem:[#allocation3 + $0x378] sm:$0xff]
    %v1621 = vld [vmem:[#allocation3 + $0x398] sm:$0xff]
    %v1622 = vld [vmem:[#allocation3 + $0x3b8] sm:$0xff]
    %v1623 = vld [vmem:[#allocation3 + $0x3d8] sm:$0xff]
    %v1624 = vld [vmem:[#allocation3 + $0x3f8] sm:$0xff]
    %v1657 = vunpack.c.l.b16 %v1593
    %v1658 = vunpack.c.h.b16 %v1593
    %v1659 = vunpack.c.l.b16 %v1594
    %v1660 = vunpack.c.h.b16 %v1594
    %v1661 = vunpack.c.l.b16 %v1595
    %v1662 = vunpack.c.h.b16 %v1595
    %v1663 = vunpack.c.l.b16 %v1596
    %v1664 = vunpack.c.h.b16 %v1596
    %v1665 = vunpack.c.l.b16 %v1597
    %v1666 = vunpack.c.h.b16 %v1597
    %v1667 = vunpack.c.l.b16 %v1598
    %v1668 = vunpack.c.h.b16 %v1598
    %v1669 = vunpack.c.l.b16 %v1599
    %v1670 = vunpack.c.h.b16 %v1599
    %v1671 = vunpack.c.l.b16 %v1600
    %v1672 = vunpack.c.h.b16 %v1600
    %v1673 = vunpack.c.l.b16 %v1601
    %v1674 = vunpack.c.h.b16 %v1601
    %v1675 = vunpack.c.l.b16 %v1602
    %v1676 = vunpack.c.h.b16 %v1602
    %v1677 = vunpack.c.l.b16 %v1603
    %v1678 = vunpack.c.h.b16 %v1603
    %v1679 = vunpack.c.l.b16 %v1604
    %v1680 = vunpack.c.h.b16 %v1604
    %v1681 = vunpack.c.l.b16 %v1605
    %v1682 = vunpack.c.h.b16 %v1605
    %v1683 = vunpack.c.l.b16 %v1606
    %v1684 = vunpack.c.h.b16 %v1606
    %v1685 = vunpack.c.l.b16 %v1607
    %v1686 = vunpack.c.h.b16 %v1607
    %v1687 = vunpack.c.l.b16 %v1608
    %v1688 = vunpack.c.h.b16 %v1608
    %v1689 = vunpack.c.l.b16 %v1609
    %v1690 = vunpack.c.h.b16 %v1609
    %v1691 = vunpack.c.l.b16 %v1610
    %v1692 = vunpack.c.h.b16 %v1610
    %v1693 = vunpack.c.l.b16 %v1611
    %v1694 = vunpack.c.h.b16 %v1611
    %v1695 = vunpack.c.l.b16 %v1612
    %v1696 = vunpack.c.h.b16 %v1612
    %v1697 = vunpack.c.l.b16 %v1613
    %v1698 = vunpack.c.h.b16 %v1613
    %v1699 = vunpack.c.l.b16 %v1614
    %v1700 = vunpack.c.h.b16 %v1614
    %v1701 = vunpack.c.l.b16 %v1615
    %v1702 = vunpack.c.h.b16 %v1615
    %v1703 = vunpack.c.l.b16 %v1616
    %v1704 = vunpack.c.h.b16 %v1616
    %v1705 = vunpack.c.l.b16 %v1617
    %v1706 = vunpack.c.h.b16 %v1617
    %v1707 = vunpack.c.l.b16 %v1618
    %v1708 = vunpack.c.h.b16 %v1618
    %v1709 = vunpack.c.l.b16 %v1619
    %v1710 = vunpack.c.h.b16 %v1619
    %v1711 = vunpack.c.l.b16 %v1620
    %v1712 = vunpack.c.h.b16 %v1620
    %v1713 = vunpack.c.l.b16 %v1621
    %v1714 = vunpack.c.h.b16 %v1621
    %v1715 = vunpack.c.l.b16 %v1622
    %v1716 = vunpack.c.h.b16 %v1622
    %v1717 = vunpack.c.l.b16 %v1623
    %v1718 = vunpack.c.h.b16 %v1623
    %v1719 = vunpack.c.l.b16 %v1624
    %v1720 = vunpack.c.h.b16 %v1624
    %v1721 = vpack.c.b16 %v1659, %v1657
    %v1722 = vpack.c.b16 %v1660, %v1658
    %v1723 = vpack.c.b16 %v1663, %v1661
    %v1724 = vpack.c.b16 %v1664, %v1662
    %v1725 = vpack.c.b16 %v1667, %v1665
    %v1726 = vpack.c.b16 %v1668, %v1666
    %v1727 = vpack.c.b16 %v1671, %v1669
    %v1728 = vpack.c.b16 %v1672, %v1670
    %v1729 = vpack.c.b16 %v1675, %v1673
    %v1730 = vpack.c.b16 %v1676, %v1674
    %v1731 = vpack.c.b16 %v1679, %v1677
    %v1732 = vpack.c.b16 %v1680, %v1678
    %v1733 = vpack.c.b16 %v1683, %v1681
    %v1734 = vpack.c.b16 %v1684, %v1682
    %v1735 = vpack.c.b16 %v1687, %v1685
    %v1736 = vpack.c.b16 %v1688, %v1686
    %v1737 = vpack.c.b16 %v1691, %v1689
    %v1738 = vpack.c.b16 %v1692, %v1690
    %v1739 = vpack.c.b16 %v1695, %v1693
    %v1740 = vpack.c.b16 %v1696, %v1694
    %v1741 = vpack.c.b16 %v1699, %v1697
    %v1742 = vpack.c.b16 %v1700, %v1698
    %v1743 = vpack.c.b16 %v1703, %v1701
    %v1744 = vpack.c.b16 %v1704, %v1702
    %v1745 = vpack.c.b16 %v1707, %v1705
    %v1746 = vpack.c.b16 %v1708, %v1706
    %v1747 = vpack.c.b16 %v1711, %v1709
    %v1748 = vpack.c.b16 %v1712, %v1710
    %v1749 = vpack.c.b16 %v1715, %v1713
    %v1750 = vpack.c.b16 %v1716, %v1714
    %v1751 = vpack.c.b16 %v1719, %v1717
    %v1752 = vpack.c.b16 %v1720, %v1718
    %1785 = vmatprep.subr.bf16.mxu0 %v1722
    %1786 = vmatpush1.bf16.msra.mxu0 %v1721
    %1787 = vmatprep.subr.bf16.mxu0 %v1724
    %1788 = vmatpush1.bf16.msra.mxu0 %v1723
    %1789 = vmatprep.subr.bf16.mxu0 %v1726
    %1790 = vmatpush1.bf16.msra.mxu0 %v1725
    %1791 = vmatprep.subr.bf16.mxu0 %v1728
    %1792 = vmatpush1.bf16.msra.mxu0 %v1727
    %1793 = vmatprep.subr.bf16.mxu0 %v1730
    %1794 = vmatpush1.bf16.msra.mxu0 %v1729
    %1795 = vmatprep.subr.bf16.mxu0 %v1732
    %1796 = vmatpush1.bf16.msra.mxu0 %v1731
    %1797 = vmatprep.subr.bf16.mxu0 %v1734
    %1798 = vmatpush1.bf16.msra.mxu0 %v1733
    %1799 = vmatprep.subr.bf16.mxu0 %v1736
    %1800 = vmatpush1.bf16.msra.mxu0 %v1735
    %1801 = vmatprep.subr.bf16.mxu0 %v1738
    %1802 = vmatpush1.bf16.msra.mxu0 %v1737
    %1803 = vmatprep.subr.bf16.mxu0 %v1740
    %1804 = vmatpush1.bf16.msra.mxu0 %v1739
    %1805 = vmatprep.subr.bf16.mxu0 %v1742
    %1806 = vmatpush1.bf16.msra.mxu0 %v1741
    %1807 = vmatprep.subr.bf16.mxu0 %v1744
    %1808 = vmatpush1.bf16.msra.mxu0 %v1743
    %1809 = vmatprep.subr.bf16.mxu0 %v1746
    %1810 = vmatpush1.bf16.msra.mxu0 %v1745
    %1811 = vmatprep.subr.bf16.mxu0 %v1748
    %1812 = vmatpush1.bf16.msra.mxu0 %v1747
    %1813 = vmatprep.subr.bf16.mxu0 %v1750
    %1814 = vmatpush1.bf16.msra.mxu0 %v1749
    %1815 = vmatprep.subr.bf16.mxu0 %v1752
    %1816 = vmatpush1.bf16.msra.mxu0 %v1751
    %1817 = vmatprep.mubr.bf16.mxu0 0
    %1818 = vmatmul.mubr.bf16.gmra.mrb[0].mxu0 0
    %v1819 = vpop.f32.mrb[0].mxu0
    %v1820 = vadd.f32 0.0, %v1819
    %v1821 = vpop.f32.mrb[0].mxu0
    %v1822 = vadd.f32 0.0, %v1821
    %v1823 = vpop.f32.mrb[0].mxu0
    %v1824 = vadd.f32 0.0, %v1823
    %v1825 = vpop.f32.mrb[0].mxu0
    %v1826 = vadd.f32 0.0, %v1825
    %1827 = vdwg.mxu0
    %v1828 = vadd.f32 %v866, %v1820
    %v1829 = vadd.f32 %v867, %v1822
    %v1830 = vadd.f32 %v874, %v1824
    %v1831 = vadd.f32 %v875, %v1826
    %v1832 = vxor.u32 %v1581, 2147483648
    %v1833 = vxor.u32 %v1582, 2147483648
    %v1834 = vxor.u32 %v1583, 2147483648
    %v1835 = vxor.u32 %v1584, 2147483648
    %v1836 = vxor.u32 %v1585, 2147483648
    %v1837 = vxor.u32 %v1586, 2147483648
    %v1838 = vxor.u32 %v1587, 2147483648
    %v1839 = vxor.u32 %v1588, 2147483648
    %v1840 = vxor.u32 %v1589, 2147483648
    %v1841 = vxor.u32 %v1590, 2147483648
    %v1842 = vxor.u32 %v1591, 2147483648
    %v1843 = vxor.u32 %v1592, 2147483648
    %v1844 = vmul.f32 %v1832, 1.442695
    %v1845 = vpow.pop %v1844
    %v1846 = vmul.f32 %v1833, 1.442695
    %v1847 = vpow.pop %v1846
    %v1848 = vmul.f32 %v1834, 1.442695
    %v1849 = vpow.pop %v1848
    %v1850 = vmul.f32 %v1835, 1.442695
    %v1851 = vpow.pop %v1850
    %v1852 = vmul.f32 %v1836, 1.442695
    %v1853 = vpow.pop %v1852
    %v1854 = vmul.f32 %v1837, 1.442695
    %v1855 = vpow.pop %v1854
    %v1856 = vmul.f32 %v1838, 1.442695
    %v1857 = vpow.pop %v1856
    %v1858 = vmul.f32 %v1839, 1.442695
    %v1859 = vpow.pop %v1858
    %v1860 = vmul.f32 %v1840, 1.442695
    %v1861 = vpow.pop %v1860
    %v1862 = vmul.f32 %v1841, 1.442695
    %v1863 = vpow.pop %v1862
    %v1864 = vmul.f32 %v1842, 1.442695
    %v1865 = vpow.pop %v1864
    %v1866 = vmul.f32 %v1843, 1.442695
    %v1867 = vpow.pop %v1866
    %v1868 = vadd.f32 %v1845, 1.0
    %v1869 = vadd.f32 %v1847, 1.0
    %v1870 = vadd.f32 %v1849, 1.0
    %v1871 = vadd.f32 %v1851, 1.0
    %v1872 = vadd.f32 %v1853, 1.0
    %v1873 = vadd.f32 %v1855, 1.0
    %v1874 = vadd.f32 %v1857, 1.0
    %v1875 = vadd.f32 %v1859, 1.0
    %v1876 = vadd.f32 %v1861, 1.0
    %v1877 = vadd.f32 %v1863, 1.0
    %v1878 = vadd.f32 %v1865, 1.0
    %v1879 = vadd.f32 %v1867, 1.0
    %v1880 = vrcp.pop %v1868
    %v1881 = vmul.f32 1.0, %v1880
    %v1882 = vrcp.pop %v1869
    %v1883 = vmul.f32 1.0, %v1882
    %v1884 = vrcp.pop %v1870
    %v1885 = vmul.f32 1.0, %v1884
    %v1886 = vrcp.pop %v1871
    %v1887 = vmul.f32 1.0, %v1886
    %v1888 = vrcp.pop %v1872
    %v1889 = vmul.f32 1.0, %v1888
    %v1890 = vrcp.pop %v1873
    %v1891 = vmul.f32 1.0, %v1890
    %v1892 = vrcp.pop %v1874
    %v1893 = vmul.f32 1.0, %v1892
    %v1894 = vrcp.pop %v1875
    %v1895 = vmul.f32 1.0, %v1894
    %v1896 = vrcp.pop %v1876
    %v1897 = vmul.f32 1.0, %v1896
    %v1898 = vrcp.pop %v1877
    %v1899 = vmul.f32 1.0, %v1898
    %v1900 = vrcp.pop %v1878
    %v1901 = vmul.f32 1.0, %v1900
    %v1902 = vrcp.pop %v1879
    %v1903 = vmul.f32 1.0, %v1902
    %v1904 = vtanh.pop %v1828
    %v1905 = vtanh.pop %v1829
    %v1906 = vtanh.pop %v1830
    %v1907 = vtanh.pop %v1831
    %v1908 = vmul.f32 %v1885, 0.0
    %v1909 = vmul.f32 %v1887, 0.0
    %v1910 = vmul.f32 %v1897, 0.0
    %v1911 = vmul.f32 %v1899, 0.0
    %v1912 = vmul.f32 %v1881, %v1904
    %v1913 = vmul.f32 %v1883, %v1905
    %v1914 = vmul.f32 %v1893, %v1906
    %v1915 = vmul.f32 %v1895, %v1907
    %v1916 = vadd.f32 %v1908, %v1912
    %v1917 = vadd.f32 %v1909, %v1913
    %v1918 = vadd.f32 %v1910, %v1914
    %v1919 = vadd.f32 %v1911, %v1915
    %v1920 = vtanh.pop %v1916
    %v1921 = vtanh.pop %v1917
    %v1922 = vtanh.pop %v1918
    %v1923 = vtanh.pop %v1919
    %v1924 = vmul.f32 %v1889, %v1920
    %v1925 = vmul.f32 %v1891, %v1921
    %v1926 = vmul.f32 %v1901, %v1922
    %v1927 = vmul.f32 %v1903, %v1923
    %v1928 = vpack.c.bf16 %v1926, %v1924
    %v1929 = vpack.c.bf16 %v1927, %v1925
    %s1930 = smul.u32 2, 8
    %s1931 = smul.addr %s1930, 8
    %s1932 = scalar_lea.vmem [#allocation2], %s1931
    %v1933 = vld [vmem:[%s1932] sm:$0xff]
    %v1934 = vld [vmem:[%s1932 + $0x8] sm:$0xff]
    %v1935 = vld [vmem:[%s1932 + $0x10] sm:$0xff]
    %v1936 = vld [vmem:[%s1932 + $0x18] sm:$0xff]
    %v1937 = vld [vmem:[%s1932 + $0x20] sm:$0xff]
    %v1938 = vld [vmem:[%s1932 + $0x28] sm:$0xff]
    %v1939 = vld [vmem:[%s1932 + $0x30] sm:$0xff]
    %v1940 = vld [vmem:[%s1932 + $0x38] sm:$0xff]
    %v1941 = vld [vmem:[%s1932 + $0x40] sm:$0xff]
    %v1942 = vld [vmem:[%s1932 + $0x48] sm:$0xff]
    %v1943 = vld [vmem:[%s1932 + $0x50] sm:$0xff]
    %v1944 = vld [vmem:[%s1932 + $0x58] sm:$0xff]
    %v1945 = vld [vmem:[%s1932 + $0x60] sm:$0xff]
    %v1946 = vld [vmem:[%s1932 + $0x68] sm:$0xff]
    %v1947 = vld [vmem:[%s1932 + $0x70] sm:$0xff]
    %v1948 = vld [vmem:[%s1932 + $0x78] sm:$0xff]
    %1949 = vmatprep.subr.bf16.mxu0 %v1261
    %1950 = vmatpush1.bf16.msra.mxu0 %v1260
    %1951 = vmatprep.subr.bf16.mxu0 %v1267
    %1952 = vmatpush1.bf16.msra.mxu0 %v1266
    %1953 = vmatprep.subr.bf16.mxu0 %v1273
    %1954 = vmatpush1.bf16.msra.mxu0 %v1272
    %1955 = vmatprep.subr.bf16.mxu0 %v1279
    %1956 = vmatpush1.bf16.msra.mxu0 %v1278
    %1957 = vmatprep.subr.bf16.mxu0 %v1285
    %1958 = vmatpush1.bf16.msra.mxu0 %v1284
    %1959 = vmatprep.subr.bf16.mxu0 %v1291
    %1960 = vmatpush1.bf16.msra.mxu0 %v1290
    %1961 = vmatprep.subr.bf16.mxu0 %v1297
    %1962 = vmatpush1.bf16.msra.mxu0 %v1296
    %1963 = vmatprep.subr.bf16.mxu0 %v1303
    %1964 = vmatpush1.bf16.msra.mxu0 %v1302
    %1965 = vmatprep.subr.bf16.mxu0 %v1309
    %1966 = vmatpush1.bf16.msra.mxu0 %v1308
    %1967 = vmatprep.subr.bf16.mxu0 %v1315
    %1968 = vmatpush1.bf16.msra.mxu0 %v1314
    %1969 = vmatprep.subr.bf16.mxu0 %v1321
    %1970 = vmatpush1.bf16.msra.mxu0 %v1320
    %1971 = vmatprep.subr.bf16.mxu0 %v1327
    %1972 = vmatpush1.bf16.msra.mxu0 %v1326
    %1973 = vmatprep.subr.bf16.mxu0 %v1333
    %1974 = vmatpush1.bf16.msra.mxu0 %v1332
    %1975 = vmatprep.subr.bf16.mxu0 %v1339
    %1976 = vmatpush1.bf16.msra.mxu0 %v1338
    %1977 = vmatprep.subr.bf16.mxu0 %v1345
    %1978 = vmatpush1.bf16.msra.mxu0 %v1344
    %1979 = vmatprep.subr.bf16.mxu0 %v1351
    %1980 = vmatpush1.bf16.msra.mxu0 %v1350
    %1981 = vmatprep.mubr.bf16.mxu0 %v1929
    %1982 = vmatmul.mubr.bf16.gmra.mrb[0].mxu0 %v1928
    %v1983 = vpop.f32.mrb[0].mxu0
    %v1984 = vadd.f32 0.0, %v1983
    %v1985 = vpop.f32.mrb[0].mxu0
    %v1986 = vadd.f32 0.0, %v1985
    %v1987 = vpop.f32.mrb[0].mxu0
    %v1988 = vadd.f32 0.0, %v1987
    %v1989 = vpop.f32.mrb[0].mxu0
    %v1990 = vadd.f32 0.0, %v1989
    %1991 = vdwg.mxu0
    %1992 = vmatprep.subr.bf16.mxu0 %v1263
    %1993 = vmatpush1.bf16.msra.mxu0 %v1262
    %1994 = vmatprep.subr.bf16.mxu0 %v1269
    %1995 = vmatpush1.bf16.msra.mxu0 %v1268
    %1996 = vmatprep.subr.bf16.mxu0 %v1275
    %1997 = vmatpush1.bf16.msra.mxu0 %v1274
    %1998 = vmatprep.subr.bf16.mxu0 %v1281
    %1999 = vmatpush1.bf16.msra.mxu0 %v1280
    %2000 = vmatprep.subr.bf16.mxu0 %v1287
    %2001 = vmatpush1.bf16.msra.mxu0 %v1286
    %2002 = vmatprep.subr.bf16.mxu0 %v1293
    %2003 = vmatpush1.bf16.msra.mxu0 %v1292
    %2004 = vmatprep.subr.bf16.mxu0 %v1299
    %2005 = vmatpush1.bf16.msra.mxu0 %v1298
    %2006 = vmatprep.subr.bf16.mxu0 %v1305
    %2007 = vmatpush1.bf16.msra.mxu0 %v1304
    %2008 = vmatprep.subr.bf16.mxu0 %v1311
    %2009 = vmatpush1.bf16.msra.mxu0 %v1310
    %2010 = vmatprep.subr.bf16.mxu0 %v1317
    %2011 = vmatpush1.bf16.msra.mxu0 %v1316
    %2012 = vmatprep.subr.bf16.mxu0 %v1323
    %2013 = vmatpush1.bf16.msra.mxu0 %v1322
    %2014 = vmatprep.subr.bf16.mxu0 %v1329
    %2015 = vmatpush1.bf16.msra.mxu0 %v1328
    %2016 = vmatprep.subr.bf16.mxu0 %v1335
    %2017 = vmatpush1.bf16.msra.mxu0 %v1334
    %2018 = vmatprep.subr.bf16.mxu0 %v1341
    %2019 = vmatpush1.bf16.msra.mxu0 %v1340
    %2020 = vmatprep.subr.bf16.mxu0 %v1347
    %2021 = vmatpush1.bf16.msra.mxu0 %v1346
    %2022 = vmatprep.subr.bf16.mxu0 %v1353
    %2023 = vmatpush1.bf16.msra.mxu0 %v1352
    %2024 = vmatprep.mubr.bf16.mxu0 %v1929
    %2025 = vmatmul.mubr.bf16.gmra.mrb[0].mxu0 %v1928
    %v2026 = vpop.f32.mrb[0].mxu0
    %v2027 = vadd.f32 0.0, %v2026
    %v2028 = vpop.f32.mrb[0].mxu0
    %v2029 = vadd.f32 0.0, %v2028
    %v2030 = vpop.f32.mrb[0].mxu0
    %v2031 = vadd.f32 0.0, %v2030
    %v2032 = vpop.f32.mrb[0].mxu0
    %v2033 = vadd.f32 0.0, %v2032
    %2034 = vdwg.mxu0
    %2035 = vmatprep.subr.bf16.mxu0 %v1265
    %2036 = vmatpush1.bf16.msra.mxu0 %v1264
    %2037 = vmatprep.subr.bf16.mxu0 %v1271
    %2038 = vmatpush1.bf16.msra.mxu0 %v1270
    %2039 = vmatprep.subr.bf16.mxu0 %v1277
    %2040 = vmatpush1.bf16.msra.mxu0 %v1276
    %2041 = vmatprep.subr.bf16.mxu0 %v1283
    %2042 = vmatpush1.bf16.msra.mxu0 %v1282
    %2043 = vmatprep.subr.bf16.mxu0 %v1289
    %2044 = vmatpush1.bf16.msra.mxu0 %v1288
    %2045 = vmatprep.subr.bf16.mxu0 %v1295
    %2046 = vmatpush1.bf16.msra.mxu0 %v1294
    %2047 = vmatprep.subr.bf16.mxu0 %v1301
    %2048 = vmatpush1.bf16.msra.mxu0 %v1300
    %2049 = vmatprep.subr.bf16.mxu0 %v1307
    %2050 = vmatpush1.bf16.msra.mxu0 %v1306
    %2051 = vmatprep.subr.bf16.mxu0 %v1313
    %2052 = vmatpush1.bf16.msra.mxu0 %v1312
    %2053 = vmatprep.subr.bf16.mxu0 %v1319
    %2054 = vmatpush1.bf16.msra.mxu0 %v1318
    %2055 = vmatprep.subr.bf16.mxu0 %v1325
    %2056 = vmatpush1.bf16.msra.mxu0 %v1324
    %2057 = vmatprep.subr.bf16.mxu0 %v1331
    %2058 = vmatpush1.bf16.msra.mxu0 %v1330
    %2059 = vmatprep.subr.bf16.mxu0 %v1337
    %2060 = vmatpush1.bf16.msra.mxu0 %v1336
    %2061 = vmatprep.subr.bf16.mxu0 %v1343
    %2062 = vmatpush1.bf16.msra.mxu0 %v1342
    %2063 = vmatprep.subr.bf16.mxu0 %v1349
    %2064 = vmatpush1.bf16.msra.mxu0 %v1348
    %2065 = vmatprep.subr.bf16.mxu0 %v1355
    %2066 = vmatpush1.bf16.msra.mxu0 %v1354
    %2067 = vmatprep.mubr.bf16.mxu0 %v1929
    %2068 = vmatmul.mubr.bf16.gmra.mrb[0].mxu0 %v1928
    %v2069 = vpop.f32.mrb[0].mxu0
    %v2070 = vadd.f32 0.0, %v2069
    %v2071 = vpop.f32.mrb[0].mxu0
    %v2072 = vadd.f32 0.0, %v2071
    %v2073 = vpop.f32.mrb[0].mxu0
    %v2074 = vadd.f32 0.0, %v2073
    %v2075 = vpop.f32.mrb[0].mxu0
    %v2076 = vadd.f32 0.0, %v2075
    %2077 = vdwg.mxu0
    %v2078 = vadd.f32 %v1933, %v1984
    %v2079 = vadd.f32 %v1934, %v1986
    %v2080 = vadd.f32 %v1935, %v2027
    %v2081 = vadd.f32 %v1936, %v2029
    %v2082 = vadd.f32 %v1937, %v2070
    %v2083 = vadd.f32 %v1938, %v2072
    %v2084 = vadd.f32 %v1941, %v1988
    %v2085 = vadd.f32 %v1942, %v1990
    %v2086 = vadd.f32 %v1943, %v2031
    %v2087 = vadd.f32 %v1944, %v2033
    %v2088 = vadd.f32 %v1945, %v2074
    %v2089 = vadd.f32 %v1946, %v2076
    %2090 = vmatprep.subr.bf16.mxu0 %v1722
    %2091 = vmatpush1.bf16.msra.mxu0 %v1721
    %2092 = vmatprep.subr.bf16.mxu0 %v1724
    %2093 = vmatpush1.bf16.msra.mxu0 %v1723
    %2094 = vmatprep.subr.bf16.mxu0 %v1726
    %2095 = vmatpush1.bf16.msra.mxu0 %v1725
    %2096 = vmatprep.subr.bf16.mxu0 %v1728
    %2097 = vmatpush1.bf16.msra.mxu0 %v1727
    %2098 = vmatprep.subr.bf16.mxu0 %v1730
    %2099 = vmatpush1.bf16.msra.mxu0 %v1729
    %2100 = vmatprep.subr.bf16.mxu0 %v1732
    %2101 = vmatpush1.bf16.msra.mxu0 %v1731
    %2102 = vmatprep.subr.bf16.mxu0 %v1734
    %2103 = vmatpush1.bf16.msra.mxu0 %v1733
    %2104 = vmatprep.subr.bf16.mxu0 %v1736
    %2105 = vmatpush1.bf16.msra.mxu0 %v1735
    %2106 = vmatprep.subr.bf16.mxu0 %v1738
    %2107 = vmatpush1.bf16.msra.mxu0 %v1737
    %2108 = vmatprep.subr.bf16.mxu0 %v1740
    %2109 = vmatpush1.bf16.msra.mxu0 %v1739
    %2110 = vmatprep.subr.bf16.mxu0 %v1742
    %2111 = vmatpush1.bf16.msra.mxu0 %v1741
    %2112 = vmatprep.subr.bf16.mxu0 %v1744
    %2113 = vmatpush1.bf16.msra.mxu0 %v1743
    %2114 = vmatprep.subr.bf16.mxu0 %v1746
    %2115 = vmatpush1.bf16.msra.mxu0 %v1745
    %2116 = vmatprep.subr.bf16.mxu0 %v1748
    %2117 = vmatpush1.bf16.msra.mxu0 %v1747
    %2118 = vmatprep.subr.bf16.mxu0 %v1750
    %2119 = vmatpush1.bf16.msra.mxu0 %v1749
    %2120 = vmatprep.subr.bf16.mxu0 %v1752
    %2121 = vmatpush1.bf16.msra.mxu0 %v1751
    %2122 = vmatprep.mubr.bf16.mxu0 %v1929
    %2123 = vmatmul.mubr.bf16.gmra.mrb[0].mxu0 %v1928
    %v2124 = vpop.f32.mrb[0].mxu0
    %v2125 = vadd.f32 0.0, %v2124
    %v2126 = vpop.f32.mrb[0].mxu0
    %v2127 = vadd.f32 0.0, %v2126
    %v2128 = vpop.f32.mrb[0].mxu0
    %v2129 = vadd.f32 0.0, %v2128
    %v2130 = vpop.f32.mrb[0].mxu0
    %v2131 = vadd.f32 0.0, %v2130
    %2132 = vdwg.mxu0
    %v2133 = vadd.f32 %v1939, %v2125
    %v2134 = vadd.f32 %v1940, %v2127
    %v2135 = vadd.f32 %v1947, %v2129
    %v2136 = vadd.f32 %v1948, %v2131
    %v2137 = vxor.u32 %v2078, 2147483648
    %v2138 = vxor.u32 %v2079, 2147483648
    %v2139 = vxor.u32 %v2080, 2147483648
    %v2140 = vxor.u32 %v2081, 2147483648
    %v2141 = vxor.u32 %v2082, 2147483648
    %v2142 = vxor.u32 %v2083, 2147483648
    %v2143 = vxor.u32 %v2084, 2147483648
    %v2144 = vxor.u32 %v2085, 2147483648
    %v2145 = vxor.u32 %v2086, 2147483648
    %v2146 = vxor.u32 %v2087, 2147483648
    %v2147 = vxor.u32 %v2088, 2147483648
    %v2148 = vxor.u32 %v2089, 2147483648
    %v2149 = vmul.f32 %v2137, 1.442695
    %v2150 = vpow.pop %v2149
    %v2151 = vmul.f32 %v2138, 1.442695
    %v2152 = vpow.pop %v2151
    %v2153 = vmul.f32 %v2139, 1.442695
    %v2154 = vpow.pop %v2153
    %v2155 = vmul.f32 %v2140, 1.442695
    %v2156 = vpow.pop %v2155
    %v2157 = vmul.f32 %v2141, 1.442695
    %v2158 = vpow.pop %v2157
    %v2159 = vmul.f32 %v2142, 1.442695
    %v2160 = vpow.pop %v2159
    %v2161 = vmul.f32 %v2143, 1.442695
    %v2162 = vpow.pop %v2161
    %v2163 = vmul.f32 %v2144, 1.442695
    %v2164 = vpow.pop %v2163
    %v2165 = vmul.f32 %v2145, 1.442695
    %v2166 = vpow.pop %v2165
    %v2167 = vmul.f32 %v2146, 1.442695
    %v2168 = vpow.pop %v2167
    %v2169 = vmul.f32 %v2147, 1.442695
    %v2170 = vpow.pop %v2169
    %v2171 = vmul.f32 %v2148, 1.442695
    %v2172 = vpow.pop %v2171
    %v2173 = vadd.f32 %v2150, 1.0
    %v2174 = vadd.f32 %v2152, 1.0
    %v2175 = vadd.f32 %v2154, 1.0
    %v2176 = vadd.f32 %v2156, 1.0
    %v2177 = vadd.f32 %v2158, 1.0
    %v2178 = vadd.f32 %v2160, 1.0
    %v2179 = vadd.f32 %v2162, 1.0
    %v2180 = vadd.f32 %v2164, 1.0
    %v2181 = vadd.f32 %v2166, 1.0
    %v2182 = vadd.f32 %v2168, 1.0
    %v2183 = vadd.f32 %v2170, 1.0
    %v2184 = vadd.f32 %v2172, 1.0
    %v2185 = vrcp.pop %v2173
    %v2186 = vmul.f32 1.0, %v2185
    %v2187 = vrcp.pop %v2174
    %v2188 = vmul.f32 1.0, %v2187
    %v2189 = vrcp.pop %v2175
    %v2190 = vmul.f32 1.0, %v2189
    %v2191 = vrcp.pop %v2176
    %v2192 = vmul.f32 1.0, %v2191
    %v2193 = vrcp.pop %v2177
    %v2194 = vmul.f32 1.0, %v2193
    %v2195 = vrcp.pop %v2178
    %v2196 = vmul.f32 1.0, %v2195
    %v2197 = vrcp.pop %v2179
    %v2198 = vmul.f32 1.0, %v2197
    %v2199 = vrcp.pop %v2180
    %v2200 = vmul.f32 1.0, %v2199
    %v2201 = vrcp.pop %v2181
    %v2202 = vmul.f32 1.0, %v2201
    %v2203 = vrcp.pop %v2182
    %v2204 = vmul.f32 1.0, %v2203
    %v2205 = vrcp.pop %v2183
    %v2206 = vmul.f32 1.0, %v2205
    %v2207 = vrcp.pop %v2184
    %v2208 = vmul.f32 1.0, %v2207
    %v2209 = vtanh.pop %v2133
    %v2210 = vtanh.pop %v2134
    %v2211 = vtanh.pop %v2135
    %v2212 = vtanh.pop %v2136
    %v2213 = vmul.f32 %v2190, %v1916
    %v2214 = vmul.f32 %v2192, %v1917
    %v2215 = vmul.f32 %v2202, %v1918
    %v2216 = vmul.f32 %v2204, %v1919
    %v2217 = vmul.f32 %v2186, %v2209
    %v2218 = vmul.f32 %v2188, %v2210
    %v2219 = vmul.f32 %v2198, %v2211
    %v2220 = vmul.f32 %v2200, %v2212
    %v2221 = vadd.f32 %v2213, %v2217
    %v2222 = vadd.f32 %v2214, %v2218
    %v2223 = vadd.f32 %v2215, %v2219
    %v2224 = vadd.f32 %v2216, %v2220
    %v2225 = vtanh.pop %v2221
    %v2226 = vtanh.pop %v2222
    %v2227 = vtanh.pop %v2223
    %v2228 = vtanh.pop %v2224
    %v2229 = vmul.f32 %v2194, %v2225
    %v2230 = vmul.f32 %v2196, %v2226
    %v2231 = vmul.f32 %v2206, %v2227
    %v2232 = vmul.f32 %v2208, %v2228
    %v2233 = vpack.c.bf16 %v2231, %v2229
    %v2234 = vpack.c.bf16 %v2232, %v2230
    %s2235 = smul.u32 4, 8
    %s2236 = smul.addr %s2235, 8
    %s2237 = scalar_lea.vmem [#allocation2], %s2236
    %v2238 = vld [vmem:[%s2237] sm:$0xff]
    %v2239 = vld [vmem:[%s2237 + $0x8] sm:$0xff]
    %v2240 = vld [vmem:[%s2237 + $0x10] sm:$0xff]
    %v2241 = vld [vmem:[%s2237 + $0x18] sm:$0xff]
    %v2242 = vld [vmem:[%s2237 + $0x20] sm:$0xff]
    %v2243 = vld [vmem:[%s2237 + $0x28] sm:$0xff]
    %v2244 = vld [vmem:[%s2237 + $0x30] sm:$0xff]
    %v2245 = vld [vmem:[%s2237 + $0x38] sm:$0xff]
    %v2246 = vld [vmem:[%s2237 + $0x40] sm:$0xff]
    %v2247 = vld [vmem:[%s2237 + $0x48] sm:$0xff]
    %v2248 = vld [vmem:[%s2237 + $0x50] sm:$0xff]
    %v2249 = vld [vmem:[%s2237 + $0x58] sm:$0xff]
    %v2250 = vld [vmem:[%s2237 + $0x60] sm:$0xff]
    %v2251 = vld [vmem:[%s2237 + $0x68] sm:$0xff]
    %v2252 = vld [vmem:[%s2237 + $0x70] sm:$0xff]
    %v2253 = vld [vmem:[%s2237 + $0x78] sm:$0xff]
    %2254 = vmatprep.subr.bf16.mxu0 %v1261
    %2255 = vmatpush1.bf16.msra.mxu0 %v1260
    %2256 = vmatprep.subr.bf16.mxu0 %v1267
    %2257 = vmatpush1.bf16.msra.mxu0 %v1266
    %2258 = vmatprep.subr.bf16.mxu0 %v1273
    %2259 = vmatpush1.bf16.msra.mxu0 %v1272
    %2260 = vmatprep.subr.bf16.mxu0 %v1279
    %2261 = vmatpush1.bf16.msra.mxu0 %v1278
    %2262 = vmatprep.subr.bf16.mxu0 %v1285
    %2263 = vmatpush1.bf16.msra.mxu0 %v1284
    %2264 = vmatprep.subr.bf16.mxu0 %v1291
    %2265 = vmatpush1.bf16.msra.mxu0 %v1290
    %2266 = vmatprep.subr.bf16.mxu0 %v1297
    %2267 = vmatpush1.bf16.msra.mxu0 %v1296
    %2268 = vmatprep.subr.bf16.mxu0 %v1303
    %2269 = vmatpush1.bf16.msra.mxu0 %v1302
    %2270 = vmatprep.subr.bf16.mxu0 %v1309
    %2271 = vmatpush1.bf16.msra.mxu0 %v1308
    %2272 = vmatprep.subr.bf16.mxu0 %v1315
    %2273 = vmatpush1.bf16.msra.mxu0 %v1314
    %2274 = vmatprep.subr.bf16.mxu0 %v1321
    %2275 = vmatpush1.bf16.msra.mxu0 %v1320
    %2276 = vmatprep.subr.bf16.mxu0 %v1327
    %2277 = vmatpush1.bf16.msra.mxu0 %v1326
    %2278 = vmatprep.subr.bf16.mxu0 %v1333
    %2279 = vmatpush1.bf16.msra.mxu0 %v1332
    %2280 = vmatprep.subr.bf16.mxu0 %v1339
    %2281 = vmatpush1.bf16.msra.mxu0 %v1338
    %2282 = vmatprep.subr.bf16.mxu0 %v1345
    %2283 = vmatpush1.bf16.msra.mxu0 %v1344
    %2284 = vmatprep.subr.bf16.mxu0 %v1351
    %2285 = vmatpush1.bf16.msra.mxu0 %v1350
    %2286 = vmatprep.mubr.bf16.mxu0 %v2234
    %2287 = vmatmul.mubr.bf16.gmra.mrb[0].mxu0 %v2233
    %v2288 = vpop.f32.mrb[0].mxu0
    %v2289 = vadd.f32 0.0, %v2288
    %v2290 = vpop.f32.mrb[0].mxu0
    %v2291 = vadd.f32 0.0, %v2290
    %v2292 = vpop.f32.mrb[0].mxu0
    %v2293 = vadd.f32 0.0, %v2292
    %v2294 = vpop.f32.mrb[0].mxu0
    %v2295 = vadd.f32 0.0, %v2294
    %2296 = vdwg.mxu0
    %2297 = vmatprep.subr.bf16.mxu0 %v1263
    %2298 = vmatpush1.bf16.msra.mxu0 %v1262
    %2299 = vmatprep.subr.bf16.mxu0 %v1269
    %2300 = vmatpush1.bf16.msra.mxu0 %v1268
    %2301 = vmatprep.subr.bf16.mxu0 %v1275
    %2302 = vmatpush1.bf16.msra.mxu0 %v1274
    %2303 = vmatprep.subr.bf16.mxu0 %v1281
    %2304 = vmatpush1.bf16.msra.mxu0 %v1280
    %2305 = vmatprep.subr.bf16.mxu0 %v1287
    %2306 = vmatpush1.bf16.msra.mxu0 %v1286
    %2307 = vmatprep.subr.bf16.mxu0 %v1293
    %2308 = vmatpush1.bf16.msra.mxu0 %v1292
    %2309 = vmatprep.subr.bf16.mxu0 %v1299
    %2310 = vmatpush1.bf16.msra.mxu0 %v1298
    %2311 = vmatprep.subr.bf16.mxu0 %v1305
    %2312 = vmatpush1.bf16.msra.mxu0 %v1304
    %2313 = vmatprep.subr.bf16.mxu0 %v1311
    %2314 = vmatpush1.bf16.msra.mxu0 %v1310
    %2315 = vmatprep.subr.bf16.mxu0 %v1317
    %2316 = vmatpush1.bf16.msra.mxu0 %v1316
    %2317 = vmatprep.subr.bf16.mxu0 %v1323
    %2318 = vmatpush1.bf16.msra.mxu0 %v1322
    %2319 = vmatprep.subr.bf16.mxu0 %v1329
    %2320 = vmatpush1.bf16.msra.mxu0 %v1328
    %2321 = vmatprep.subr.bf16.mxu0 %v1335
    %2322 = vmatpush1.bf16.msra.mxu0 %v1334
    %2323 = vmatprep.subr.bf16.mxu0 %v1341
    %2324 = vmatpush1.bf16.msra.mxu0 %v1340
    %2325 = vmatprep.subr.bf16.mxu0 %v1347
    %2326 = vmatpush1.bf16.msra.mxu0 %v1346
    %2327 = vmatprep.subr.bf16.mxu0 %v1353
    %2328 = vmatpush1.bf16.msra.mxu0 %v1352
    %2329 = vmatprep.mubr.bf16.mxu0 %v2234
    %2330 = vmatmul.mubr.bf16.gmra.mrb[0].mxu0 %v2233
    %v2331 = vpop.f32.mrb[0].mxu0
    %v2332 = vadd.f32 0.0, %v2331
    %v2333 = vpop.f32.mrb[0].mxu0
    %v2334 = vadd.f32 0.0, %v2333
    %v2335 = vpop.f32.mrb[0].mxu0
    %v2336 = vadd.f32 0.0, %v2335
    %v2337 = vpop.f32.mrb[0].mxu0
    %v2338 = vadd.f32 0.0, %v2337
    %2339 = vdwg.mxu0
    %2340 = vmatprep.subr.bf16.mxu0 %v1265
    %2341 = vmatpush1.bf16.msra.mxu0 %v1264
    %2342 = vmatprep.subr.bf16.mxu0 %v1271
    %2343 = vmatpush1.bf16.msra.mxu0 %v1270
    %2344 = vmatprep.subr.bf16.mxu0 %v1277
    %2345 = vmatpush1.bf16.msra.mxu0 %v1276
    %2346 = vmatprep.subr.bf16.mxu0 %v1283
    %2347 = vmatpush1.bf16.msra.mxu0 %v1282
    %2348 = vmatprep.subr.bf16.mxu0 %v1289
    %2349 = vmatpush1.bf16.msra.mxu0 %v1288
    %2350 = vmatprep.subr.bf16.mxu0 %v1295
    %2351 = vmatpush1.bf16.msra.mxu0 %v1294
    %2352 = vmatprep.subr.bf16.mxu0 %v1301
    %2353 = vmatpush1.bf16.msra.mxu0 %v1300
    %2354 = vmatprep.subr.bf16.mxu0 %v1307
    %2355 = vmatpush1.bf16.msra.mxu0 %v1306
    %2356 = vmatprep.subr.bf16.mxu0 %v1313
    %2357 = vmatpush1.bf16.msra.mxu0 %v1312
    %2358 = vmatprep.subr.bf16.mxu0 %v1319
    %2359 = vmatpush1.bf16.msra.mxu0 %v1318
    %2360 = vmatprep.subr.bf16.mxu0 %v1325
    %2361 = vmatpush1.bf16.msra.mxu0 %v1324
    %2362 = vmatprep.subr.bf16.mxu0 %v1331
    %2363 = vmatpush1.bf16.msra.mxu0 %v1330
    %2364 = vmatprep.subr.bf16.mxu0 %v1337
    %2365 = vmatpush1.bf16.msra.mxu0 %v1336
    %2366 = vmatprep.subr.bf16.mxu0 %v1343
    %2367 = vmatpush1.bf16.msra.mxu0 %v1342
    %2368 = vmatprep.subr.bf16.mxu0 %v1349
    %2369 = vmatpush1.bf16.msra.mxu0 %v1348
    %2370 = vmatprep.subr.bf16.mxu0 %v1355
    %2371 = vmatpush1.bf16.msra.mxu0 %v1354
    %2372 = vmatprep.mubr.bf16.mxu0 %v2234
    %2373 = vmatmul.mubr.bf16.gmra.mrb[0].mxu0 %v2233
    %v2374 = vpop.f32.mrb[0].mxu0
    %v2375 = vadd.f32 0.0, %v2374
    %v2376 = vpop.f32.mrb[0].mxu0
    %v2377 = vadd.f32 0.0, %v2376
    %v2378 = vpop.f32.mrb[0].mxu0
    %v2379 = vadd.f32 0.0, %v2378
    %v2380 = vpop.f32.mrb[0].mxu0
    %v2381 = vadd.f32 0.0, %v2380
    %2382 = vdwg.mxu0
    %v2383 = vadd.f32 %v2238, %v2289
    %v2384 = vadd.f32 %v2239, %v2291
    %v2385 = vadd.f32 %v2240, %v2332
    %v2386 = vadd.f32 %v2241, %v2334
    %v2387 = vadd.f32 %v2242, %v2375
    %v2388 = vadd.f32 %v2243, %v2377
    %v2389 = vadd.f32 %v2246, %v2293
    %v2390 = vadd.f32 %v2247, %v2295
    %v2391 = vadd.f32 %v2248, %v2336
    %v2392 = vadd.f32 %v2249, %v2338
    %v2393 = vadd.f32 %v2250, %v2379
    %v2394 = vadd.f32 %v2251, %v2381
    %2395 = vmatprep.subr.bf16.mxu0 %v1722
    %2396 = vmatpush1.bf16.msra.mxu0 %v1721
    %2397 = vmatprep.subr.bf16.mxu0 %v1724
    %2398 = vmatpush1.bf16.msra.mxu0 %v1723
    %2399 = vmatprep.subr.bf16.mxu0 %v1726
    %2400 = vmatpush1.bf16.msra.mxu0 %v1725
    %2401 = vmatprep.subr.bf16.mxu0 %v1728
    %2402 = vmatpush1.bf16.msra.mxu0 %v1727
    %2403 = vmatprep.subr.bf16.mxu0 %v1730
    %2404 = vmatpush1.bf16.msra.mxu0 %v1729
    %2405 = vmatprep.subr.bf16.mxu0 %v1732
    %2406 = vmatpush1.bf16.msra.mxu0 %v1731
    %2407 = vmatprep.subr.bf16.mxu0 %v1734
    %2408 = vmatpush1.bf16.msra.mxu0 %v1733
    %2409 = vmatprep.subr.bf16.mxu0 %v1736
    %2410 = vmatpush1.bf16.msra.mxu0 %v1735
    %2411 = vmatprep.subr.bf16.mxu0 %v1738
    %2412 = vmatpush1.bf16.msra.mxu0 %v1737
    %2413 = vmatprep.subr.bf16.mxu0 %v1740
    %2414 = vmatpush1.bf16.msra.mxu0 %v1739
    %2415 = vmatprep.subr.bf16.mxu0 %v1742
    %2416 = vmatpush1.bf16.msra.mxu0 %v1741
    %2417 = vmatprep.subr.bf16.mxu0 %v1744
    %2418 = vmatpush1.bf16.msra.mxu0 %v1743
    %2419 = vmatprep.subr.bf16.mxu0 %v1746
    %2420 = vmatpush1.bf16.msra.mxu0 %v1745
    %2421 = vmatprep.subr.bf16.mxu0 %v1748
    %2422 = vmatpush1.bf16.msra.mxu0 %v1747
    %2423 = vmatprep.subr.bf16.mxu0 %v1750
    %2424 = vmatpush1.bf16.msra.mxu0 %v1749
    %2425 = vmatprep.subr.bf16.mxu0 %v1752
    %2426 = vmatpush1.bf16.msra.mxu0 %v1751
    %2427 = vmatprep.mubr.bf16.mxu0 %v2234
    %2428 = vmatmul.mubr.bf16.gmra.mrb[0].mxu0 %v2233
    %v2429 = vpop.f32.mrb[0].mxu0
    %v2430 = vadd.f32 0.0, %v2429
    %v2431 = vpop.f32.mrb[0].mxu0
    %v2432 = vadd.f32 0.0, %v2431
    %v2433 = vpop.f32.mrb[0].mxu0
    %v2434 = vadd.f32 0.0, %v2433
    %v2435 = vpop.f32.mrb[0].mxu0
    %v2436 = vadd.f32 0.0, %v2435
    %2437 = vdwg.mxu0
    %v2438 = vadd.f32 %v2244, %v2430
    %v2439 = vadd.f32 %v2245, %v2432
    %v2440 = vadd.f32 %v2252, %v2434
    %v2441 = vadd.f32 %v2253, %v2436
    %v2442 = vxor.u32 %v2383, 2147483648
    %v2443 = vxor.u32 %v2384, 2147483648
    %v2444 = vxor.u32 %v2385, 2147483648
    %v2445 = vxor.u32 %v2386, 2147483648
    %v2446 = vxor.u32 %v2387, 2147483648
    %v2447 = vxor.u32 %v2388, 2147483648
    %v2448 = vxor.u32 %v2389, 2147483648
    %v2449 = vxor.u32 %v2390, 2147483648
    %v2450 = vxor.u32 %v2391, 2147483648
    %v2451 = vxor.u32 %v2392, 2147483648
    %v2452 = vxor.u32 %v2393, 2147483648
    %v2453 = vxor.u32 %v2394, 2147483648
    %v2454 = vmul.f32 %v2442, 1.442695
    %v2455 = vpow.pop %v2454
    %v2456 = vmul.f32 %v2443, 1.442695
    %v2457 = vpow.pop %v2456
    %v2458 = vmul.f32 %v2444, 1.442695
    %v2459 = vpow.pop %v2458
    %v2460 = vmul.f32 %v2445, 1.442695
    %v2461 = vpow.pop %v2460
    %v2462 = vmul.f32 %v2446, 1.442695
    %v2463 = vpow.pop %v2462
    %v2464 = vmul.f32 %v2447, 1.442695
    %v2465 = vpow.pop %v2464
    %v2466 = vmul.f32 %v2448, 1.442695
    %v2467 = vpow.pop %v2466
    %v2468 = vmul.f32 %v2449, 1.442695
    %v2469 = vpow.pop %v2468
    %v2470 = vmul.f32 %v2450, 1.442695
    %v2471 = vpow.pop %v2470
    %v2472 = vmul.f32 %v2451, 1.442695
    %v2473 = vpow.pop %v2472
    %v2474 = vmul.f32 %v2452, 1.442695
    %v2475 = vpow.pop %v2474
    %v2476 = vmul.f32 %v2453, 1.442695
    %v2477 = vpow.pop %v2476
    %v2478 = vadd.f32 %v2455, 1.0
    %v2479 = vadd.f32 %v2457, 1.0
    %v2480 = vadd.f32 %v2459, 1.0
    %v2481 = vadd.f32 %v2461, 1.0
    %v2482 = vadd.f32 %v2463, 1.0
    %v2483 = vadd.f32 %v2465, 1.0
    %v2484 = vadd.f32 %v2467, 1.0
    %v2485 = vadd.f32 %v2469, 1.0
    %v2486 = vadd.f32 %v2471, 1.0
    %v2487 = vadd.f32 %v2473, 1.0
    %v2488 = vadd.f32 %v2475, 1.0
    %v2489 = vadd.f32 %v2477, 1.0
    %v2490 = vrcp.pop %v2478
    %v2491 = vmul.f32 1.0, %v2490
    %v2492 = vrcp.pop %v2479
    %v2493 = vmul.f32 1.0, %v2492
    %v2494 = vrcp.pop %v2480
    %v2495 = vmul.f32 1.0, %v2494
    %v2496 = vrcp.pop %v2481
    %v2497 = vmul.f32 1.0, %v2496
    %v2498 = vrcp.pop %v2482
    %v2499 = vmul.f32 1.0, %v2498
    %v2500 = vrcp.pop %v2483
    %v2501 = vmul.f32 1.0, %v2500
    %v2502 = vrcp.pop %v2484
    %v2503 = vmul.f32 1.0, %v2502
    %v2504 = vrcp.pop %v2485
    %v2505 = vmul.f32 1.0, %v2504
    %v2506 = vrcp.pop %v2486
    %v2507 = vmul.f32 1.0, %v2506
    %v2508 = vrcp.pop %v2487
    %v2509 = vmul.f32 1.0, %v2508
    %v2510 = vrcp.pop %v2488
    %v2511 = vmul.f32 1.0, %v2510
    %v2512 = vrcp.pop %v2489
    %v2513 = vmul.f32 1.0, %v2512
    %v2514 = vtanh.pop %v2438
    %v2515 = vtanh.pop %v2439
    %v2516 = vtanh.pop %v2440
    %v2517 = vtanh.pop %v2441
    %v2518 = vmul.f32 %v2495, %v2221
    %v2519 = vmul.f32 %v2497, %v2222
    %v2520 = vmul.f32 %v2507, %v2223
    %v2521 = vmul.f32 %v2509, %v2224
    %v2522 = vmul.f32 %v2491, %v2514
    %v2523 = vmul.f32 %v2493, %v2515
    %v2524 = vmul.f32 %v2503, %v2516
    %v2525 = vmul.f32 %v2505, %v2517
    %v2526 = vadd.f32 %v2518, %v2522
    %v2527 = vadd.f32 %v2519, %v2523
    %v2528 = vadd.f32 %v2520, %v2524
    %v2529 = vadd.f32 %v2521, %v2525
    %v2530 = vtanh.pop %v2526
    %v2531 = vtanh.pop %v2527
    %v2532 = vtanh.pop %v2528
    %v2533 = vtanh.pop %v2529
    %v2534 = vmul.f32 %v2499, %v2530
    %v2535 = vmul.f32 %v2501, %v2531
    %v2536 = vmul.f32 %v2511, %v2532
    %v2537 = vmul.f32 %v2513, %v2533
    %v2538 = vpack.c.bf16 %v2536, %v2534
    %v2539 = vpack.c.bf16 %v2537, %v2535
    %s2540 = smul.u32 6, 8
    %s2541 = smul.addr %s2540, 8
    %s2542 = scalar_lea.vmem [#allocation2], %s2541
    %v2543 = vld [vmem:[%s2542] sm:$0xff]
    %v2544 = vld [vmem:[%s2542 + $0x8] sm:$0xff]
    %v2545 = vld [vmem:[%s2542 + $0x10] sm:$0xff]
    %v2546 = vld [vmem:[%s2542 + $0x18] sm:$0xff]
    %v2547 = vld [vmem:[%s2542 + $0x20] sm:$0xff]
    %v2548 = vld [vmem:[%s2542 + $0x28] sm:$0xff]
    %v2549 = vld [vmem:[%s2542 + $0x30] sm:$0xff]
    %v2550 = vld [vmem:[%s2542 + $0x38] sm:$0xff]
    %v2551 = vld [vmem:[%s2542 + $0x40] sm:$0xff]
    %v2552 = vld [vmem:[%s2542 + $0x48] sm:$0xff]
    %v2553 = vld [vmem:[%s2542 + $0x50] sm:$0xff]
    %v2554 = vld [vmem:[%s2542 + $0x58] sm:$0xff]
    %v2555 = vld [vmem:[%s2542 + $0x60] sm:$0xff]
    %v2556 = vld [vmem:[%s2542 + $0x68] sm:$0xff]
    %v2557 = vld [vmem:[%s2542 + $0x70] sm:$0xff]
    %v2558 = vld [vmem:[%s2542 + $0x78] sm:$0xff]
    %2559 = vmatprep.subr.bf16.mxu0 %v1261
    %2560 = vmatpush1.bf16.msra.mxu0 %v1260
    %2561 = vmatprep.subr.bf16.mxu0 %v1267
    %2562 = vmatpush1.bf16.msra.mxu0 %v1266
    %2563 = vmatprep.subr.bf16.mxu0 %v1273
    %2564 = vmatpush1.bf16.msra.mxu0 %v1272
    %2565 = vmatprep.subr.bf16.mxu0 %v1279
    %2566 = vmatpush1.bf16.msra.mxu0 %v1278
    %2567 = vmatprep.subr.bf16.mxu0 %v1285
    %2568 = vmatpush1.bf16.msra.mxu0 %v1284
    %2569 = vmatprep.subr.bf16.mxu0 %v1291
    %2570 = vmatpush1.bf16.msra.mxu0 %v1290
    %2571 = vmatprep.subr.bf16.mxu0 %v1297
    %2572 = vmatpush1.bf16.msra.mxu0 %v1296
    %2573 = vmatprep.subr.bf16.mxu0 %v1303
    %2574 = vmatpush1.bf16.msra.mxu0 %v1302
    %2575 = vmatprep.subr.bf16.mxu0 %v1309
    %2576 = vmatpush1.bf16.msra.mxu0 %v1308
    %2577 = vmatprep.subr.bf16.mxu0 %v1315
    %2578 = vmatpush1.bf16.msra.mxu0 %v1314
    %2579 = vmatprep.subr.bf16.mxu0 %v1321
    %2580 = vmatpush1.bf16.msra.mxu0 %v1320
    %2581 = vmatprep.subr.bf16.mxu0 %v1327
    %2582 = vmatpush1.bf16.msra.mxu0 %v1326
    %2583 = vmatprep.subr.bf16.mxu0 %v1333
    %2584 = vmatpush1.bf16.msra.mxu0 %v1332
    %2585 = vmatprep.subr.bf16.mxu0 %v1339
    %2586 = vmatpush1.bf16.msra.mxu0 %v1338
    %2587 = vmatprep.subr.bf16.mxu0 %v1345
    %2588 = vmatpush1.bf16.msra.mxu0 %v1344
    %2589 = vmatprep.subr.bf16.mxu0 %v1351
    %2590 = vmatpush1.bf16.msra.mxu0 %v1350
    %2591 = vmatprep.mubr.bf16.mxu0 %v2539
    %2592 = vmatmul.mubr.bf16.gmra.mrb[0].mxu0 %v2538
    %v2593 = vpop.f32.mrb[0].mxu0
    %v2594 = vadd.f32 0.0, %v2593
    %v2595 = vpop.f32.mrb[0].mxu0
    %v2596 = vadd.f32 0.0, %v2595
    %v2597 = vpop.f32.mrb[0].mxu0
    %v2598 = vadd.f32 0.0, %v2597
    %v2599 = vpop.f32.mrb[0].mxu0
    %v2600 = vadd.f32 0.0, %v2599
    %2601 = vdwg.mxu0
    %2602 = vmatprep.subr.bf16.mxu0 %v1263
    %2603 = vmatpush1.bf16.msra.mxu0 %v1262
    %2604 = vmatprep.subr.bf16.mxu0 %v1269
    %2605 = vmatpush1.bf16.msra.mxu0 %v1268
    %2606 = vmatprep.subr.bf16.mxu0 %v1275
    %2607 = vmatpush1.bf16.msra.mxu0 %v1274
    %2608 = vmatprep.subr.bf16.mxu0 %v1281
    %2609 = vmatpush1.bf16.msra.mxu0 %v1280
    %2610 = vmatprep.subr.bf16.mxu0 %v1287
    %2611 = vmatpush1.bf16.msra.mxu0 %v1286
    %2612 = vmatprep.subr.bf16.mxu0 %v1293
    %2613 = vmatpush1.bf16.msra.mxu0 %v1292
    %2614 = vmatprep.subr.bf16.mxu0 %v1299
    %2615 = vmatpush1.bf16.msra.mxu0 %v1298
    %2616 = vmatprep.subr.bf16.mxu0 %v1305
    %2617 = vmatpush1.bf16.msra.mxu0 %v1304
    %2618 = vmatprep.subr.bf16.mxu0 %v1311
    %2619 = vmatpush1.bf16.msra.mxu0 %v1310
    %2620 = vmatprep.subr.bf16.mxu0 %v1317
    %2621 = vmatpush1.bf16.msra.mxu0 %v1316
    %2622 = vmatprep.subr.bf16.mxu0 %v1323
    %2623 = vmatpush1.bf16.msra.mxu0 %v1322
    %2624 = vmatprep.subr.bf16.mxu0 %v1329
    %2625 = vmatpush1.bf16.msra.mxu0 %v1328
    %2626 = vmatprep.subr.bf16.mxu0 %v1335
    %2627 = vmatpush1.bf16.msra.mxu0 %v1334
    %2628 = vmatprep.subr.bf16.mxu0 %v1341
    %2629 = vmatpush1.bf16.msra.mxu0 %v1340
    %2630 = vmatprep.subr.bf16.mxu0 %v1347
    %2631 = vmatpush1.bf16.msra.mxu0 %v1346
    %2632 = vmatprep.subr.bf16.mxu0 %v1353
    %2633 = vmatpush1.bf16.msra.mxu0 %v1352
    %2634 = vmatprep.mubr.bf16.mxu0 %v2539
    %2635 = vmatmul.mubr.bf16.gmra.mrb[0].mxu0 %v2538
    %v2636 = vpop.f32.mrb[0].mxu0
    %v2637 = vadd.f32 0.0, %v2636
    %v2638 = vpop.f32.mrb[0].mxu0
    %v2639 = vadd.f32 0.0, %v2638
    %v2640 = vpop.f32.mrb[0].mxu0
    %v2641 = vadd.f32 0.0, %v2640
    %v2642 = vpop.f32.mrb[0].mxu0
    %v2643 = vadd.f32 0.0, %v2642
    %2644 = vdwg.mxu0
    %2645 = vmatprep.subr.bf16.mxu0 %v1265
    %2646 = vmatpush1.bf16.msra.mxu0 %v1264
    %2647 = vmatprep.subr.bf16.mxu0 %v1271
    %2648 = vmatpush1.bf16.msra.mxu0 %v1270
    %2649 = vmatprep.subr.bf16.mxu0 %v1277
    %2650 = vmatpush1.bf16.msra.mxu0 %v1276
    %2651 = vmatprep.subr.bf16.mxu0 %v1283
    %2652 = vmatpush1.bf16.msra.mxu0 %v1282
    %2653 = vmatprep.subr.bf16.mxu0 %v1289
    %2654 = vmatpush1.bf16.msra.mxu0 %v1288
    %2655 = vmatprep.subr.bf16.mxu0 %v1295
    %2656 = vmatpush1.bf16.msra.mxu0 %v1294
    %2657 = vmatprep.subr.bf16.mxu0 %v1301
    %2658 = vmatpush1.bf16.msra.mxu0 %v1300
    %2659 = vmatprep.subr.bf16.mxu0 %v1307
    %2660 = vmatpush1.bf16.msra.mxu0 %v1306
    %2661 = vmatprep.subr.bf16.mxu0 %v1313
    %2662 = vmatpush1.bf16.msra.mxu0 %v1312
    %2663 = vmatprep.subr.bf16.mxu0 %v1319
    %2664 = vmatpush1.bf16.msra.mxu0 %v1318
    %2665 = vmatprep.subr.bf16.mxu0 %v1325
    %2666 = vmatpush1.bf16.msra.mxu0 %v1324
    %2667 = vmatprep.subr.bf16.mxu0 %v1331
    %2668 = vmatpush1.bf16.msra.mxu0 %v1330
    %2669 = vmatprep.subr.bf16.mxu0 %v1337
    %2670 = vmatpush1.bf16.msra.mxu0 %v1336
    %2671 = vmatprep.subr.bf16.mxu0 %v1343
    %2672 = vmatpush1.bf16.msra.mxu0 %v1342
    %2673 = vmatprep.subr.bf16.mxu0 %v1349
    %2674 = vmatpush1.bf16.msra.mxu0 %v1348
    %2675 = vmatprep.subr.bf16.mxu0 %v1355
    %2676 = vmatpush1.bf16.msra.mxu0 %v1354
    %2677 = vmatprep.mubr.bf16.mxu0 %v2539
    %2678 = vmatmul.mubr.bf16.gmra.mrb[0].mxu0 %v2538
    %v2679 = vpop.f32.mrb[0].mxu0
    %v2680 = vadd.f32 0.0, %v2679
    %v2681 = vpop.f32.mrb[0].mxu0
    %v2682 = vadd.f32 0.0, %v2681
    %v2683 = vpop.f32.mrb[0].mxu0
    %v2684 = vadd.f32 0.0, %v2683
    %v2685 = vpop.f32.mrb[0].mxu0
    %v2686 = vadd.f32 0.0, %v2685
    %2687 = vdwg.mxu0
    %v2688 = vadd.f32 %v2543, %v2594
    %v2689 = vadd.f32 %v2544, %v2596
    %v2690 = vadd.f32 %v2545, %v2637
    %v2691 = vadd.f32 %v2546, %v2639
    %v2692 = vadd.f32 %v2547, %v2680
    %v2693 = vadd.f32 %v2548, %v2682
    %v2694 = vadd.f32 %v2551, %v2598
    %v2695 = vadd.f32 %v2552, %v2600
    %v2696 = vadd.f32 %v2553, %v2641
    %v2697 = vadd.f32 %v2554, %v2643
    %v2698 = vadd.f32 %v2555, %v2684
    %v2699 = vadd.f32 %v2556, %v2686
    %2700 = vmatprep.subr.bf16.mxu0 %v1722
    %2701 = vmatpush1.bf16.msra.mxu0 %v1721
    %2702 = vmatprep.subr.bf16.mxu0 %v1724
    %2703 = vmatpush1.bf16.msra.mxu0 %v1723
    %2704 = vmatprep.subr.bf16.mxu0 %v1726
    %2705 = vmatpush1.bf16.msra.mxu0 %v1725
    %2706 = vmatprep.subr.bf16.mxu0 %v1728
    %2707 = vmatpush1.bf16.msra.mxu0 %v1727
    %2708 = vmatprep.subr.bf16.mxu0 %v1730
    %2709 = vmatpush1.bf16.msra.mxu0 %v1729
    %2710 = vmatprep.subr.bf16.mxu0 %v1732
    %2711 = vmatpush1.bf16.msra.mxu0 %v1731
    %2712 = vmatprep.subr.bf16.mxu0 %v1734
    %2713 = vmatpush1.bf16.msra.mxu0 %v1733
    %2714 = vmatprep.subr.bf16.mxu0 %v1736
    %2715 = vmatpush1.bf16.msra.mxu0 %v1735
    %2716 = vmatprep.subr.bf16.mxu0 %v1738
    %2717 = vmatpush1.bf16.msra.mxu0 %v1737
    %2718 = vmatprep.subr.bf16.mxu0 %v1740
    %2719 = vmatpush1.bf16.msra.mxu0 %v1739
    %2720 = vmatprep.subr.bf16.mxu0 %v1742
    %2721 = vmatpush1.bf16.msra.mxu0 %v1741
    %2722 = vmatprep.subr.bf16.mxu0 %v1744
    %2723 = vmatpush1.bf16.msra.mxu0 %v1743
    %2724 = vmatprep.subr.bf16.mxu0 %v1746
    %2725 = vmatpush1.bf16.msra.mxu0 %v1745
    %2726 = vmatprep.subr.bf16.mxu0 %v1748
    %2727 = vmatpush1.bf16.msra.mxu0 %v1747
    %2728 = vmatprep.subr.bf16.mxu0 %v1750
    %2729 = vmatpush1.bf16.msra.mxu0 %v1749
    %2730 = vmatprep.subr.bf16.mxu0 %v1752
    %2731 = vmatpush1.bf16.msra.mxu0 %v1751
    %2732 = vmatprep.mubr.bf16.mxu0 %v2539
    %2733 = vmatmul.mubr.bf16.gmra.mrb[0].mxu0 %v2538
    %v2734 = vpop.f32.mrb[0].mxu0
    %v2735 = vadd.f32 0.0, %v2734
    %v2736 = vpop.f32.mrb[0].mxu0
    %v2737 = vadd.f32 0.0, %v2736
    %v2738 = vpop.f32.mrb[0].mxu0
    %v2739 = vadd.f32 0.0, %v2738
    %v2740 = vpop.f32.mrb[0].mxu0
    %v2741 = vadd.f32 0.0, %v2740
    %2742 = vdwg.mxu0
    %v2743 = vadd.f32 %v2549, %v2735
    %v2744 = vadd.f32 %v2550, %v2737
    %v2745 = vadd.f32 %v2557, %v2739
    %v2746 = vadd.f32 %v2558, %v2741
    %v2747 = vxor.u32 %v2688, 2147483648
    %v2748 = vxor.u32 %v2689, 2147483648
    %v2749 = vxor.u32 %v2690, 2147483648
    %v2750 = vxor.u32 %v2691, 2147483648
    %v2751 = vxor.u32 %v2692, 2147483648
    %v2752 = vxor.u32 %v2693, 2147483648
    %v2753 = vxor.u32 %v2694, 2147483648
    %v2754 = vxor.u32 %v2695, 2147483648
    %v2755 = vxor.u32 %v2696, 2147483648
    %v2756 = vxor.u32 %v2697, 2147483648
    %v2757 = vxor.u32 %v2698, 2147483648
    %v2758 = vxor.u32 %v2699, 2147483648
    %v2759 = vmul.f32 %v2747, 1.442695
    %v2760 = vpow.pop %v2759
    %v2761 = vmul.f32 %v2748, 1.442695
    %v2762 = vpow.pop %v2761
    %v2763 = vmul.f32 %v2749, 1.442695
    %v2764 = vpow.pop %v2763
    %v2765 = vmul.f32 %v2750, 1.442695
    %v2766 = vpow.pop %v2765
    %v2767 = vmul.f32 %v2751, 1.442695
    %v2768 = vpow.pop %v2767
    %v2769 = vmul.f32 %v2752, 1.442695
    %v2770 = vpow.pop %v2769
    %v2771 = vmul.f32 %v2753, 1.442695
    %v2772 = vpow.pop %v2771
    %v2773 = vmul.f32 %v2754, 1.442695
    %v2774 = vpow.pop %v2773
    %v2775 = vmul.f32 %v2755, 1.442695
    %v2776 = vpow.pop %v2775
    %v2777 = vmul.f32 %v2756, 1.442695
    %v2778 = vpow.pop %v2777
    %v2779 = vmul.f32 %v2757, 1.442695
    %v2780 = vpow.pop %v2779
    %v2781 = vmul.f32 %v2758, 1.442695
    %v2782 = vpow.pop %v2781
    %v2783 = vadd.f32 %v2760, 1.0
    %v2784 = vadd.f32 %v2762, 1.0
    %v2785 = vadd.f32 %v2764, 1.0
    %v2786 = vadd.f32 %v2766, 1.0
    %v2787 = vadd.f32 %v2768, 1.0
    %v2788 = vadd.f32 %v2770, 1.0
    %v2789 = vadd.f32 %v2772, 1.0
    %v2790 = vadd.f32 %v2774, 1.0
    %v2791 = vadd.f32 %v2776, 1.0
    %v2792 = vadd.f32 %v2778, 1.0
    %v2793 = vadd.f32 %v2780, 1.0
    %v2794 = vadd.f32 %v2782, 1.0
    %v2795 = vrcp.pop %v2783
    %v2796 = vmul.f32 1.0, %v2795
    %v2797 = vrcp.pop %v2784
    %v2798 = vmul.f32 1.0, %v2797
    %v2799 = vrcp.pop %v2785
    %v2800 = vmul.f32 1.0, %v2799
    %v2801 = vrcp.pop %v2786
    %v2802 = vmul.f32 1.0, %v2801
    %v2803 = vrcp.pop %v2787
    %v2804 = vmul.f32 1.0, %v2803
    %v2805 = vrcp.pop %v2788
    %v2806 = vmul.f32 1.0, %v2805
    %v2807 = vrcp.pop %v2789
    %v2808 = vmul.f32 1.0, %v2807
    %v2809 = vrcp.pop %v2790
    %v2810 = vmul.f32 1.0, %v2809
    %v2811 = vrcp.pop %v2791
    %v2812 = vmul.f32 1.0, %v2811
    %v2813 = vrcp.pop %v2792
    %v2814 = vmul.f32 1.0, %v2813
    %v2815 = vrcp.pop %v2793
    %v2816 = vmul.f32 1.0, %v2815
    %v2817 = vrcp.pop %v2794
    %v2818 = vmul.f32 1.0, %v2817
    %v2819 = vtanh.pop %v2743
    %v2820 = vtanh.pop %v2744
    %v2821 = vtanh.pop %v2745
    %v2822 = vtanh.pop %v2746
    %v2823 = vmul.f32 %v2800, %v2526
    %v2824 = vmul.f32 %v2802, %v2527
    %v2825 = vmul.f32 %v2812, %v2528
    %v2826 = vmul.f32 %v2814, %v2529
    %v2827 = vmul.f32 %v2796, %v2819
    %v2828 = vmul.f32 %v2798, %v2820
    %v2829 = vmul.f32 %v2808, %v2821
    %v2830 = vmul.f32 %v2810, %v2822
    %v2831 = vadd.f32 %v2823, %v2827
    %v2832 = vadd.f32 %v2824, %v2828
    %v2833 = vadd.f32 %v2825, %v2829
    %v2834 = vadd.f32 %v2826, %v2830
    %v2835 = vtanh.pop %v2831
    %v2836 = vtanh.pop %v2832
    %v2837 = vtanh.pop %v2833
    %v2838 = vtanh.pop %v2834
    %v2839 = vmul.f32 %v2804, %v2835
    %v2840 = vmul.f32 %v2806, %v2836
    %v2841 = vmul.f32 %v2816, %v2837
    %v2842 = vmul.f32 %v2818, %v2838
    %v2843 = vpack.c.bf16 %v2841, %v2839
    %v2844 = vpack.c.bf16 %v2842, %v2840
    %s2845 = smul.u32 8, 8
    %s2846 = smul.addr %s2845, 8
    %s2847 = scalar_lea.vmem [#allocation2], %s2846
    %v2848 = vld [vmem:[%s2847] sm:$0xff]
    %v2849 = vld [vmem:[%s2847 + $0x8] sm:$0xff]
    %v2850 = vld [vmem:[%s2847 + $0x10] sm:$0xff]
    %v2851 = vld [vmem:[%s2847 + $0x18] sm:$0xff]
    %v2852 = vld [vmem:[%s2847 + $0x20] sm:$0xff]
    %v2853 = vld [vmem:[%s2847 + $0x28] sm:$0xff]
    %v2854 = vld [vmem:[%s2847 + $0x30] sm:$0xff]
    %v2855 = vld [vmem:[%s2847 + $0x38] sm:$0xff]
    %v2856 = vld [vmem:[%s2847 + $0x40] sm:$0xff]
    %v2857 = vld [vmem:[%s2847 + $0x48] sm:$0xff]
    %v2858 = vld [vmem:[%s2847 + $0x50] sm:$0xff]
    %v2859 = vld [vmem:[%s2847 + $0x58] sm:$0xff]
    %v2860 = vld [vmem:[%s2847 + $0x60] sm:$0xff]
    %v2861 = vld [vmem:[%s2847 + $0x68] sm:$0xff]
    %v2862 = vld [vmem:[%s2847 + $0x70] sm:$0xff]
    %v2863 = vld [vmem:[%s2847 + $0x78] sm:$0xff]
    %2864 = vmatprep.subr.bf16.mxu0 %v1261
    %2865 = vmatpush1.bf16.msra.mxu0 %v1260
    %2866 = vmatprep.subr.bf16.mxu0 %v1267
    %2867 = vmatpush1.bf16.msra.mxu0 %v1266
    %2868 = vmatprep.subr.bf16.mxu0 %v1273
    %2869 = vmatpush1.bf16.msra.mxu0 %v1272
    %2870 = vmatprep.subr.bf16.mxu0 %v1279
    %2871 = vmatpush1.bf16.msra.mxu0 %v1278
    %2872 = vmatprep.subr.bf16.mxu0 %v1285
    %2873 = vmatpush1.bf16.msra.mxu0 %v1284
    %2874 = vmatprep.subr.bf16.mxu0 %v1291
    %2875 = vmatpush1.bf16.msra.mxu0 %v1290
    %2876 = vmatprep.subr.bf16.mxu0 %v1297
    %2877 = vmatpush1.bf16.msra.mxu0 %v1296
    %2878 = vmatprep.subr.bf16.mxu0 %v1303
    %2879 = vmatpush1.bf16.msra.mxu0 %v1302
    %2880 = vmatprep.subr.bf16.mxu0 %v1309
    %2881 = vmatpush1.bf16.msra.mxu0 %v1308
    %2882 = vmatprep.subr.bf16.mxu0 %v1315
    %2883 = vmatpush1.bf16.msra.mxu0 %v1314
    %2884 = vmatprep.subr.bf16.mxu0 %v1321
    %2885 = vmatpush1.bf16.msra.mxu0 %v1320
    %2886 = vmatprep.subr.bf16.mxu0 %v1327
    %2887 = vmatpush1.bf16.msra.mxu0 %v1326
    %2888 = vmatprep.subr.bf16.mxu0 %v1333
    %2889 = vmatpush1.bf16.msra.mxu0 %v1332
    %2890 = vmatprep.subr.bf16.mxu0 %v1339
    %2891 = vmatpush1.bf16.msra.mxu0 %v1338
    %2892 = vmatprep.subr.bf16.mxu0 %v1345
    %2893 = vmatpush1.bf16.msra.mxu0 %v1344
    %2894 = vmatprep.subr.bf16.mxu0 %v1351
    %2895 = vmatpush1.bf16.msra.mxu0 %v1350
    %2896 = vmatprep.mubr.bf16.mxu0 %v2844
    %2897 = vmatmul.mubr.bf16.gmra.mrb[0].mxu0 %v2843
    %v2898 = vpop.f32.mrb[0].mxu0
    %v2899 = vadd.f32 0.0, %v2898
    %v2900 = vpop.f32.mrb[0].mxu0
    %v2901 = vadd.f32 0.0, %v2900
    %v2902 = vpop.f32.mrb[0].mxu0
    %v2903 = vadd.f32 0.0, %v2902
    %v2904 = vpop.f32.mrb[0].mxu0
    %v2905 = vadd.f32 0.0, %v2904
    %2906 = vdwg.mxu0
    %2907 = vmatprep.subr.bf16.mxu0 %v1263
    %2908 = vmatpush1.bf16.msra.mxu0 %v1262
    %2909 = vmatprep.subr.bf16.mxu0 %v1269
    %2910 = vmatpush1.bf16.msra.mxu0 %v1268
    %2911 = vmatprep.subr.bf16.mxu0 %v1275
    %2912 = vmatpush1.bf16.msra.mxu0 %v1274
    %2913 = vmatprep.subr.bf16.mxu0 %v1281
    %2914 = vmatpush1.bf16.msra.mxu0 %v1280
    %2915 = vmatprep.subr.bf16.mxu0 %v1287
    %2916 = vmatpush1.bf16.msra.mxu0 %v1286
    %2917 = vmatprep.subr.bf16.mxu0 %v1293
    %2918 = vmatpush1.bf16.msra.mxu0 %v1292
    %2919 = vmatprep.subr.bf16.mxu0 %v1299
    %2920 = vmatpush1.bf16.msra.mxu0 %v1298
    %2921 = vmatprep.subr.bf16.mxu0 %v1305
    %2922 = vmatpush1.bf16.msra.mxu0 %v1304
    %2923 = vmatprep.subr.bf16.mxu0 %v1311
    %2924 = vmatpush1.bf16.msra.mxu0 %v1310
    %2925 = vmatprep.subr.bf16.mxu0 %v1317
    %2926 = vmatpush1.bf16.msra.mxu0 %v1316
    %2927 = vmatprep.subr.bf16.mxu0 %v1323
    %2928 = vmatpush1.bf16.msra.mxu0 %v1322
    %2929 = vmatprep.subr.bf16.mxu0 %v1329
    %2930 = vmatpush1.bf16.msra.mxu0 %v1328
    %2931 = vmatprep.subr.bf16.mxu0 %v1335
    %2932 = vmatpush1.bf16.msra.mxu0 %v1334
    %2933 = vmatprep.subr.bf16.mxu0 %v1341
    %2934 = vmatpush1.bf16.msra.mxu0 %v1340
    %2935 = vmatprep.subr.bf16.mxu0 %v1347
    %2936 = vmatpush1.bf16.msra.mxu0 %v1346
    %2937 = vmatprep.subr.bf16.mxu0 %v1353
    %2938 = vmatpush1.bf16.msra.mxu0 %v1352
    %2939 = vmatprep.mubr.bf16.mxu0 %v2844
    %2940 = vmatmul.mubr.bf16.gmra.mrb[0].mxu0 %v2843
    %v2941 = vpop.f32.mrb[0].mxu0
    %v2942 = vadd.f32 0.0, %v2941
    %v2943 = vpop.f32.mrb[0].mxu0
    %v2944 = vadd.f32 0.0, %v2943
    %v2945 = vpop.f32.mrb[0].mxu0
    %v2946 = vadd.f32 0.0, %v2945
    %v2947 = vpop.f32.mrb[0].mxu0
    %v2948 = vadd.f32 0.0, %v2947
    %2949 = vdwg.mxu0
    %2950 = vmatprep.subr.bf16.mxu0 %v1265
    %2951 = vmatpush1.bf16.msra.mxu0 %v1264
    %2952 = vmatprep.subr.bf16.mxu0 %v1271
    %2953 = vmatpush1.bf16.msra.mxu0 %v1270
    %2954 = vmatprep.subr.bf16.mxu0 %v1277
    %2955 = vmatpush1.bf16.msra.mxu0 %v1276
    %2956 = vmatprep.subr.bf16.mxu0 %v1283
    %2957 = vmatpush1.bf16.msra.mxu0 %v1282
    %2958 = vmatprep.subr.bf16.mxu0 %v1289
    %2959 = vmatpush1.bf16.msra.mxu0 %v1288
    %2960 = vmatprep.subr.bf16.mxu0 %v1295
    %2961 = vmatpush1.bf16.msra.mxu0 %v1294
    %2962 = vmatprep.subr.bf16.mxu0 %v1301
    %2963 = vmatpush1.bf16.msra.mxu0 %v1300
    %2964 = vmatprep.subr.bf16.mxu0 %v1307
    %2965 = vmatpush1.bf16.msra.mxu0 %v1306
    %2966 = vmatprep.subr.bf16.mxu0 %v1313
    %2967 = vmatpush1.bf16.msra.mxu0 %v1312
    %2968 = vmatprep.subr.bf16.mxu0 %v1319
    %2969 = vmatpush1.bf16.msra.mxu0 %v1318
    %2970 = vmatprep.subr.bf16.mxu0 %v1325
    %2971 = vmatpush1.bf16.msra.mxu0 %v1324
    %2972 = vmatprep.subr.bf16.mxu0 %v1331
    %2973 = vmatpush1.bf16.msra.mxu0 %v1330
    %2974 = vmatprep.subr.bf16.mxu0 %v1337
    %2975 = vmatpush1.bf16.msra.mxu0 %v1336
    %2976 = vmatprep.subr.bf16.mxu0 %v1343
    %2977 = vmatpush1.bf16.msra.mxu0 %v1342
    %2978 = vmatprep.subr.bf16.mxu0 %v1349
    %2979 = vmatpush1.bf16.msra.mxu0 %v1348
    %2980 = vmatprep.subr.bf16.mxu0 %v1355
    %2981 = vmatpush1.bf16.msra.mxu0 %v1354
    %2982 = vmatprep.mubr.bf16.mxu0 %v2844
    %2983 = vmatmul.mubr.bf16.gmra.mrb[0].mxu0 %v2843
    %v2984 = vpop.f32.mrb[0].mxu0
    %v2985 = vadd.f32 0.0, %v2984
    %v2986 = vpop.f32.mrb[0].mxu0
    %v2987 = vadd.f32 0.0, %v2986
    %v2988 = vpop.f32.mrb[0].mxu0
    %v2989 = vadd.f32 0.0, %v2988
    %v2990 = vpop.f32.mrb[0].mxu0
    %v2991 = vadd.f32 0.0, %v2990
    %2992 = vdwg.mxu0
    %v2993 = vadd.f32 %v2848, %v2899
    %v2994 = vadd.f32 %v2849, %v2901
    %v2995 = vadd.f32 %v2850, %v2942
    %v2996 = vadd.f32 %v2851, %v2944
    %v2997 = vadd.f32 %v2852, %v2985
    %v2998 = vadd.f32 %v2853, %v2987
    %v2999 = vadd.f32 %v2856, %v2903
    %v3000 = vadd.f32 %v2857, %v2905
    %v3001 = vadd.f32 %v2858, %v2946
    %v3002 = vadd.f32 %v2859, %v2948
    %v3003 = vadd.f32 %v2860, %v2989
    %v3004 = vadd.f32 %v2861, %v2991
    %3005 = vmatprep.subr.bf16.mxu0 %v1722
    %3006 = vmatpush1.bf16.msra.mxu0 %v1721
    %3007 = vmatprep.subr.bf16.mxu0 %v1724
    %3008 = vmatpush1.bf16.msra.mxu0 %v1723
    %3009 = vmatprep.subr.bf16.mxu0 %v1726
    %3010 = vmatpush1.bf16.msra.mxu0 %v1725
    %3011 = vmatprep.subr.bf16.mxu0 %v1728
    %3012 = vmatpush1.bf16.msra.mxu0 %v1727
    %3013 = vmatprep.subr.bf16.mxu0 %v1730
    %3014 = vmatpush1.bf16.msra.mxu0 %v1729
    %3015 = vmatprep.subr.bf16.mxu0 %v1732
    %3016 = vmatpush1.bf16.msra.mxu0 %v1731
    %3017 = vmatprep.subr.bf16.mxu0 %v1734
    %3018 = vmatpush1.bf16.msra.mxu0 %v1733
    %3019 = vmatprep.subr.bf16.mxu0 %v1736
    %3020 = vmatpush1.bf16.msra.mxu0 %v1735
    %3021 = vmatprep.subr.bf16.mxu0 %v1738
    %3022 = vmatpush1.bf16.msra.mxu0 %v1737
    %3023 = vmatprep.subr.bf16.mxu0 %v1740
    %3024 = vmatpush1.bf16.msra.mxu0 %v1739
    %3025 = vmatprep.subr.bf16.mxu0 %v1742
    %3026 = vmatpush1.bf16.msra.mxu0 %v1741
    %3027 = vmatprep.subr.bf16.mxu0 %v1744
    %3028 = vmatpush1.bf16.msra.mxu0 %v1743
    %3029 = vmatprep.subr.bf16.mxu0 %v1746
    %3030 = vmatpush1.bf16.msra.mxu0 %v1745
    %3031 = vmatprep.subr.bf16.mxu0 %v1748
    %3032 = vmatpush1.bf16.msra.mxu0 %v1747
    %3033 = vmatprep.subr.bf16.mxu0 %v1750
    %3034 = vmatpush1.bf16.msra.mxu0 %v1749
    %3035 = vmatprep.subr.bf16.mxu0 %v1752
    %3036 = vmatpush1.bf16.msra.mxu0 %v1751
    %3037 = vmatprep.mubr.bf16.mxu0 %v2844
    %3038 = vmatmul.mubr.bf16.gmra.mrb[0].mxu0 %v2843
    %v3039 = vpop.f32.mrb[0].mxu0
    %v3040 = vadd.f32 0.0, %v3039
    %v3041 = vpop.f32.mrb[0].mxu0
    %v3042 = vadd.f32 0.0, %v3041
    %v3043 = vpop.f32.mrb[0].mxu0
    %v3044 = vadd.f32 0.0, %v3043
    %v3045 = vpop.f32.mrb[0].mxu0
    %v3046 = vadd.f32 0.0, %v3045
    %3047 = vdwg.mxu0
    %v3048 = vadd.f32 %v2854, %v3040
    %v3049 = vadd.f32 %v2855, %v3042
    %v3050 = vadd.f32 %v2862, %v3044
    %v3051 = vadd.f32 %v2863, %v3046
    %v3052 = vxor.u32 %v2993, 2147483648
    %v3053 = vxor.u32 %v2994, 2147483648
    %v3054 = vxor.u32 %v2995, 2147483648
    %v3055 = vxor.u32 %v2996, 2147483648
    %v3056 = vxor.u32 %v2997, 2147483648
    %v3057 = vxor.u32 %v2998, 2147483648
    %v3058 = vxor.u32 %v2999, 2147483648
    %v3059 = vxor.u32 %v3000, 2147483648
    %v3060 = vxor.u32 %v3001, 2147483648
    %v3061 = vxor.u32 %v3002, 2147483648
    %v3062 = vxor.u32 %v3003, 2147483648
    %v3063 = vxor.u32 %v3004, 2147483648
    %v3064 = vmul.f32 %v3052, 1.442695
    %v3065 = vpow.pop %v3064
    %v3066 = vmul.f32 %v3053, 1.442695
    %v3067 = vpow.pop %v3066
    %v3068 = vmul.f32 %v3054, 1.442695
    %v3069 = vpow.pop %v3068
    %v3070 = vmul.f32 %v3055, 1.442695
    %v3071 = vpow.pop %v3070
    %v3072 = vmul.f32 %v3056, 1.442695
    %v3073 = vpow.pop %v3072
    %v3074 = vmul.f32 %v3057, 1.442695
    %v3075 = vpow.pop %v3074
    %v3076 = vmul.f32 %v3058, 1.442695
    %v3077 = vpow.pop %v3076
    %v3078 = vmul.f32 %v3059, 1.442695
    %v3079 = vpow.pop %v3078
    %v3080 = vmul.f32 %v3060, 1.442695
    %v3081 = vpow.pop %v3080
    %v3082 = vmul.f32 %v3061, 1.442695
    %v3083 = vpow.pop %v3082
    %v3084 = vmul.f32 %v3062, 1.442695
    %v3085 = vpow.pop %v3084
    %v3086 = vmul.f32 %v3063, 1.442695
    %v3087 = vpow.pop %v3086
    %v3088 = vadd.f32 %v3065, 1.0
    %v3089 = vadd.f32 %v3067, 1.0
    %v3090 = vadd.f32 %v3069, 1.0
    %v3091 = vadd.f32 %v3071, 1.0
    %v3092 = vadd.f32 %v3073, 1.0
    %v3093 = vadd.f32 %v3075, 1.0
    %v3094 = vadd.f32 %v3077, 1.0
    %v3095 = vadd.f32 %v3079, 1.0
    %v3096 = vadd.f32 %v3081, 1.0
    %v3097 = vadd.f32 %v3083, 1.0
    %v3098 = vadd.f32 %v3085, 1.0
    %v3099 = vadd.f32 %v3087, 1.0
    %v3100 = vrcp.pop %v3088
    %v3101 = vmul.f32 1.0, %v3100
    %v3102 = vrcp.pop %v3089
    %v3103 = vmul.f32 1.0, %v3102
    %v3104 = vrcp.pop %v3090
    %v3105 = vmul.f32 1.0, %v3104
    %v3106 = vrcp.pop %v3091
    %v3107 = vmul.f32 1.0, %v3106
    %v3108 = vrcp.pop %v3092
    %v3109 = vmul.f32 1.0, %v3108
    %v3110 = vrcp.pop %v3093
    %v3111 = vmul.f32 1.0, %v3110
    %v3112 = vrcp.pop %v3094
    %v3113 = vmul.f32 1.0, %v3112
    %v3114 = vrcp.pop %v3095
    %v3115 = vmul.f32 1.0, %v3114
    %v3116 = vrcp.pop %v3096
    %v3117 = vmul.f32 1.0, %v3116
    %v3118 = vrcp.pop %v3097
    %v3119 = vmul.f32 1.0, %v3118
    %v3120 = vrcp.pop %v3098
    %v3121 = vmul.f32 1.0, %v3120
    %v3122 = vrcp.pop %v3099
    %v3123 = vmul.f32 1.0, %v3122
    %v3124 = vtanh.pop %v3048
    %v3125 = vtanh.pop %v3049
    %v3126 = vtanh.pop %v3050
    %v3127 = vtanh.pop %v3051
    %v3128 = vmul.f32 %v3105, %v2831
    %v3129 = vmul.f32 %v3107, %v2832
    %v3130 = vmul.f32 %v3117, %v2833
    %v3131 = vmul.f32 %v3119, %v2834
    %v3132 = vmul.f32 %v3101, %v3124
    %v3133 = vmul.f32 %v3103, %v3125
    %v3134 = vmul.f32 %v3113, %v3126
    %v3135 = vmul.f32 %v3115, %v3127
    %v3136 = vadd.f32 %v3128, %v3132
    %v3137 = vadd.f32 %v3129, %v3133
    %v3138 = vadd.f32 %v3130, %v3134
    %v3139 = vadd.f32 %v3131, %v3135
    %v3140 = vtanh.pop %v3136
    %v3141 = vtanh.pop %v3137
    %v3142 = vtanh.pop %v3138
    %v3143 = vtanh.pop %v3139
    %v3144 = vmul.f32 %v3109, %v3140
    %v3145 = vmul.f32 %v3111, %v3141
    %v3146 = vmul.f32 %v3121, %v3142
    %v3147 = vmul.f32 %v3123, %v3143
    %v3148 = vpack.c.bf16 %v3146, %v3144
    %v3149 = vpack.c.bf16 %v3147, %v3145
    %s3150 = smul.u32 10, 8
    %s3151 = smul.addr %s3150, 8
    %s3152 = scalar_lea.vmem [#allocation2], %s3151
    %v3153 = vld [vmem:[%s3152] sm:$0xff]
    %v3154 = vld [vmem:[%s3152 + $0x8] sm:$0xff]
    %v3155 = vld [vmem:[%s3152 + $0x10] sm:$0xff]
    %v3156 = vld [vmem:[%s3152 + $0x18] sm:$0xff]
    %v3157 = vld [vmem:[%s3152 + $0x20] sm:$0xff]
    %v3158 = vld [vmem:[%s3152 + $0x28] sm:$0xff]
    %v3159 = vld [vmem:[%s3152 + $0x30] sm:$0xff]
    %v3160 = vld [vmem:[%s3152 + $0x38] sm:$0xff]
    %v3161 = vld [vmem:[%s3152 + $0x40] sm:$0xff]
    %v3162 = vld [vmem:[%s3152 + $0x48] sm:$0xff]
    %v3163 = vld [vmem:[%s3152 + $0x50] sm:$0xff]
    %v3164 = vld [vmem:[%s3152 + $0x58] sm:$0xff]
    %v3165 = vld [vmem:[%s3152 + $0x60] sm:$0xff]
    %v3166 = vld [vmem:[%s3152 + $0x68] sm:$0xff]
    %v3167 = vld [vmem:[%s3152 + $0x70] sm:$0xff]
    %v3168 = vld [vmem:[%s3152 + $0x78] sm:$0xff]
    %3169 = vmatprep.subr.bf16.mxu0 %v1261
    %3170 = vmatpush1.bf16.msra.mxu0 %v1260
    %3171 = vmatprep.subr.bf16.mxu0 %v1267
    %3172 = vmatpush1.bf16.msra.mxu0 %v1266
    %3173 = vmatprep.subr.bf16.mxu0 %v1273
    %3174 = vmatpush1.bf16.msra.mxu0 %v1272
    %3175 = vmatprep.subr.bf16.mxu0 %v1279
    %3176 = vmatpush1.bf16.msra.mxu0 %v1278
    %3177 = vmatprep.subr.bf16.mxu0 %v1285
    %3178 = vmatpush1.bf16.msra.mxu0 %v1284
    %3179 = vmatprep.subr.bf16.mxu0 %v1291
    %3180 = vmatpush1.bf16.msra.mxu0 %v1290
    %3181 = vmatprep.subr.bf16.mxu0 %v1297
    %3182 = vmatpush1.bf16.msra.mxu0 %v1296
    %3183 = vmatprep.subr.bf16.mxu0 %v1303
    %3184 = vmatpush1.bf16.msra.mxu0 %v1302
    %3185 = vmatprep.subr.bf16.mxu0 %v1309
    %3186 = vmatpush1.bf16.msra.mxu0 %v1308
    %3187 = vmatprep.subr.bf16.mxu0 %v1315
    %3188 = vmatpush1.bf16.msra.mxu0 %v1314
    %3189 = vmatprep.subr.bf16.mxu0 %v1321
    %3190 = vmatpush1.bf16.msra.mxu0 %v1320
    %3191 = vmatprep.subr.bf16.mxu0 %v1327
    %3192 = vmatpush1.bf16.msra.mxu0 %v1326
    %3193 = vmatprep.subr.bf16.mxu0 %v1333
    %3194 = vmatpush1.bf16.msra.mxu0 %v1332
    %3195 = vmatprep.subr.bf16.mxu0 %v1339
    %3196 = vmatpush1.bf16.msra.mxu0 %v1338
    %3197 = vmatprep.subr.bf16.mxu0 %v1345
    %3198 = vmatpush1.bf16.msra.mxu0 %v1344
    %3199 = vmatprep.subr.bf16.mxu0 %v1351
    %3200 = vmatpush1.bf16.msra.mxu0 %v1350
    %3201 = vmatprep.mubr.bf16.mxu0 %v3149
    %3202 = vmatmul.mubr.bf16.gmra.mrb[0].mxu0 %v3148
    %v3203 = vpop.f32.mrb[0].mxu0
    %v3204 = vadd.f32 0.0, %v3203
    %v3205 = vpop.f32.mrb[0].mxu0
    %v3206 = vadd.f32 0.0, %v3205
    %v3207 = vpop.f32.mrb[0].mxu0
    %v3208 = vadd.f32 0.0, %v3207
    %v3209 = vpop.f32.mrb[0].mxu0
    %v3210 = vadd.f32 0.0, %v3209
    %3211 = vdwg.mxu0
    %3212 = vmatprep.subr.bf16.mxu0 %v1263
    %3213 = vmatpush1.bf16.msra.mxu0 %v1262
    %3214 = vmatprep.subr.bf16.mxu0 %v1269
    %3215 = vmatpush1.bf16.msra.mxu0 %v1268
    %3216 = vmatprep.subr.bf16.mxu0 %v1275
    %3217 = vmatpush1.bf16.msra.mxu0 %v1274
    %3218 = vmatprep.subr.bf16.mxu0 %v1281
    %3219 = vmatpush1.bf16.msra.mxu0 %v1280
    %3220 = vmatprep.subr.bf16.mxu0 %v1287
    %3221 = vmatpush1.bf16.msra.mxu0 %v1286
    %3222 = vmatprep.subr.bf16.mxu0 %v1293
    %3223 = vmatpush1.bf16.msra.mxu0 %v1292
    %3224 = vmatprep.subr.bf16.mxu0 %v1299
    %3225 = vmatpush1.bf16.msra.mxu0 %v1298
    %3226 = vmatprep.subr.bf16.mxu0 %v1305
    %3227 = vmatpush1.bf16.msra.mxu0 %v1304
    %3228 = vmatprep.subr.bf16.mxu0 %v1311
    %3229 = vmatpush1.bf16.msra.mxu0 %v1310
    %3230 = vmatprep.subr.bf16.mxu0 %v1317
    %3231 = vmatpush1.bf16.msra.mxu0 %v1316
    %3232 = vmatprep.subr.bf16.mxu0 %v1323
    %3233 = vmatpush1.bf16.msra.mxu0 %v1322
    %3234 = vmatprep.subr.bf16.mxu0 %v1329
    %3235 = vmatpush1.bf16.msra.mxu0 %v1328
    %3236 = vmatprep.subr.bf16.mxu0 %v1335
    %3237 = vmatpush1.bf16.msra.mxu0 %v1334
    %3238 = vmatprep.subr.bf16.mxu0 %v1341
    %3239 = vmatpush1.bf16.msra.mxu0 %v1340
    %3240 = vmatprep.subr.bf16.mxu0 %v1347
    %3241 = vmatpush1.bf16.msra.mxu0 %v1346
    %3242 = vmatprep.subr.bf16.mxu0 %v1353
    %3243 = vmatpush1.bf16.msra.mxu0 %v1352
    %3244 = vmatprep.mubr.bf16.mxu0 %v3149
    %3245 = vmatmul.mubr.bf16.gmra.mrb[0].mxu0 %v3148
    %v3246 = vpop.f32.mrb[0].mxu0
    %v3247 = vadd.f32 0.0, %v3246
    %v3248 = vpop.f32.mrb[0].mxu0
    %v3249 = vadd.f32 0.0, %v3248
    %v3250 = vpop.f32.mrb[0].mxu0
    %v3251 = vadd.f32 0.0, %v3250
    %v3252 = vpop.f32.mrb[0].mxu0
    %v3253 = vadd.f32 0.0, %v3252
    %3254 = vdwg.mxu0
    %3255 = vmatprep.subr.bf16.mxu0 %v1265
    %3256 = vmatpush1.bf16.msra.mxu0 %v1264
    %3257 = vmatprep.subr.bf16.mxu0 %v1271
    %3258 = vmatpush1.bf16.msra.mxu0 %v1270
    %3259 = vmatprep.subr.bf16.mxu0 %v1277
    %3260 = vmatpush1.bf16.msra.mxu0 %v1276
    %3261 = vmatprep.subr.bf16.mxu0 %v1283
    %3262 = vmatpush1.bf16.msra.mxu0 %v1282
    %3263 = vmatprep.subr.bf16.mxu0 %v1289
    %3264 = vmatpush1.bf16.msra.mxu0 %v1288
    %3265 = vmatprep.subr.bf16.mxu0 %v1295
    %3266 = vmatpush1.bf16.msra.mxu0 %v1294
    %3267 = vmatprep.subr.bf16.mxu0 %v1301
    %3268 = vmatpush1.bf16.msra.mxu0 %v1300
    %3269 = vmatprep.subr.bf16.mxu0 %v1307
    %3270 = vmatpush1.bf16.msra.mxu0 %v1306
    %3271 = vmatprep.subr.bf16.mxu0 %v1313
    %3272 = vmatpush1.bf16.msra.mxu0 %v1312
    %3273 = vmatprep.subr.bf16.mxu0 %v1319
    %3274 = vmatpush1.bf16.msra.mxu0 %v1318
    %3275 = vmatprep.subr.bf16.mxu0 %v1325
    %3276 = vmatpush1.bf16.msra.mxu0 %v1324
    %3277 = vmatprep.subr.bf16.mxu0 %v1331
    %3278 = vmatpush1.bf16.msra.mxu0 %v1330
    %3279 = vmatprep.subr.bf16.mxu0 %v1337
    %3280 = vmatpush1.bf16.msra.mxu0 %v1336
    %3281 = vmatprep.subr.bf16.mxu0 %v1343
    %3282 = vmatpush1.bf16.msra.mxu0 %v1342
    %3283 = vmatprep.subr.bf16.mxu0 %v1349
    %3284 = vmatpush1.bf16.msra.mxu0 %v1348
    %3285 = vmatprep.subr.bf16.mxu0 %v1355
    %3286 = vmatpush1.bf16.msra.mxu0 %v1354
    %3287 = vmatprep.mubr.bf16.mxu0 %v3149
    %3288 = vmatmul.mubr.bf16.gmra.mrb[0].mxu0 %v3148
    %v3289 = vpop.f32.mrb[0].mxu0
    %v3290 = vadd.f32 0.0, %v3289
    %v3291 = vpop.f32.mrb[0].mxu0
    %v3292 = vadd.f32 0.0, %v3291
    %v3293 = vpop.f32.mrb[0].mxu0
    %v3294 = vadd.f32 0.0, %v3293
    %v3295 = vpop.f32.mrb[0].mxu0
    %v3296 = vadd.f32 0.0, %v3295
    %3297 = vdwg.mxu0
    %v3298 = vadd.f32 %v3153, %v3204
    %v3299 = vadd.f32 %v3154, %v3206
    %v3300 = vadd.f32 %v3155, %v3247
    %v3301 = vadd.f32 %v3156, %v3249
    %v3302 = vadd.f32 %v3157, %v3290
    %v3303 = vadd.f32 %v3158, %v3292
    %v3304 = vadd.f32 %v3161, %v3208
    %v3305 = vadd.f32 %v3162, %v3210
    %v3306 = vadd.f32 %v3163, %v3251
    %v3307 = vadd.f32 %v3164, %v3253
    %v3308 = vadd.f32 %v3165, %v3294
    %v3309 = vadd.f32 %v3166, %v3296
    %3310 = vmatprep.subr.bf16.mxu0 %v1722
    %3311 = vmatpush1.bf16.msra.mxu0 %v1721
    %3312 = vmatprep.subr.bf16.mxu0 %v1724
    %3313 = vmatpush1.bf16.msra.mxu0 %v1723
    %3314 = vmatprep.subr.bf16.mxu0 %v1726
    %3315 = vmatpush1.bf16.msra.mxu0 %v1725
    %3316 = vmatprep.subr.bf16.mxu0 %v1728
    %3317 = vmatpush1.bf16.msra.mxu0 %v1727
    %3318 = vmatprep.subr.bf16.mxu0 %v1730
    %3319 = vmatpush1.bf16.msra.mxu0 %v1729
    %3320 = vmatprep.subr.bf16.mxu0 %v1732
    %3321 = vmatpush1.bf16.msra.mxu0 %v1731
    %3322 = vmatprep.subr.bf16.mxu0 %v1734
    %3323 = vmatpush1.bf16.msra.mxu0 %v1733
    %3324 = vmatprep.subr.bf16.mxu0 %v1736
    %3325 = vmatpush1.bf16.msra.mxu0 %v1735
    %3326 = vmatprep.subr.bf16.mxu0 %v1738
    %3327 = vmatpush1.bf16.msra.mxu0 %v1737
    %3328 = vmatprep.subr.bf16.mxu0 %v1740
    %3329 = vmatpush1.bf16.msra.mxu0 %v1739
    %3330 = vmatprep.subr.bf16.mxu0 %v1742
    %3331 = vmatpush1.bf16.msra.mxu0 %v1741
    %3332 = vmatprep.subr.bf16.mxu0 %v1744
    %3333 = vmatpush1.bf16.msra.mxu0 %v1743
    %3334 = vmatprep.subr.bf16.mxu0 %v1746
    %3335 = vmatpush1.bf16.msra.mxu0 %v1745
    %3336 = vmatprep.subr.bf16.mxu0 %v1748
    %3337 = vmatpush1.bf16.msra.mxu0 %v1747
    %3338 = vmatprep.subr.bf16.mxu0 %v1750
    %3339 = vmatpush1.bf16.msra.mxu0 %v1749
    %3340 = vmatprep.subr.bf16.mxu0 %v1752
    %3341 = vmatpush1.bf16.msra.mxu0 %v1751
    %3342 = vmatprep.mubr.bf16.mxu0 %v3149
    %3343 = vmatmul.mubr.bf16.gmra.mrb[0].mxu0 %v3148
    %v3344 = vpop.f32.mrb[0].mxu0
    %v3345 = vadd.f32 0.0, %v3344
    %v3346 = vpop.f32.mrb[0].mxu0
    %v3347 = vadd.f32 0.0, %v3346
    %v3348 = vpop.f32.mrb[0].mxu0
    %v3349 = vadd.f32 0.0, %v3348
    %v3350 = vpop.f32.mrb[0].mxu0
    %v3351 = vadd.f32 0.0, %v3350
    %3352 = vdwg.mxu0
    %v3353 = vadd.f32 %v3159, %v3345
    %v3354 = vadd.f32 %v3160, %v3347
    %v3355 = vadd.f32 %v3167, %v3349
    %v3356 = vadd.f32 %v3168, %v3351
    %v3357 = vxor.u32 %v3298, 2147483648
    %v3358 = vxor.u32 %v3299, 2147483648
    %v3359 = vxor.u32 %v3300, 2147483648
    %v3360 = vxor.u32 %v3301, 2147483648
    %v3361 = vxor.u32 %v3302, 2147483648
    %v3362 = vxor.u32 %v3303, 2147483648
    %v3363 = vxor.u32 %v3304, 2147483648
    %v3364 = vxor.u32 %v3305, 2147483648
    %v3365 = vxor.u32 %v3306, 2147483648
    %v3366 = vxor.u32 %v3307, 2147483648
    %v3367 = vxor.u32 %v3308, 2147483648
    %v3368 = vxor.u32 %v3309, 2147483648
    %v3369 = vmul.f32 %v3357, 1.442695
    %v3370 = vpow.pop %v3369
    %v3371 = vmul.f32 %v3358, 1.442695
    %v3372 = vpow.pop %v3371
    %v3373 = vmul.f32 %v3359, 1.442695
    %v3374 = vpow.pop %v3373
    %v3375 = vmul.f32 %v3360, 1.442695
    %v3376 = vpow.pop %v3375
    %v3377 = vmul.f32 %v3361, 1.442695
    %v3378 = vpow.pop %v3377
    %v3379 = vmul.f32 %v3362, 1.442695
    %v3380 = vpow.pop %v3379
    %v3381 = vmul.f32 %v3363, 1.442695
    %v3382 = vpow.pop %v3381
    %v3383 = vmul.f32 %v3364, 1.442695
    %v3384 = vpow.pop %v3383
    %v3385 = vmul.f32 %v3365, 1.442695
    %v3386 = vpow.pop %v3385
    %v3387 = vmul.f32 %v3366, 1.442695
    %v3388 = vpow.pop %v3387
    %v3389 = vmul.f32 %v3367, 1.442695
    %v3390 = vpow.pop %v3389
    %v3391 = vmul.f32 %v3368, 1.442695
    %v3392 = vpow.pop %v3391
    %v3393 = vadd.f32 %v3370, 1.0
    %v3394 = vadd.f32 %v3372, 1.0
    %v3395 = vadd.f32 %v3374, 1.0
    %v3396 = vadd.f32 %v3376, 1.0
    %v3397 = vadd.f32 %v3378, 1.0
    %v3398 = vadd.f32 %v3380, 1.0
    %v3399 = vadd.f32 %v3382, 1.0
    %v3400 = vadd.f32 %v3384, 1.0
    %v3401 = vadd.f32 %v3386, 1.0
    %v3402 = vadd.f32 %v3388, 1.0
    %v3403 = vadd.f32 %v3390, 1.0
    %v3404 = vadd.f32 %v3392, 1.0
    %v3405 = vrcp.pop %v3393
    %v3406 = vmul.f32 1.0, %v3405
    %v3407 = vrcp.pop %v3394
    %v3408 = vmul.f32 1.0, %v3407
    %v3409 = vrcp.pop %v3395
    %v3410 = vmul.f32 1.0, %v3409
    %v3411 = vrcp.pop %v3396
    %v3412 = vmul.f32 1.0, %v3411
    %v3413 = vrcp.pop %v3397
    %v3414 = vmul.f32 1.0, %v3413
    %v3415 = vrcp.pop %v3398
    %v3416 = vmul.f32 1.0, %v3415
    %v3417 = vrcp.pop %v3399
    %v3418 = vmul.f32 1.0, %v3417
    %v3419 = vrcp.pop %v3400
    %v3420 = vmul.f32 1.0, %v3419
    %v3421 = vrcp.pop %v3401
    %v3422 = vmul.f32 1.0, %v3421
    %v3423 = vrcp.pop %v3402
    %v3424 = vmul.f32 1.0, %v3423
    %v3425 = vrcp.pop %v3403
    %v3426 = vmul.f32 1.0, %v3425
    %v3427 = vrcp.pop %v3404
    %v3428 = vmul.f32 1.0, %v3427
    %v3429 = vtanh.pop %v3353
    %v3430 = vtanh.pop %v3354
    %v3431 = vtanh.pop %v3355
    %v3432 = vtanh.pop %v3356
    %v3433 = vmul.f32 %v3410, %v3136
    %v3434 = vmul.f32 %v3412, %v3137
    %v3435 = vmul.f32 %v3422, %v3138
    %v3436 = vmul.f32 %v3424, %v3139
    %v3437 = vmul.f32 %v3406, %v3429
    %v3438 = vmul.f32 %v3408, %v3430
    %v3439 = vmul.f32 %v3418, %v3431
    %v3440 = vmul.f32 %v3420, %v3432
    %v3441 = vadd.f32 %v3433, %v3437
    %v3442 = vadd.f32 %v3434, %v3438
    %v3443 = vadd.f32 %v3435, %v3439
    %v3444 = vadd.f32 %v3436, %v3440
    %v3445 = vtanh.pop %v3441
    %v3446 = vtanh.pop %v3442
    %v3447 = vtanh.pop %v3443
    %v3448 = vtanh.pop %v3444
    %v3449 = vmul.f32 %v3414, %v3445
    %v3450 = vmul.f32 %v3416, %v3446
    %v3451 = vmul.f32 %v3426, %v3447
    %v3452 = vmul.f32 %v3428, %v3448
    %v3453 = vpack.c.bf16 %v3451, %v3449
    %v3454 = vpack.c.bf16 %v3452, %v3450
    %s3455 = smul.u32 12, 8
    %s3456 = smul.addr %s3455, 8
    %s3457 = scalar_lea.vmem [#allocation2], %s3456
    %v3458 = vld [vmem:[%s3457] sm:$0xff]
    %v3459 = vld [vmem:[%s3457 + $0x8] sm:$0xff]
    %v3460 = vld [vmem:[%s3457 + $0x10] sm:$0xff]
    %v3461 = vld [vmem:[%s3457 + $0x18] sm:$0xff]
    %v3462 = vld [vmem:[%s3457 + $0x20] sm:$0xff]
    %v3463 = vld [vmem:[%s3457 + $0x28] sm:$0xff]
    %v3464 = vld [vmem:[%s3457 + $0x30] sm:$0xff]
    %v3465 = vld [vmem:[%s3457 + $0x38] sm:$0xff]
    %v3466 = vld [vmem:[%s3457 + $0x40] sm:$0xff]
    %v3467 = vld [vmem:[%s3457 + $0x48] sm:$0xff]
    %v3468 = vld [vmem:[%s3457 + $0x50] sm:$0xff]
    %v3469 = vld [vmem:[%s3457 + $0x58] sm:$0xff]
    %v3470 = vld [vmem:[%s3457 + $0x60] sm:$0xff]
    %v3471 = vld [vmem:[%s3457 + $0x68] sm:$0xff]
    %v3472 = vld [vmem:[%s3457 + $0x70] sm:$0xff]
    %v3473 = vld [vmem:[%s3457 + $0x78] sm:$0xff]
    %3474 = vmatprep.subr.bf16.mxu0 %v1261
    %3475 = vmatpush1.bf16.msra.mxu0 %v1260
    %3476 = vmatprep.subr.bf16.mxu0 %v1267
    %3477 = vmatpush1.bf16.msra.mxu0 %v1266
    %3478 = vmatprep.subr.bf16.mxu0 %v1273
    %3479 = vmatpush1.bf16.msra.mxu0 %v1272
    %3480 = vmatprep.subr.bf16.mxu0 %v1279
    %3481 = vmatpush1.bf16.msra.mxu0 %v1278
    %3482 = vmatprep.subr.bf16.mxu0 %v1285
    %3483 = vmatpush1.bf16.msra.mxu0 %v1284
    %3484 = vmatprep.subr.bf16.mxu0 %v1291
    %3485 = vmatpush1.bf16.msra.mxu0 %v1290
    %3486 = vmatprep.subr.bf16.mxu0 %v1297
    %3487 = vmatpush1.bf16.msra.mxu0 %v1296
    %3488 = vmatprep.subr.bf16.mxu0 %v1303
    %3489 = vmatpush1.bf16.msra.mxu0 %v1302
    %3490 = vmatprep.subr.bf16.mxu0 %v1309
    %3491 = vmatpush1.bf16.msra.mxu0 %v1308
    %3492 = vmatprep.subr.bf16.mxu0 %v1315
    %3493 = vmatpush1.bf16.msra.mxu0 %v1314
    %3494 = vmatprep.subr.bf16.mxu0 %v1321
    %3495 = vmatpush1.bf16.msra.mxu0 %v1320
    %3496 = vmatprep.subr.bf16.mxu0 %v1327
    %3497 = vmatpush1.bf16.msra.mxu0 %v1326
    %3498 = vmatprep.subr.bf16.mxu0 %v1333
    %3499 = vmatpush1.bf16.msra.mxu0 %v1332
    %3500 = vmatprep.subr.bf16.mxu0 %v1339
    %3501 = vmatpush1.bf16.msra.mxu0 %v1338
    %3502 = vmatprep.subr.bf16.mxu0 %v1345
    %3503 = vmatpush1.bf16.msra.mxu0 %v1344
    %3504 = vmatprep.subr.bf16.mxu0 %v1351
    %3505 = vmatpush1.bf16.msra.mxu0 %v1350
    %3506 = vmatprep.mubr.bf16.mxu0 %v3454
    %3507 = vmatmul.mubr.bf16.gmra.mrb[0].mxu0 %v3453
    %v3508 = vpop.f32.mrb[0].mxu0
    %v3509 = vadd.f32 0.0, %v3508
    %v3510 = vpop.f32.mrb[0].mxu0
    %v3511 = vadd.f32 0.0, %v3510
    %v3512 = vpop.f32.mrb[0].mxu0
    %v3513 = vadd.f32 0.0, %v3512
    %v3514 = vpop.f32.mrb[0].mxu0
    %v3515 = vadd.f32 0.0, %v3514
    %3516 = vdwg.mxu0
    %3517 = vmatprep.subr.bf16.mxu0 %v1263
    %3518 = vmatpush1.bf16.msra.mxu0 %v1262
    %3519 = vmatprep.subr.bf16.mxu0 %v1269
    %3520 = vmatpush1.bf16.msra.mxu0 %v1268
    %3521 = vmatprep.subr.bf16.mxu0 %v1275
    %3522 = vmatpush1.bf16.msra.mxu0 %v1274
    %3523 = vmatprep.subr.bf16.mxu0 %v1281
    %3524 = vmatpush1.bf16.msra.mxu0 %v1280
    %3525 = vmatprep.subr.bf16.mxu0 %v1287
    %3526 = vmatpush1.bf16.msra.mxu0 %v1286
    %3527 = vmatprep.subr.bf16.mxu0 %v1293
    %3528 = vmatpush1.bf16.msra.mxu0 %v1292
    %3529 = vmatprep.subr.bf16.mxu0 %v1299
    %3530 = vmatpush1.bf16.msra.mxu0 %v1298
    %3531 = vmatprep.subr.bf16.mxu0 %v1305
    %3532 = vmatpush1.bf16.msra.mxu0 %v1304
    %3533 = vmatprep.subr.bf16.mxu0 %v1311
    %3534 = vmatpush1.bf16.msra.mxu0 %v1310
    %3535 = vmatprep.subr.bf16.mxu0 %v1317
    %3536 = vmatpush1.bf16.msra.mxu0 %v1316
    %3537 = vmatprep.subr.bf16.mxu0 %v1323
    %3538 = vmatpush1.bf16.msra.mxu0 %v1322
    %3539 = vmatprep.subr.bf16.mxu0 %v1329
    %3540 = vmatpush1.bf16.msra.mxu0 %v1328
    %3541 = vmatprep.subr.bf16.mxu0 %v1335
    %3542 = vmatpush1.bf16.msra.mxu0 %v1334
    %3543 = vmatprep.subr.bf16.mxu0 %v1341
    %3544 = vmatpush1.bf16.msra.mxu0 %v1340
    %3545 = vmatprep.subr.bf16.mxu0 %v1347
    %3546 = vmatpush1.bf16.msra.mxu0 %v1346
    %3547 = vmatprep.subr.bf16.mxu0 %v1353
    %3548 = vmatpush1.bf16.msra.mxu0 %v1352
    %3549 = vmatprep.mubr.bf16.mxu0 %v3454
    %3550 = vmatmul.mubr.bf16.gmra.mrb[0].mxu0 %v3453
    %v3551 = vpop.f32.mrb[0].mxu0
    %v3552 = vadd.f32 0.0, %v3551
    %v3553 = vpop.f32.mrb[0].mxu0
    %v3554 = vadd.f32 0.0, %v3553
    %v3555 = vpop.f32.mrb[0].mxu0
    %v3556 = vadd.f32 0.0, %v3555
    %v3557 = vpop.f32.mrb[0].mxu0
    %v3558 = vadd.f32 0.0, %v3557
    %3559 = vdwg.mxu0
    %3560 = vmatprep.subr.bf16.mxu0 %v1265
    %3561 = vmatpush1.bf16.msra.mxu0 %v1264
    %3562 = vmatprep.subr.bf16.mxu0 %v1271
    %3563 = vmatpush1.bf16.msra.mxu0 %v1270
    %3564 = vmatprep.subr.bf16.mxu0 %v1277
    %3565 = vmatpush1.bf16.msra.mxu0 %v1276
    %3566 = vmatprep.subr.bf16.mxu0 %v1283
    %3567 = vmatpush1.bf16.msra.mxu0 %v1282
    %3568 = vmatprep.subr.bf16.mxu0 %v1289
    %3569 = vmatpush1.bf16.msra.mxu0 %v1288
    %3570 = vmatprep.subr.bf16.mxu0 %v1295
    %3571 = vmatpush1.bf16.msra.mxu0 %v1294
    %3572 = vmatprep.subr.bf16.mxu0 %v1301
    %3573 = vmatpush1.bf16.msra.mxu0 %v1300
    %3574 = vmatprep.subr.bf16.mxu0 %v1307
    %3575 = vmatpush1.bf16.msra.mxu0 %v1306
    %3576 = vmatprep.subr.bf16.mxu0 %v1313
    %3577 = vmatpush1.bf16.msra.mxu0 %v1312
    %3578 = vmatprep.subr.bf16.mxu0 %v1319
    %3579 = vmatpush1.bf16.msra.mxu0 %v1318
    %3580 = vmatprep.subr.bf16.mxu0 %v1325
    %3581 = vmatpush1.bf16.msra.mxu0 %v1324
    %3582 = vmatprep.subr.bf16.mxu0 %v1331
    %3583 = vmatpush1.bf16.msra.mxu0 %v1330
    %3584 = vmatprep.subr.bf16.mxu0 %v1337
    %3585 = vmatpush1.bf16.msra.mxu0 %v1336
    %3586 = vmatprep.subr.bf16.mxu0 %v1343
    %3587 = vmatpush1.bf16.msra.mxu0 %v1342
    %3588 = vmatprep.subr.bf16.mxu0 %v1349
    %3589 = vmatpush1.bf16.msra.mxu0 %v1348
    %3590 = vmatprep.subr.bf16.mxu0 %v1355
    %3591 = vmatpush1.bf16.msra.mxu0 %v1354
    %3592 = vmatprep.mubr.bf16.mxu0 %v3454
    %3593 = vmatmul.mubr.bf16.gmra.mrb[0].mxu0 %v3453
    %v3594 = vpop.f32.mrb[0].mxu0
    %v3595 = vadd.f32 0.0, %v3594
    %v3596 = vpop.f32.mrb[0].mxu0
    %v3597 = vadd.f32 0.0, %v3596
    %v3598 = vpop.f32.mrb[0].mxu0
    %v3599 = vadd.f32 0.0, %v3598
    %v3600 = vpop.f32.mrb[0].mxu0
    %v3601 = vadd.f32 0.0, %v3600
    %3602 = vdwg.mxu0
    %v3603 = vadd.f32 %v3458, %v3509
    %v3604 = vadd.f32 %v3459, %v3511
    %v3605 = vadd.f32 %v3460, %v3552
    %v3606 = vadd.f32 %v3461, %v3554
    %v3607 = vadd.f32 %v3462, %v3595
    %v3608 = vadd.f32 %v3463, %v3597
    %v3609 = vadd.f32 %v3466, %v3513
    %v3610 = vadd.f32 %v3467, %v3515
    %v3611 = vadd.f32 %v3468, %v3556
    %v3612 = vadd.f32 %v3469, %v3558
    %v3613 = vadd.f32 %v3470, %v3599
    %v3614 = vadd.f32 %v3471, %v3601
    %3615 = vmatprep.subr.bf16.mxu0 %v1722
    %3616 = vmatpush1.bf16.msra.mxu0 %v1721
    %3617 = vmatprep.subr.bf16.mxu0 %v1724
    %3618 = vmatpush1.bf16.msra.mxu0 %v1723
    %3619 = vmatprep.subr.bf16.mxu0 %v1726
    %3620 = vmatpush1.bf16.msra.mxu0 %v1725
    %3621 = vmatprep.subr.bf16.mxu0 %v1728
    %3622 = vmatpush1.bf16.msra.mxu0 %v1727
    %3623 = vmatprep.subr.bf16.mxu0 %v1730
    %3624 = vmatpush1.bf16.msra.mxu0 %v1729
    %3625 = vmatprep.subr.bf16.mxu0 %v1732
    %3626 = vmatpush1.bf16.msra.mxu0 %v1731
    %3627 = vmatprep.subr.bf16.mxu0 %v1734
    %3628 = vmatpush1.bf16.msra.mxu0 %v1733
    %3629 = vmatprep.subr.bf16.mxu0 %v1736
    %3630 = vmatpush1.bf16.msra.mxu0 %v1735
    %3631 = vmatprep.subr.bf16.mxu0 %v1738
    %3632 = vmatpush1.bf16.msra.mxu0 %v1737
    %3633 = vmatprep.subr.bf16.mxu0 %v1740
    %3634 = vmatpush1.bf16.msra.mxu0 %v1739
    %3635 = vmatprep.subr.bf16.mxu0 %v1742
    %3636 = vmatpush1.bf16.msra.mxu0 %v1741
    %3637 = vmatprep.subr.bf16.mxu0 %v1744
    %3638 = vmatpush1.bf16.msra.mxu0 %v1743
    %3639 = vmatprep.subr.bf16.mxu0 %v1746
    %3640 = vmatpush1.bf16.msra.mxu0 %v1745
    %3641 = vmatprep.subr.bf16.mxu0 %v1748
    %3642 = vmatpush1.bf16.msra.mxu0 %v1747
    %3643 = vmatprep.subr.bf16.mxu0 %v1750
    %3644 = vmatpush1.bf16.msra.mxu0 %v1749
    %3645 = vmatprep.subr.bf16.mxu0 %v1752
    %3646 = vmatpush1.bf16.msra.mxu0 %v1751
    %3647 = vmatprep.mubr.bf16.mxu0 %v3454
    %3648 = vmatmul.mubr.bf16.gmra.mrb[0].mxu0 %v3453
    %v3649 = vpop.f32.mrb[0].mxu0
    %v3650 = vadd.f32 0.0, %v3649
    %v3651 = vpop.f32.mrb[0].mxu0
    %v3652 = vadd.f32 0.0, %v3651
    %v3653 = vpop.f32.mrb[0].mxu0
    %v3654 = vadd.f32 0.0, %v3653
    %v3655 = vpop.f32.mrb[0].mxu0
    %v3656 = vadd.f32 0.0, %v3655
    %3657 = vdwg.mxu0
    %v3658 = vadd.f32 %v3464, %v3650
    %v3659 = vadd.f32 %v3465, %v3652
    %v3660 = vadd.f32 %v3472, %v3654
    %v3661 = vadd.f32 %v3473, %v3656
    %v3662 = vxor.u32 %v3603, 2147483648
    %v3663 = vxor.u32 %v3604, 2147483648
    %v3664 = vxor.u32 %v3605, 2147483648
    %v3665 = vxor.u32 %v3606, 2147483648
    %v3666 = vxor.u32 %v3607, 2147483648
    %v3667 = vxor.u32 %v3608, 2147483648
    %v3668 = vxor.u32 %v3609, 2147483648
    %v3669 = vxor.u32 %v3610, 2147483648
    %v3670 = vxor.u32 %v3611, 2147483648
    %v3671 = vxor.u32 %v3612, 2147483648
    %v3672 = vxor.u32 %v3613, 2147483648
    %v3673 = vxor.u32 %v3614, 2147483648
    %v3674 = vmul.f32 %v3662, 1.442695
    %v3675 = vpow.pop %v3674
    %v3676 = vmul.f32 %v3663, 1.442695
    %v3677 = vpow.pop %v3676
    %v3678 = vmul.f32 %v3664, 1.442695
    %v3679 = vpow.pop %v3678
    %v3680 = vmul.f32 %v3665, 1.442695
    %v3681 = vpow.pop %v3680
    %v3682 = vmul.f32 %v3666, 1.442695
    %v3683 = vpow.pop %v3682
    %v3684 = vmul.f32 %v3667, 1.442695
    %v3685 = vpow.pop %v3684
    %v3686 = vmul.f32 %v3668, 1.442695
    %v3687 = vpow.pop %v3686
    %v3688 = vmul.f32 %v3669, 1.442695
    %v3689 = vpow.pop %v3688
    %v3690 = vmul.f32 %v3670, 1.442695
    %v3691 = vpow.pop %v3690
    %v3692 = vmul.f32 %v3671, 1.442695
    %v3693 = vpow.pop %v3692
    %v3694 = vmul.f32 %v3672, 1.442695
    %v3695 = vpow.pop %v3694
    %v3696 = vmul.f32 %v3673, 1.442695
    %v3697 = vpow.pop %v3696
    %v3698 = vadd.f32 %v3675, 1.0
    %v3699 = vadd.f32 %v3677, 1.0
    %v3700 = vadd.f32 %v3679, 1.0
    %v3701 = vadd.f32 %v3681, 1.0
    %v3702 = vadd.f32 %v3683, 1.0
    %v3703 = vadd.f32 %v3685, 1.0
    %v3704 = vadd.f32 %v3687, 1.0
    %v3705 = vadd.f32 %v3689, 1.0
    %v3706 = vadd.f32 %v3691, 1.0
    %v3707 = vadd.f32 %v3693, 1.0
    %v3708 = vadd.f32 %v3695, 1.0
    %v3709 = vadd.f32 %v3697, 1.0
    %v3710 = vrcp.pop %v3698
    %v3711 = vmul.f32 1.0, %v3710
    %v3712 = vrcp.pop %v3699
    %v3713 = vmul.f32 1.0, %v3712
    %v3714 = vrcp.pop %v3700
    %v3715 = vmul.f32 1.0, %v3714
    %v3716 = vrcp.pop %v3701
    %v3717 = vmul.f32 1.0, %v3716
    %v3718 = vrcp.pop %v3702
    %v3719 = vmul.f32 1.0, %v3718
    %v3720 = vrcp.pop %v3703
    %v3721 = vmul.f32 1.0, %v3720
    %v3722 = vrcp.pop %v3704
    %v3723 = vmul.f32 1.0, %v3722
    %v3724 = vrcp.pop %v3705
    %v3725 = vmul.f32 1.0, %v3724
    %v3726 = vrcp.pop %v3706
    %v3727 = vmul.f32 1.0, %v3726
    %v3728 = vrcp.pop %v3707
    %v3729 = vmul.f32 1.0, %v3728
    %v3730 = vrcp.pop %v3708
    %v3731 = vmul.f32 1.0, %v3730
    %v3732 = vrcp.pop %v3709
    %v3733 = vmul.f32 1.0, %v3732
    %v3734 = vtanh.pop %v3658
    %v3735 = vtanh.pop %v3659
    %v3736 = vtanh.pop %v3660
    %v3737 = vtanh.pop %v3661
    %v3738 = vmul.f32 %v3715, %v3441
    %v3739 = vmul.f32 %v3717, %v3442
    %v3740 = vmul.f32 %v3727, %v3443
    %v3741 = vmul.f32 %v3729, %v3444
    %v3742 = vmul.f32 %v3711, %v3734
    %v3743 = vmul.f32 %v3713, %v3735
    %v3744 = vmul.f32 %v3723, %v3736
    %v3745 = vmul.f32 %v3725, %v3737
    %v3746 = vadd.f32 %v3738, %v3742
    %v3747 = vadd.f32 %v3739, %v3743
    %v3748 = vadd.f32 %v3740, %v3744
    %v3749 = vadd.f32 %v3741, %v3745
    %v3750 = vtanh.pop %v3746
    %v3751 = vtanh.pop %v3747
    %v3752 = vtanh.pop %v3748
    %v3753 = vtanh.pop %v3749
    %v3754 = vmul.f32 %v3719, %v3750
    %v3755 = vmul.f32 %v3721, %v3751
    %v3756 = vmul.f32 %v3731, %v3752
    %v3757 = vmul.f32 %v3733, %v3753
    %v3758 = vpack.c.bf16 %v3756, %v3754
    %v3759 = vpack.c.bf16 %v3757, %v3755
    %s3760 = smul.u32 14, 8
    %s3761 = smul.addr %s3760, 8
    %s3762 = scalar_lea.vmem [#allocation2], %s3761
    %v3763 = vld [vmem:[%s3762] sm:$0xff]
    %v3764 = vld [vmem:[%s3762 + $0x8] sm:$0xff]
    %v3765 = vld [vmem:[%s3762 + $0x10] sm:$0xff]
    %v3766 = vld [vmem:[%s3762 + $0x18] sm:$0xff]
    %v3767 = vld [vmem:[%s3762 + $0x20] sm:$0xff]
    %v3768 = vld [vmem:[%s3762 + $0x28] sm:$0xff]
    %v3769 = vld [vmem:[%s3762 + $0x30] sm:$0xff]
    %v3770 = vld [vmem:[%s3762 + $0x38] sm:$0xff]
    %v3771 = vld [vmem:[%s3762 + $0x40] sm:$0xff]
    %v3772 = vld [vmem:[%s3762 + $0x48] sm:$0xff]
    %v3773 = vld [vmem:[%s3762 + $0x50] sm:$0xff]
    %v3774 = vld [vmem:[%s3762 + $0x58] sm:$0xff]
    %v3775 = vld [vmem:[%s3762 + $0x60] sm:$0xff]
    %v3776 = vld [vmem:[%s3762 + $0x68] sm:$0xff]
    %v3777 = vld [vmem:[%s3762 + $0x70] sm:$0xff]
    %v3778 = vld [vmem:[%s3762 + $0x78] sm:$0xff]
    %3779 = vmatprep.subr.bf16.mxu0 %v1261
    %3780 = vmatpush1.bf16.msra.mxu0 %v1260
    %3781 = vmatprep.subr.bf16.mxu0 %v1267
    %3782 = vmatpush1.bf16.msra.mxu0 %v1266
    %3783 = vmatprep.subr.bf16.mxu0 %v1273
    %3784 = vmatpush1.bf16.msra.mxu0 %v1272
    %3785 = vmatprep.subr.bf16.mxu0 %v1279
    %3786 = vmatpush1.bf16.msra.mxu0 %v1278
    %3787 = vmatprep.subr.bf16.mxu0 %v1285
    %3788 = vmatpush1.bf16.msra.mxu0 %v1284
    %3789 = vmatprep.subr.bf16.mxu0 %v1291
    %3790 = vmatpush1.bf16.msra.mxu0 %v1290
    %3791 = vmatprep.subr.bf16.mxu0 %v1297
    %3792 = vmatpush1.bf16.msra.mxu0 %v1296
    %3793 = vmatprep.subr.bf16.mxu0 %v1303
    %3794 = vmatpush1.bf16.msra.mxu0 %v1302
    %3795 = vmatprep.subr.bf16.mxu0 %v1309
    %3796 = vmatpush1.bf16.msra.mxu0 %v1308
    %3797 = vmatprep.subr.bf16.mxu0 %v1315
    %3798 = vmatpush1.bf16.msra.mxu0 %v1314
    %3799 = vmatprep.subr.bf16.mxu0 %v1321
    %3800 = vmatpush1.bf16.msra.mxu0 %v1320
    %3801 = vmatprep.subr.bf16.mxu0 %v1327
    %3802 = vmatpush1.bf16.msra.mxu0 %v1326
    %3803 = vmatprep.subr.bf16.mxu0 %v1333
    %3804 = vmatpush1.bf16.msra.mxu0 %v1332
    %3805 = vmatprep.subr.bf16.mxu0 %v1339
    %3806 = vmatpush1.bf16.msra.mxu0 %v1338
    %3807 = vmatprep.subr.bf16.mxu0 %v1345
    %3808 = vmatpush1.bf16.msra.mxu0 %v1344
    %3809 = vmatprep.subr.bf16.mxu0 %v1351
    %3810 = vmatpush1.bf16.msra.mxu0 %v1350
    %3811 = vmatprep.mubr.bf16.mxu0 %v3759
    %3812 = vmatmul.mubr.bf16.gmra.mrb[0].mxu0 %v3758
    %v3813 = vpop.f32.mrb[0].mxu0
    %v3814 = vadd.f32 0.0, %v3813
    %v3815 = vpop.f32.mrb[0].mxu0
    %v3816 = vadd.f32 0.0, %v3815
    %v3817 = vpop.f32.mrb[0].mxu0
    %v3818 = vadd.f32 0.0, %v3817
    %v3819 = vpop.f32.mrb[0].mxu0
    %v3820 = vadd.f32 0.0, %v3819
    %3821 = vdwg.mxu0
    %3822 = vmatprep.subr.bf16.mxu0 %v1263
    %3823 = vmatpush1.bf16.msra.mxu0 %v1262
    %3824 = vmatprep.subr.bf16.mxu0 %v1269
    %3825 = vmatpush1.bf16.msra.mxu0 %v1268
    %3826 = vmatprep.subr.bf16.mxu0 %v1275
    %3827 = vmatpush1.bf16.msra.mxu0 %v1274
    %3828 = vmatprep.subr.bf16.mxu0 %v1281
    %3829 = vmatpush1.bf16.msra.mxu0 %v1280
    %3830 = vmatprep.subr.bf16.mxu0 %v1287
    %3831 = vmatpush1.bf16.msra.mxu0 %v1286
    %3832 = vmatprep.subr.bf16.mxu0 %v1293
    %3833 = vmatpush1.bf16.msra.mxu0 %v1292
    %3834 = vmatprep.subr.bf16.mxu0 %v1299
    %3835 = vmatpush1.bf16.msra.mxu0 %v1298
    %3836 = vmatprep.subr.bf16.mxu0 %v1305
    %3837 = vmatpush1.bf16.msra.mxu0 %v1304
    %3838 = vmatprep.subr.bf16.mxu0 %v1311
    %3839 = vmatpush1.bf16.msra.mxu0 %v1310
    %3840 = vmatprep.subr.bf16.mxu0 %v1317
    %3841 = vmatpush1.bf16.msra.mxu0 %v1316
    %3842 = vmatprep.subr.bf16.mxu0 %v1323
    %3843 = vmatpush1.bf16.msra.mxu0 %v1322
    %3844 = vmatprep.subr.bf16.mxu0 %v1329
    %3845 = vmatpush1.bf16.msra.mxu0 %v1328
    %3846 = vmatprep.subr.bf16.mxu0 %v1335
    %3847 = vmatpush1.bf16.msra.mxu0 %v1334
    %3848 = vmatprep.subr.bf16.mxu0 %v1341
    %3849 = vmatpush1.bf16.msra.mxu0 %v1340
    %3850 = vmatprep.subr.bf16.mxu0 %v1347
    %3851 = vmatpush1.bf16.msra.mxu0 %v1346
    %3852 = vmatprep.subr.bf16.mxu0 %v1353
    %3853 = vmatpush1.bf16.msra.mxu0 %v1352
    %3854 = vmatprep.mubr.bf16.mxu0 %v3759
    %3855 = vmatmul.mubr.bf16.gmra.mrb[0].mxu0 %v3758
    %v3856 = vpop.f32.mrb[0].mxu0
    %v3857 = vadd.f32 0.0, %v3856
    %v3858 = vpop.f32.mrb[0].mxu0
    %v3859 = vadd.f32 0.0, %v3858
    %v3860 = vpop.f32.mrb[0].mxu0
    %v3861 = vadd.f32 0.0, %v3860
    %v3862 = vpop.f32.mrb[0].mxu0
    %v3863 = vadd.f32 0.0, %v3862
    %3864 = vdwg.mxu0
    %3865 = vmatprep.subr.bf16.mxu0 %v1265
    %3866 = vmatpush1.bf16.msra.mxu0 %v1264
    %3867 = vmatprep.subr.bf16.mxu0 %v1271
    %3868 = vmatpush1.bf16.msra.mxu0 %v1270
    %3869 = vmatprep.subr.bf16.mxu0 %v1277
    %3870 = vmatpush1.bf16.msra.mxu0 %v1276
    %3871 = vmatprep.subr.bf16.mxu0 %v1283
    %3872 = vmatpush1.bf16.msra.mxu0 %v1282
    %3873 = vmatprep.subr.bf16.mxu0 %v1289
    %3874 = vmatpush1.bf16.msra.mxu0 %v1288
    %3875 = vmatprep.subr.bf16.mxu0 %v1295
    %3876 = vmatpush1.bf16.msra.mxu0 %v1294
    %3877 = vmatprep.subr.bf16.mxu0 %v1301
    %3878 = vmatpush1.bf16.msra.mxu0 %v1300
    %3879 = vmatprep.subr.bf16.mxu0 %v1307
    %3880 = vmatpush1.bf16.msra.mxu0 %v1306
    %3881 = vmatprep.subr.bf16.mxu0 %v1313
    %3882 = vmatpush1.bf16.msra.mxu0 %v1312
    %3883 = vmatprep.subr.bf16.mxu0 %v1319
    %3884 = vmatpush1.bf16.msra.mxu0 %v1318
    %3885 = vmatprep.subr.bf16.mxu0 %v1325
    %3886 = vmatpush1.bf16.msra.mxu0 %v1324
    %3887 = vmatprep.subr.bf16.mxu0 %v1331
    %3888 = vmatpush1.bf16.msra.mxu0 %v1330
    %3889 = vmatprep.subr.bf16.mxu0 %v1337
    %3890 = vmatpush1.bf16.msra.mxu0 %v1336
    %3891 = vmatprep.subr.bf16.mxu0 %v1343
    %3892 = vmatpush1.bf16.msra.mxu0 %v1342
    %3893 = vmatprep.subr.bf16.mxu0 %v1349
    %3894 = vmatpush1.bf16.msra.mxu0 %v1348
    %3895 = vmatprep.subr.bf16.mxu0 %v1355
    %3896 = vmatpush1.bf16.msra.mxu0 %v1354
    %3897 = vmatprep.mubr.bf16.mxu0 %v3759
    %3898 = vmatmul.mubr.bf16.gmra.mrb[0].mxu0 %v3758
    %v3899 = vpop.f32.mrb[0].mxu0
    %v3900 = vadd.f32 0.0, %v3899
    %v3901 = vpop.f32.mrb[0].mxu0
    %v3902 = vadd.f32 0.0, %v3901
    %v3903 = vpop.f32.mrb[0].mxu0
    %v3904 = vadd.f32 0.0, %v3903
    %v3905 = vpop.f32.mrb[0].mxu0
    %v3906 = vadd.f32 0.0, %v3905
    %3907 = vdwg.mxu0
    %v3908 = vadd.f32 %v3763, %v3814
    %v3909 = vadd.f32 %v3764, %v3816
    %v3910 = vadd.f32 %v3765, %v3857
    %v3911 = vadd.f32 %v3766, %v3859
    %v3912 = vadd.f32 %v3767, %v3900
    %v3913 = vadd.f32 %v3768, %v3902
    %v3914 = vadd.f32 %v3771, %v3818
    %v3915 = vadd.f32 %v3772, %v3820
    %v3916 = vadd.f32 %v3773, %v3861
    %v3917 = vadd.f32 %v3774, %v3863
    %v3918 = vadd.f32 %v3775, %v3904
    %v3919 = vadd.f32 %v3776, %v3906
    %3920 = vmatprep.subr.bf16.mxu0 %v1722
    %3921 = vmatpush1.bf16.msra.mxu0 %v1721
    %3922 = vmatprep.subr.bf16.mxu0 %v1724
    %3923 = vmatpush1.bf16.msra.mxu0 %v1723
    %3924 = vmatprep.subr.bf16.mxu0 %v1726
    %3925 = vmatpush1.bf16.msra.mxu0 %v1725
    %3926 = vmatprep.subr.bf16.mxu0 %v1728
    %3927 = vmatpush1.bf16.msra.mxu0 %v1727
    %3928 = vmatprep.subr.bf16.mxu0 %v1730
    %3929 = vmatpush1.bf16.msra.mxu0 %v1729
    %3930 = vmatprep.subr.bf16.mxu0 %v1732
    %3931 = vmatpush1.bf16.msra.mxu0 %v1731
    %3932 = vmatprep.subr.bf16.mxu0 %v1734
    %3933 = vmatpush1.bf16.msra.mxu0 %v1733
    %3934 = vmatprep.subr.bf16.mxu0 %v1736
    %3935 = vmatpush1.bf16.msra.mxu0 %v1735
    %3936 = vmatprep.subr.bf16.mxu0 %v1738
    %3937 = vmatpush1.bf16.msra.mxu0 %v1737
    %3938 = vmatprep.subr.bf16.mxu0 %v1740
    %3939 = vmatpush1.bf16.msra.mxu0 %v1739
    %3940 = vmatprep.subr.bf16.mxu0 %v1742
    %3941 = vmatpush1.bf16.msra.mxu0 %v1741
    %3942 = vmatprep.subr.bf16.mxu0 %v1744
    %3943 = vmatpush1.bf16.msra.mxu0 %v1743
    %3944 = vmatprep.subr.bf16.mxu0 %v1746
    %3945 = vmatpush1.bf16.msra.mxu0 %v1745
    %3946 = vmatprep.subr.bf16.mxu0 %v1748
    %3947 = vmatpush1.bf16.msra.mxu0 %v1747
    %3948 = vmatprep.subr.bf16.mxu0 %v1750
    %3949 = vmatpush1.bf16.msra.mxu0 %v1749
    %3950 = vmatprep.subr.bf16.mxu0 %v1752
    %3951 = vmatpush1.bf16.msra.mxu0 %v1751
    %3952 = vmatprep.mubr.bf16.mxu0 %v3759
    %3953 = vmatmul.mubr.bf16.gmra.mrb[0].mxu0 %v3758
    %v3954 = vpop.f32.mrb[0].mxu0
    %v3955 = vadd.f32 0.0, %v3954
    %v3956 = vpop.f32.mrb[0].mxu0
    %v3957 = vadd.f32 0.0, %v3956
    %v3958 = vpop.f32.mrb[0].mxu0
    %v3959 = vadd.f32 0.0, %v3958
    %v3960 = vpop.f32.mrb[0].mxu0
    %v3961 = vadd.f32 0.0, %v3960
    %3962 = vdwg.mxu0
    %v3963 = vadd.f32 %v3769, %v3955
    %v3964 = vadd.f32 %v3770, %v3957
    %v3965 = vadd.f32 %v3777, %v3959
    %v3966 = vadd.f32 %v3778, %v3961
    %v3967 = vxor.u32 %v3908, 2147483648
    %v3968 = vxor.u32 %v3909, 2147483648
    %v3969 = vxor.u32 %v3910, 2147483648
    %v3970 = vxor.u32 %v3911, 2147483648
    %v3971 = vxor.u32 %v3912, 2147483648
    %v3972 = vxor.u32 %v3913, 2147483648
    %v3973 = vxor.u32 %v3914, 2147483648
    %v3974 = vxor.u32 %v3915, 2147483648
    %v3975 = vxor.u32 %v3916, 2147483648
    %v3976 = vxor.u32 %v3917, 2147483648
    %v3977 = vxor.u32 %v3918, 2147483648
    %v3978 = vxor.u32 %v3919, 2147483648
    %v3979 = vmul.f32 %v3967, 1.442695
    %v3980 = vpow.pop %v3979
    %v3981 = vmul.f32 %v3968, 1.442695
    %v3982 = vpow.pop %v3981
    %v3983 = vmul.f32 %v3969, 1.442695
    %v3984 = vpow.pop %v3983
    %v3985 = vmul.f32 %v3970, 1.442695
    %v3986 = vpow.pop %v3985
    %v3987 = vmul.f32 %v3971, 1.442695
    %v3988 = vpow.pop %v3987
    %v3989 = vmul.f32 %v3972, 1.442695
    %v3990 = vpow.pop %v3989
    %v3991 = vmul.f32 %v3973, 1.442695
    %v3992 = vpow.pop %v3991
    %v3993 = vmul.f32 %v3974, 1.442695
    %v3994 = vpow.pop %v3993
    %v3995 = vmul.f32 %v3975, 1.442695
    %v3996 = vpow.pop %v3995
    %v3997 = vmul.f32 %v3976, 1.442695
    %v3998 = vpow.pop %v3997
    %v3999 = vmul.f32 %v3977, 1.442695
    %v4000 = vpow.pop %v3999
    %v4001 = vmul.f32 %v3978, 1.442695
    %v4002 = vpow.pop %v4001
    %v4003 = vadd.f32 %v3980, 1.0
    %v4004 = vadd.f32 %v3982, 1.0
    %v4005 = vadd.f32 %v3984, 1.0
    %v4006 = vadd.f32 %v3986, 1.0
    %v4007 = vadd.f32 %v3988, 1.0
    %v4008 = vadd.f32 %v3990, 1.0
    %v4009 = vadd.f32 %v3992, 1.0
    %v4010 = vadd.f32 %v3994, 1.0
    %v4011 = vadd.f32 %v3996, 1.0
    %v4012 = vadd.f32 %v3998, 1.0
    %v4013 = vadd.f32 %v4000, 1.0
    %v4014 = vadd.f32 %v4002, 1.0
    %v4015 = vrcp.pop %v4003
    %v4016 = vmul.f32 1.0, %v4015
    %v4017 = vrcp.pop %v4004
    %v4018 = vmul.f32 1.0, %v4017
    %v4019 = vrcp.pop %v4005
    %v4020 = vmul.f32 1.0, %v4019
    %v4021 = vrcp.pop %v4006
    %v4022 = vmul.f32 1.0, %v4021
    %v4023 = vrcp.pop %v4007
    %v4024 = vmul.f32 1.0, %v4023
    %v4025 = vrcp.pop %v4008
    %v4026 = vmul.f32 1.0, %v4025
    %v4027 = vrcp.pop %v4009
    %v4028 = vmul.f32 1.0, %v4027
    %v4029 = vrcp.pop %v4010
    %v4030 = vmul.f32 1.0, %v4029
    %v4031 = vrcp.pop %v4011
    %v4032 = vmul.f32 1.0, %v4031
    %v4033 = vrcp.pop %v4012
    %v4034 = vmul.f32 1.0, %v4033
    %v4035 = vrcp.pop %v4013
    %v4036 = vmul.f32 1.0, %v4035
    %v4037 = vrcp.pop %v4014
    %v4038 = vmul.f32 1.0, %v4037
    %v4039 = vtanh.pop %v3963
    %v4040 = vtanh.pop %v3964
    %v4041 = vtanh.pop %v3965
    %v4042 = vtanh.pop %v3966
    %v4043 = vmul.f32 %v4020, %v3746
    %v4044 = vmul.f32 %v4022, %v3747
    %v4045 = vmul.f32 %v4032, %v3748
    %v4046 = vmul.f32 %v4034, %v3749
    %v4047 = vmul.f32 %v4016, %v4039
    %v4048 = vmul.f32 %v4018, %v4040
    %v4049 = vmul.f32 %v4028, %v4041
    %v4050 = vmul.f32 %v4030, %v4042
    %v4051 = vadd.f32 %v4043, %v4047
    %v4052 = vadd.f32 %v4044, %v4048
    %v4053 = vadd.f32 %v4045, %v4049
    %v4054 = vadd.f32 %v4046, %v4050
    %v4055 = vtanh.pop %v4051
    %v4056 = vtanh.pop %v4052
    %v4057 = vtanh.pop %v4053
    %v4058 = vtanh.pop %v4054
    %v4059 = vmul.f32 %v4024, %v4055
    %v4060 = vmul.f32 %v4026, %v4056
    %v4061 = vmul.f32 %v4036, %v4057
    %v4062 = vmul.f32 %v4038, %v4058
    %v4063 = vpack.c.bf16 %v4061, %v4059
    %v4064 = vpack.c.bf16 %v4062, %v4060
    %v4065 = vld [vmem:[#allocation5] sm:$0xf]
    %v4066 = vld [vmem:[#allocation5 + $0x4] sm:$0xf]
    %v4067 = vld [vmem:[#allocation5 + $0x8] sm:$0xf]
    %v4068 = vld [vmem:[#allocation5 + $0xc] sm:$0xf]
    %v4069 = vld [vmem:[#allocation5 + $0x10] sm:$0xf]
    %v4070 = vld [vmem:[#allocation5 + $0x14] sm:$0xf]
    %v4071 = vld [vmem:[#allocation5 + $0x18] sm:$0xf]
    %v4072 = vld [vmem:[#allocation5 + $0x1c] sm:$0xf]
    %v4073 = vld [vmem:[#allocation5 + $0x20] sm:$0xf]
    %v4074 = vld [vmem:[#allocation5 + $0x24] sm:$0xf]
    %v4075 = vld [vmem:[#allocation5 + $0x28] sm:$0xf]
    %v4076 = vld [vmem:[#allocation5 + $0x2c] sm:$0xf]
    %v4077 = vld [vmem:[#allocation5 + $0x30] sm:$0xf]
    %v4078 = vld [vmem:[#allocation5 + $0x34] sm:$0xf]
    %v4079 = vld [vmem:[#allocation5 + $0x38] sm:$0xf]
    %v4080 = vld [vmem:[#allocation5 + $0x3c] sm:$0xf]
    %v4081 = vld [vmem:[#allocation5 + $0x40] sm:$0xf]
    %v4082 = vld [vmem:[#allocation5 + $0x44] sm:$0xf]
    %v4083 = vld [vmem:[#allocation5 + $0x48] sm:$0xf]
    %v4084 = vld [vmem:[#allocation5 + $0x4c] sm:$0xf]
    %v4085 = vld [vmem:[#allocation5 + $0x50] sm:$0xf]
    %v4086 = vld [vmem:[#allocation5 + $0x54] sm:$0xf]
    %v4087 = vld [vmem:[#allocation5 + $0x58] sm:$0xf]
    %v4088 = vld [vmem:[#allocation5 + $0x5c] sm:$0xf]
    %v4089 = vld [vmem:[#allocation5 + $0x60] sm:$0xf]
    %v4090 = vld [vmem:[#allocation5 + $0x64] sm:$0xf]
    %v4091 = vld [vmem:[#allocation5 + $0x68] sm:$0xf]
    %v4092 = vld [vmem:[#allocation5 + $0x6c] sm:$0xf]
    %v4093 = vld [vmem:[#allocation5 + $0x70] sm:$0xf]
    %v4094 = vld [vmem:[#allocation5 + $0x74] sm:$0xf]
    %v4095 = vld [vmem:[#allocation5 + $0x78] sm:$0xf]
    %v4096 = vld [vmem:[#allocation5 + $0x7c] sm:$0xf]
    %v4097 = vld [vmem:[%s5] sm:$0x1]
    %v4099 = vlaneseq
    %v4100 = vshrl.u32 %v4099, 7
    %v4101 = vsub.s32 0, %v4100
    %v4102 = vrot.slane %v4097, %v4101
    %v4136 = vunpack.c.l.b16 %v4065
    %v4137 = vunpack.c.l.b16 %v4066
    %v4138 = vunpack.c.l.b16 %v4067
    %v4139 = vunpack.c.l.b16 %v4068
    %v4140 = vunpack.c.l.b16 %v4069
    %v4141 = vunpack.c.l.b16 %v4070
    %v4142 = vunpack.c.l.b16 %v4071
    %v4143 = vunpack.c.l.b16 %v4072
    %v4144 = vunpack.c.l.b16 %v4073
    %v4145 = vunpack.c.l.b16 %v4074
    %v4146 = vunpack.c.l.b16 %v4075
    %v4147 = vunpack.c.l.b16 %v4076
    %v4148 = vunpack.c.l.b16 %v4077
    %v4149 = vunpack.c.l.b16 %v4078
    %v4150 = vunpack.c.l.b16 %v4079
    %v4151 = vunpack.c.l.b16 %v4080
    %v4152 = vunpack.c.l.b16 %v4081
    %v4153 = vunpack.c.l.b16 %v4082
    %v4154 = vunpack.c.l.b16 %v4083
    %v4155 = vunpack.c.l.b16 %v4084
    %v4156 = vunpack.c.l.b16 %v4085
    %v4157 = vunpack.c.l.b16 %v4086
    %v4158 = vunpack.c.l.b16 %v4087
    %v4159 = vunpack.c.l.b16 %v4088
    %v4160 = vunpack.c.l.b16 %v4089
    %v4161 = vunpack.c.l.b16 %v4090
    %v4162 = vunpack.c.l.b16 %v4091
    %v4163 = vunpack.c.l.b16 %v4092
    %v4164 = vunpack.c.l.b16 %v4093
    %v4165 = vunpack.c.l.b16 %v4094
    %v4166 = vunpack.c.l.b16 %v4095
    %v4167 = vunpack.c.l.b16 %v4096
    %v4168 = vpack.c.b16 %v4137, %v4136
    %v4169 = vpack.c.b16 %v4139, %v4138
    %v4170 = vpack.c.b16 %v4141, %v4140
    %v4171 = vpack.c.b16 %v4143, %v4142
    %v4172 = vpack.c.b16 %v4145, %v4144
    %v4173 = vpack.c.b16 %v4147, %v4146
    %v4174 = vpack.c.b16 %v4149, %v4148
    %v4175 = vpack.c.b16 %v4151, %v4150
    %v4176 = vpack.c.b16 %v4153, %v4152
    %v4177 = vpack.c.b16 %v4155, %v4154
    %v4178 = vpack.c.b16 %v4157, %v4156
    %v4179 = vpack.c.b16 %v4159, %v4158
    %v4180 = vpack.c.b16 %v4161, %v4160
    %v4181 = vpack.c.b16 %v4163, %v4162
    %v4182 = vpack.c.b16 %v4165, %v4164
    %v4183 = vpack.c.b16 %v4167, %v4166
    %4200 = vmatprep.subr.bf16.mxu0 0
    %4201 = vmatpush1.bf16.msra.mxu0 %v4168
    %4202 = vmatprep.subr.bf16.mxu0 0
    %4203 = vmatpush1.bf16.msra.mxu0 %v4169
    %4204 = vmatprep.subr.bf16.mxu0 0
    %4205 = vmatpush1.bf16.msra.mxu0 %v4170
    %4206 = vmatprep.subr.bf16.mxu0 0
    %4207 = vmatpush1.bf16.msra.mxu0 %v4171
    %4208 = vmatprep.subr.bf16.mxu0 0
    %4209 = vmatpush1.bf16.msra.mxu0 %v4172
    %4210 = vmatprep.subr.bf16.mxu0 0
    %4211 = vmatpush1.bf16.msra.mxu0 %v4173
    %4212 = vmatprep.subr.bf16.mxu0 0
    %4213 = vmatpush1.bf16.msra.mxu0 %v4174
    %4214 = vmatprep.subr.bf16.mxu0 0
    %4215 = vmatpush1.bf16.msra.mxu0 %v4175
    %4216 = vmatprep.subr.bf16.mxu0 0
    %4217 = vmatpush1.bf16.msra.mxu0 %v4176
    %4218 = vmatprep.subr.bf16.mxu0 0
    %4219 = vmatpush1.bf16.msra.mxu0 %v4177
    %4220 = vmatprep.subr.bf16.mxu0 0
    %4221 = vmatpush1.bf16.msra.mxu0 %v4178
    %4222 = vmatprep.subr.bf16.mxu0 0
    %4223 = vmatpush1.bf16.msra.mxu0 %v4179
    %4224 = vmatprep.subr.bf16.mxu0 0
    %4225 = vmatpush1.bf16.msra.mxu0 %v4180
    %4226 = vmatprep.subr.bf16.mxu0 0
    %4227 = vmatpush1.bf16.msra.mxu0 %v4181
    %4228 = vmatprep.subr.bf16.mxu0 0
    %4229 = vmatpush1.bf16.msra.mxu0 %v4182
    %4230 = vmatprep.subr.bf16.mxu0 0
    %4231 = vmatpush1.bf16.msra.mxu0 %v4183
    %4232 = vmatprep.mubr.bf16.mxu0 %v4064
    %4233 = vmatmul.mubr.bf16.gmra.mrb[0].mxu0 %v4063
    %v4234 = vpop.f32.mrb[0].mxu0
    %v4235 = vadd.f32 %v4102, %v4234
    %v4236 = vpop.f32.mrb[0].mxu0
    %v4237 = vpop.f32.mrb[0].mxu0
    %v4238 = vadd.f32 %v4102, %v4237
    %v4239 = vpop.f32.mrb[0].mxu0
    %4240 = vdwg.mxu0
    %v4241 = vmax.f32 %v4235, 0.0
    %v4242 = vmax.f32 %v4238, 0.0
    %v4243 = vld [vmem:[%s6] sm:$0xff]
    %v4244 = vld [vmem:[%s6 + $0x8] sm:$0xff]
    %v4245 = vld [vmem:[%s6 + $0x10] sm:$0xff]
    %v4246 = vld [vmem:[%s6 + $0x18] sm:$0xff]
    %v4247 = vld [vmem:[%s6 + $0x20] sm:$0xff]
    %v4248 = vld [vmem:[%s6 + $0x28] sm:$0xff]
    %v4249 = vld [vmem:[%s6 + $0x30] sm:$0xff]
    %v4250 = vld [vmem:[%s6 + $0x38] sm:$0xff]
    %v4251 = vld [vmem:[%s6 + $0x40] sm:$0xff]
    %v4252 = vld [vmem:[%s6 + $0x48] sm:$0xff]
    %v4253 = vld [vmem:[%s6 + $0x50] sm:$0xff]
    %v4254 = vld [vmem:[%s6 + $0x58] sm:$0xff]
    %v4255 = vld [vmem:[%s6 + $0x60] sm:$0xff]
    %v4256 = vld [vmem:[%s6 + $0x68] sm:$0xff]
    %v4257 = vld [vmem:[%s6 + $0x70] sm:$0xff]
    %v4258 = vld [vmem:[%s6 + $0x78] sm:$0xff]
    %v4259 = vld [vmem:[%s7] sm:$0x1]
    %v4261 = vlaneseq
    %v4262 = vshrl.u32 %v4261, 7
    %v4263 = vsub.s32 0, %v4262
    %v4264 = vrot.slane %v4259, %v4263
    %4266 = vmatprep.subr.mxu0 0.0
    %4267 = vmatpush1.msra.mxu0 %v4243
    %4268 = vmatprep.subr.mxu0 0.0
    %4269 = vmatpush1.msra.mxu0 %v4244
    %4270 = vmatprep.subr.mxu0 0.0
    %4271 = vmatpush1.msra.mxu0 %v4245
    %4272 = vmatprep.subr.mxu0 0.0
    %4273 = vmatpush1.msra.mxu0 %v4246
    %4274 = vmatprep.subr.mxu0 0.0
    %4275 = vmatpush1.msra.mxu0 %v4247
    %4276 = vmatprep.subr.mxu0 0.0
    %4277 = vmatpush1.msra.mxu0 %v4248
    %4278 = vmatprep.subr.mxu0 0.0
    %4279 = vmatpush1.msra.mxu0 %v4249
    %4280 = vmatprep.subr.mxu0 0.0
    %4281 = vmatpush1.msra.mxu0 %v4250
    %4282 = vmatprep.subr.mxu0 0.0
    %4283 = vmatpush1.msra.mxu0 %v4251
    %4284 = vmatprep.subr.mxu0 0.0
    %4285 = vmatpush1.msra.mxu0 %v4252
    %4286 = vmatprep.subr.mxu0 0.0
    %4287 = vmatpush1.msra.mxu0 %v4253
    %4288 = vmatprep.subr.mxu0 0.0
    %4289 = vmatpush1.msra.mxu0 %v4254
    %4290 = vmatprep.subr.mxu0 0.0
    %4291 = vmatpush1.msra.mxu0 %v4255
    %4292 = vmatprep.subr.mxu0 0.0
    %4293 = vmatpush1.msra.mxu0 %v4256
    %4294 = vmatprep.subr.mxu0 0.0
    %4295 = vmatpush1.msra.mxu0 %v4257
    %4296 = vmatprep.subr.mxu0 0.0
    %4297 = vmatpush1.msra.mxu0 %v4258
    %4298 = vmatprep.subr.mxu0 0.0
    %4299 = vmatpush1.msra.mxu0 0.0
    %4300 = vmatprep.subr.mxu0 0.0
    %4301 = vmatpush1.msra.mxu0 0.0
    %4302 = vmatprep.subr.mxu0 0.0
    %4303 = vmatpush1.msra.mxu0 0.0
    %4304 = vmatprep.subr.mxu0 0.0
    %4305 = vmatpush1.msra.mxu0 0.0
    %4306 = vmatprep.subr.mxu0 0.0
    %4307 = vmatpush1.msra.mxu0 0.0
    %4308 = vmatprep.subr.mxu0 0.0
    %4309 = vmatpush1.msra.mxu0 0.0
    %4310 = vmatprep.subr.mxu0 0.0
    %4311 = vmatpush1.msra.mxu0 0.0
    %4312 = vmatprep.subr.mxu0 0.0
    %4313 = vmatpush1.msra.mxu0 0.0
    %4314 = vmatprep.subr.mxu0 0.0
    %4315 = vmatpush1.msra.mxu0 0.0
    %4316 = vmatprep.subr.mxu0 0.0
    %4317 = vmatpush1.msra.mxu0 0.0
    %4318 = vmatprep.subr.mxu0 0.0
    %4319 = vmatpush1.msra.mxu0 0.0
    %4320 = vmatprep.subr.mxu0 0.0
    %4321 = vmatpush1.msra.mxu0 0.0
    %4322 = vmatprep.subr.mxu0 0.0
    %4323 = vmatpush1.msra.mxu0 0.0
    %4324 = vmatprep.subr.mxu0 0.0
    %4325 = vmatpush1.msra.mxu0 0.0
    %4326 = vmatprep.subr.mxu0 0.0
    %4327 = vmatpush1.msra.mxu0 0.0
    %4328 = vmatprep.subr.mxu0 0.0
    %4329 = vmatpush1.msra.mxu0 0.0
    %4330 = vmatprep.mubr.f32.mxu0 0.0
    %4331 = vmatmul.mubr.f32.gmra.mrb[0].mxu0 %v4241
    %v4332 = vpop.f32.mrb[0].mxu0
    %v4333 = vadd.f32 %v4264, %v4332
    %v4334 = vpop.f32.mrb[0].mxu0
    %4335 = vmatprep.mubr.f32.mxu0 0.0
    %4336 = vmatmul.mubr.f32.gmra.mrb[0].mxu0 %v4242
    %v4337 = vpop.f32.mrb[0].mxu0
    %v4338 = vadd.f32 %v4264, %v4337
    %v4339 = vpop.f32.mrb[0].mxu0
    %4340 = vdwg.mxu0
    %vm4341 = vcmask 31744
    %4342 = vst.msk [vmem:[%s8] sm:$0xff] %vm4341, %v4333
    %4343 = vst.msk [vmem:[%s8 + $0x8] sm:$0xff] %vm4341, %v4338
    // Predicated region
    $region42: #{tpu_custom_call.1} parent=1 // pred_check
      _
    $region43: #{tpu_custom_call.1} parent=1 // pred_check_branch
      %4345 = sbr.rel (0) target = $region45
    $region44: #{tpu_custom_call.1} parent=1 // pred_region
      _
    $region45: #{tpu_custom_call.1} parent=1 // pred_fallthru
      _
    // Predicated region
    $region46: #{tpu_custom_call.1} parent=1 // pred_check
      _
    $region47: #{tpu_custom_call.1} parent=1 // pred_check_branch
      %4347 = sbr.rel (0) target = $region49
    $region48: #{tpu_custom_call.1} parent=1 // pred_region
      _
    $region49: #{tpu_custom_call.1} parent=1 // pred_fallthru
      _
    %4348 = vsyncpa [#allocation4], 1
    %4349 = vsyncpa [#allocation6], 1

</llo_original>
